<compile_context>
chip_gen: v5e
topology: v5e:2x2
jax: 0.10.0
libtpu: 0.0.40
codegen_flags: <defaults>
</compile_context>

<pallas_src>
import math

import jax
import jax.numpy as jnp
from jax.experimental import pallas as pl
from jax.experimental.pallas import tpu as pltpu

EPS_RENDER = 1e-5
RANDOM_CONFIGURATION_COUNT = 3
SPECULAR_CONFIGURATION_COUNT = 6
_LANES = 128


def _rendering_loss_kernel(scenes_ref, coords_ref, maps_ref, out_ref):
    """One (batch, pixel-tile) block: loop over all scenes, render input and
    target SVBRDFs, and write the per-pixel sum over (scene, rgb) of
    |log(render_in + eps) - log(render_tgt + eps)|."""
    n_scenes = scenes_ref.shape[0] // 9
    inv_pi = 1.0 / math.pi

    xs = coords_ref[0]          # (TP, 128) surface x in [-1, 1]
    ys = coords_ref[1]          # (TP, 128) surface y in [-1, 1]

    # ---- scene-invariant material prep (done once per grid step) ----
    def material_prep(base):
        nx = maps_ref[base + 0]
        ny = maps_ref[base + 1]
        nz = maps_ref[base + 2]
        inv_nlen = jax.lax.rsqrt(nx * nx + ny * ny + nz * nz + 1e-12)
        nx = nx * inv_nlen
        ny = ny * inv_nlen
        nz = nz * inv_nlen

        rough = (maps_ref[base + 6] + maps_ref[base + 7]
                 + maps_ref[base + 8]) * (1.0 / 3.0)
        alpha = jnp.maximum(rough * rough, 1e-3)
        a2 = alpha * alpha
        k = alpha * 0.5
        omk = 1.0 - k

        spc = (maps_ref[base + 9], maps_ref[base + 10], maps_ref[base + 11])
        om_spc = tuple(1.0 - spc[c] for c in range(3))
        # diffuse * (1 - spec) / pi  (scene independent)
        dif = tuple(maps_ref[base + 3 + c] * om_spc[c] * inv_pi
                    for c in range(3))
        return nx, ny, nz, a2, k, omk, spc, om_spc, dif

    mat_in = material_prep(0)
    mat_tg = material_prep(12)

    acc = jnp.zeros(xs.shape, jnp.float32)

    # ---- static unrolled loop over scenes (S is small and fixed) ----
    for si in range(n_scenes):
        b9 = si * 9
        lx = scenes_ref[b9 + 0]
        ly = scenes_ref[b9 + 1]
        lz = scenes_ref[b9 + 2]
        cx = scenes_ref[b9 + 3]
        cy = scenes_ref[b9 + 4]
        cz = scenes_ref[b9 + 5]
        light = (scenes_ref[b9 + 6], scenes_ref[b9 + 7], scenes_ref[b9 + 8])

        # ---- scene geometry, shared by input and target renders ----
        wix = lx - xs
        wiy = ly - ys
        dist2 = wix * wix + wiy * wiy + lz * lz
        inv_d = jax.lax.rsqrt(dist2 + 1e-12)
        wix = wix * inv_d
        wiy = wiy * inv_d
        wiz = lz * inv_d
        inv_dist2 = inv_d * inv_d        # 1/dist^2, reuses the rsqrt (no divide)

        wox = cx - xs
        woy = cy - ys
        inv_v = jax.lax.rsqrt(wox * wox + woy * woy + cz * cz + 1e-12)
        wox = wox * inv_v
        woy = woy * inv_v
        woz = cz * inv_v

        hx = wix + wox
        hy = wiy + woy
        hz = wiz + woz
        inv_h = jax.lax.rsqrt(hx * hx + hy * hy + hz * hz + 1e-12)
        hx = hx * inv_h
        hy = hy * inv_h
        hz = hz * inv_h

        vdh = jnp.maximum(wox * hx + woy * hy + woz * hz, 1e-4)
        fres = jnp.exp2((-5.55473 * vdh - 6.98316) * vdh)   # Schlick (SG approx)

        def shade(mat):
            nx, ny, nz, a2, k, omk, spc, om_spc, dif = mat
            ndl = jnp.maximum(nx * wix + ny * wiy + nz * wiz, 0.0)
            ndv = jnp.maximum(nx * wox + ny * woy + nz * woz, 1e-4)
            ndh = jnp.maximum(nx * hx + ny * hy + nz * hz, 0.0)

            d_den = ndh * ndh * (a2 - 1.0) + 1.0
            # D * G / (4 ndl ndv) with ndl*ndv cancelled algebraically; one
            # approximate reciprocal replaces 4 divides per material per scene.
            spec_den = ((4.0 * math.pi) * (d_den * d_den)
                        * (ndl * omk + k + 1e-6) * (ndv * omk + k + 1e-6))
            spec_common = a2 * pl.reciprocal(spec_den, approx=True)
            fall = ndl * inv_dist2
            out = []
            for c in range(3):
                F = spc[c] + om_spc[c] * fres
                out.append((dif[c] + spec_common * F) * fall * light[c])
            return out

        r_in = shade(mat_in)
        r_tg = shade(mat_tg)
        for c in range(3):
            # log(a+eps) - log(b+eps) == log((a+eps)/(b+eps)): 1 log + 1 div
            acc = acc + jnp.abs(
                jnp.log((r_in[c] + EPS_RENDER) / (r_tg[c] + EPS_RENDER)))

    out_ref[...] = acc[None, None]


def _pick_row_tile(rows, cap=512):
    """Largest row tile <= cap that evenly divides `rows` (multiple of 8 when
    actually tiling; a full-extent block is always legal)."""
    if rows <= cap:
        return rows
    tp = (cap // 8) * 8
    while tp >= 8:
        if rows % tp == 0:
            return tp
        tp -= 8
    return rows


def rendering_loss(input_svbrdf, target_svbrdf, scenes):
    """Mean L1 between log-renderings of input/target SVBRDFs over all scenes."""
    B, C, H, W = input_svbrdf.shape
    assert C == 12
    S = scenes.shape[0]

    n_pix = H * W
    pad = (-n_pix) % _LANES
    rows = (n_pix + pad) // _LANES

    # One combined lane-dense operand: (B, 24, rows, 128).
    maps = jnp.concatenate([input_svbrdf, target_svbrdf], axis=1)
    maps = maps.astype(jnp.float32).reshape(B, 2 * C, n_pix)
    if pad:
        # Zero-padded pixels produce identical renders for input and target,
        # so their log-L1 contribution is exactly 0.
        maps = jnp.pad(maps, ((0, 0), (0, 0), (0, pad)))
    maps = maps.reshape(B, 2 * C, rows, _LANES)

    # Pixel-center surface coordinates in [-1, 1] on the z = 0 plane.
    ww = (jnp.arange(W, dtype=jnp.float32) + 0.5) / W * 2.0 - 1.0
    hh = (jnp.arange(H, dtype=jnp.float32) + 0.5) / H * 2.0 - 1.0
    xs = jnp.broadcast_to(ww[None, :], (H, W)).reshape(n_pix)
    ys = jnp.broadcast_to(hh[:, None], (H, W)).reshape(n_pix)
    coords = jnp.stack([xs, ys], axis=0)
    if pad:
        coords = jnp.pad(coords, ((0, 0), (0, pad)))
    coords = coords.reshape(2, rows, _LANES)

    scenes_flat = scenes.reshape(-1).astype(jnp.float32)   # flat 1-D SMEM table

    tp = _pick_row_tile(rows)
    nt = rows // tp

    partial = pl.pallas_call(
        _rendering_loss_kernel,
        out_shape=jax.ShapeDtypeStruct((B, nt, tp, _LANES), jnp.float32),
        grid_spec=pltpu.PrefetchScalarGridSpec(
            num_scalar_prefetch=0,
            grid=(B, nt),
            in_specs=[
                pl.BlockSpec(memory_space=pltpu.SMEM),                   # scenes (S*9,)
                pl.BlockSpec((2, tp, _LANES), lambda b, t: (0, t, 0)),   # coords
                pl.BlockSpec((None, 2 * C, tp, _LANES),
                             lambda b, t: (b, 0, t, 0)),                 # in+tgt maps
            ],
            out_specs=pl.BlockSpec((1, 1, tp, _LANES),
                                   lambda b, t: (b, t, 0, 0)),           # per-tile partial
        ),
        compiler_params=pltpu.CompilerParams(
            dimension_semantics=("parallel", "parallel")),
    )(scenes_flat, coords, maps)

    # F.l1_loss mean over (batch, scene, rgb, H, W); padded pixels contribute 0.
    n_elems = B * S * 3 * H * W
    return jnp.sum(partial) / n_elems


# ----------------------------------------------------------------------------
# Deterministic stand-ins for env.generate_random_scenes / generate_specular_scenes
# and for SVBRDF inputs (this is a synthetic kernel, not a checkpoint load).
# ----------------------------------------------------------------------------
def generate_scenes(key, n_random, n_specular):
    def sample_pos(k, n):
        ku, kv, kd = jax.random.split(k, 3)
        u = jax.random.uniform(ku, (n,))
        theta = jax.random.uniform(kv, (n,)) * 2.0 * jnp.pi
        z = 0.3 + 0.7 * u  # keep above the surface
        r = jnp.sqrt(jnp.maximum(1.0 - z * z, 0.0))
        d = 2.0 + 2.0 * jax.random.uniform(kd, (n,))
        return jnp.stack(
            [r * jnp.cos(theta) * d, r * jnp.sin(theta) * d, z * d], axis=-1)

    k1, k2, k3 = jax.random.split(key, 3)
    light_rand = sample_pos(k1, n_random)
    cam_rand = sample_pos(k2, n_random)
    # Specular configurations: view mirrors the light about the mean normal (z axis).
    light_spec = sample_pos(k3, n_specular)
    cam_spec = light_spec * jnp.array([-1.0, -1.0, 1.0])

    light_pos = jnp.concatenate([light_rand, light_spec], axis=0)
    cam_pos = jnp.concatenate([cam_rand, cam_spec], axis=0)
    light_color = jnp.full((n_random + n_specular, 3), 6.0, jnp.float32)
    return jnp.concatenate(
        [light_pos, cam_pos, light_color], axis=-1).astype(jnp.float32)


def make_svbrdf(key, B, H, W):
    kn, kd, kr, ks = jax.random.split(key, 4)
    n_xy = jax.random.uniform(kn, (B, 2, H, W), minval=-0.5, maxval=0.5)
    n_z = jnp.ones((B, 1, H, W), jnp.float32)
    normals = jnp.concatenate([n_xy, n_z], axis=1)
    normals = normals / jnp.sqrt(jnp.sum(normals * normals, axis=1, keepdims=True))
    diffuse = jax.random.uniform(kd, (B, 3, H, W), minval=0.05, maxval=0.95)
    rough = jnp.broadcast_to(
        jax.random.uniform(kr, (B, 1, H, W), minval=0.2, maxval=0.8), (B, 3, H, W))
    spec = jax.random.uniform(ks, (B, 3, H, W), minval=0.02, maxval=0.3)
    return jnp.concatenate([normals, diffuse, rough, spec], axis=1).astype(jnp.float32)


if __name__ == "__main__":
    key = jax.random.PRNGKey(0)
    k_in, k_tgt, k_scene = jax.random.split(key, 3)

    B, H, W = 2, 16, 16
    input_svbrdf = make_svbrdf(k_in, B, H, W)    # (2, 12, 16, 16)
    target_svbrdf = make_svbrdf(k_tgt, B, H, W)  # (2, 12, 16, 16)
    scenes = generate_scenes(
        k_scene, RANDOM_CONFIGURATION_COUNT, SPECULAR_CONFIGURATION_COUNT)  # (9, 9)

    loss = jax.jit(rendering_loss)(input_svbrdf, target_svbrdf, scenes)
    jax.block_until_ready(loss)
    assert jnp.isfinite(loss)
    print("KERNEL_OK")
</pallas_src>

<mosaic_0001>
module attributes {stable_mosaic.version = 11 : i64} {
  func.func @_rendering_loss_kernel(%arg0: i32, %arg1: i32, %arg2: memref<81xf32, #tpu.memory_space<smem>>, %arg3: memref<2x2x128xf32, #tpu.memory_space<vmem>>, %arg4: memref<1x24x2x128xf32, #tpu.memory_space<vmem>>, %arg5: memref<1x1x2x128xf32, #tpu.memory_space<vmem>>) attributes {dimension_semantics = [#tpu.dimension_semantics<parallel>, #tpu.dimension_semantics<parallel>], iteration_bounds = array<i64: 2, 1>, scalar_prefetch = 0 : i64, scratch_operands = 0 : i64, tpu.core_type = #tpu.core_type<tc>, window_params = [{transform_indices = @transform_0, window_bounds = array<i64: 81>}, {transform_indices = @transform_1, window_bounds = array<i64: 2, 2, 128>}, {transform_indices = @transform_2, window_bounds = array<i64: 1, 24, 2, 128>}, {transform_indices = @transform_3, window_bounds = array<i64: 1, 1, 2, 128>}]} {
    %c0 = arith.constant 0 : index
    %c0_0 = arith.constant 0 : index
    %c0_1 = arith.constant 0 : index
    %0 = vector.load %arg3[%c0, %c0_0, %c0_1] : memref<2x2x128xf32, #tpu.memory_space<vmem>>, vector<1x2x128xf32>
    %1 = vector.shape_cast %0 : vector<1x2x128xf32> to vector<2x128xf32>
    %c1 = arith.constant 1 : index
    %c0_2 = arith.constant 0 : index
    %c0_3 = arith.constant 0 : index
    %2 = vector.load %arg3[%c1, %c0_2, %c0_3] : memref<2x2x128xf32, #tpu.memory_space<vmem>>, vector<1x2x128xf32>
    %3 = vector.shape_cast %2 : vector<1x2x128xf32> to vector<2x128xf32>
    %c0_4 = arith.constant 0 : index
    %c0_5 = arith.constant 0 : index
    %c0_6 = arith.constant 0 : index
    %c0_7 = arith.constant 0 : index
    %4 = vector.load %arg4[%c0_4, %c0_5, %c0_6, %c0_7] : memref<1x24x2x128xf32, #tpu.memory_space<vmem>>, vector<1x1x2x128xf32>
    %5 = vector.shape_cast %4 : vector<1x1x2x128xf32> to vector<2x128xf32>
    %c0_8 = arith.constant 0 : index
    %c1_9 = arith.constant 1 : index
    %c0_10 = arith.constant 0 : index
    %c0_11 = arith.constant 0 : index
    %6 = vector.load %arg4[%c0_8, %c1_9, %c0_10, %c0_11] : memref<1x24x2x128xf32, #tpu.memory_space<vmem>>, vector<1x1x2x128xf32>
    %7 = vector.shape_cast %6 : vector<1x1x2x128xf32> to vector<2x128xf32>
    %c0_12 = arith.constant 0 : index
    %c2 = arith.constant 2 : index
    %c0_13 = arith.constant 0 : index
    %c0_14 = arith.constant 0 : index
    %8 = vector.load %arg4[%c0_12, %c2, %c0_13, %c0_14] : memref<1x24x2x128xf32, #tpu.memory_space<vmem>>, vector<1x1x2x128xf32>
    %9 = vector.shape_cast %8 : vector<1x1x2x128xf32> to vector<2x128xf32>
    %10 = arith.mulf %5, %5 : vector<2x128xf32>
    %11 = arith.mulf %7, %7 : vector<2x128xf32>
    %12 = arith.addf %10, %11 : vector<2x128xf32>
    %13 = arith.mulf %9, %9 : vector<2x128xf32>
    %14 = arith.addf %12, %13 : vector<2x128xf32>
    %cst = arith.constant 9.99999996E-13 : f32
    %15 = vector.broadcast %cst : f32 to vector<2x128xf32>
    %16 = arith.addf %14, %15 : vector<2x128xf32>
    %17 = math.rsqrt %16 : vector<2x128xf32>
    %18 = arith.mulf %5, %17 : vector<2x128xf32>
    %19 = arith.mulf %7, %17 : vector<2x128xf32>
    %20 = arith.mulf %9, %17 : vector<2x128xf32>
    %c0_15 = arith.constant 0 : index
    %c6 = arith.constant 6 : index
    %c0_16 = arith.constant 0 : index
    %c0_17 = arith.constant 0 : index
    %21 = vector.load %arg4[%c0_15, %c6, %c0_16, %c0_17] : memref<1x24x2x128xf32, #tpu.memory_space<vmem>>, vector<1x1x2x128xf32>
    %22 = vector.shape_cast %21 : vector<1x1x2x128xf32> to vector<2x128xf32>
    %c0_18 = arith.constant 0 : index
    %c7 = arith.constant 7 : index
    %c0_19 = arith.constant 0 : index
    %c0_20 = arith.constant 0 : index
    %23 = vector.load %arg4[%c0_18, %c7, %c0_19, %c0_20] : memref<1x24x2x128xf32, #tpu.memory_space<vmem>>, vector<1x1x2x128xf32>
    %24 = vector.shape_cast %23 : vector<1x1x2x128xf32> to vector<2x128xf32>
    %25 = arith.addf %22, %24 : vector<2x128xf32>
    %c0_21 = arith.constant 0 : index
    %c8 = arith.constant 8 : index
    %c0_22 = arith.constant 0 : index
    %c0_23 = arith.constant 0 : index
    %26 = vector.load %arg4[%c0_21, %c8, %c0_22, %c0_23] : memref<1x24x2x128xf32, #tpu.memory_space<vmem>>, vector<1x1x2x128xf32>
    %27 = vector.shape_cast %26 : vector<1x1x2x128xf32> to vector<2x128xf32>
    %28 = arith.addf %25, %27 : vector<2x128xf32>
    %cst_24 = arith.constant 0.333333343 : f32
    %29 = vector.broadcast %cst_24 : f32 to vector<2x128xf32>
    %30 = arith.mulf %28, %29 : vector<2x128xf32>
    %31 = arith.mulf %30, %30 : vector<2x128xf32>
    %cst_25 = arith.constant 1.000000e-03 : f32
    %32 = vector.broadcast %cst_25 : f32 to vector<2x128xf32>
    %33 = arith.maximumf %31, %32 : vector<2x128xf32>
    %34 = arith.mulf %33, %33 : vector<2x128xf32>
    %cst_26 = arith.constant 5.000000e-01 : f32
    %35 = vector.broadcast %cst_26 : f32 to vector<2x128xf32>
    %36 = arith.mulf %33, %35 : vector<2x128xf32>
    %cst_27 = arith.constant 1.000000e+00 : f32
    %37 = vector.broadcast %cst_27 : f32 to vector<2x128xf32>
    %38 = arith.subf %37, %36 : vector<2x128xf32>
    %c0_28 = arith.constant 0 : index
    %c9 = arith.constant 9 : index
    %c0_29 = arith.constant 0 : index
    %c0_30 = arith.constant 0 : index
    %39 = vector.load %arg4[%c0_28, %c9, %c0_29, %c0_30] : memref<1x24x2x128xf32, #tpu.memory_space<vmem>>, vector<1x1x2x128xf32>
    %40 = vector.shape_cast %39 : vector<1x1x2x128xf32> to vector<2x128xf32>
    %c0_31 = arith.constant 0 : index
    %c10 = arith.constant 10 : index
    %c0_32 = arith.constant 0 : index
    %c0_33 = arith.constant 0 : index
    %41 = vector.load %arg4[%c0_31, %c10, %c0_32, %c0_33] : memref<1x24x2x128xf32, #tpu.memory_space<vmem>>, vector<1x1x2x128xf32>
    %42 = vector.shape_cast %41 : vector<1x1x2x128xf32> to vector<2x128xf32>
    %c0_34 = arith.constant 0 : index
    %c11 = arith.constant 11 : index
    %c0_35 = arith.constant 0 : index
    %c0_36 = arith.constant 0 : index
    %43 = vector.load %arg4[%c0_34, %c11, %c0_35, %c0_36] : memref<1x24x2x128xf32, #tpu.memory_space<vmem>>, vector<1x1x2x128xf32>
    %44 = vector.shape_cast %43 : vector<1x1x2x128xf32> to vector<2x128xf32>
    %cst_37 = arith.constant 1.000000e+00 : f32
    %45 = vector.broadcast %cst_37 : f32 to vector<2x128xf32>
    %46 = arith.subf %45, %40 : vector<2x128xf32>
    %cst_38 = arith.constant 1.000000e+00 : f32
    %47 = vector.broadcast %cst_38 : f32 to vector<2x128xf32>
    %48 = arith.subf %47, %42 : vector<2x128xf32>
    %cst_39 = arith.constant 1.000000e+00 : f32
    %49 = vector.broadcast %cst_39 : f32 to vector<2x128xf32>
    %50 = arith.subf %49, %44 : vector<2x128xf32>
    %c0_40 = arith.constant 0 : index
    %c3 = arith.constant 3 : index
    %c0_41 = arith.constant 0 : index
    %c0_42 = arith.constant 0 : index
    %51 = vector.load %arg4[%c0_40, %c3, %c0_41, %c0_42] : memref<1x24x2x128xf32, #tpu.memory_space<vmem>>, vector<1x1x2x128xf32>
    %52 = vector.shape_cast %51 : vector<1x1x2x128xf32> to vector<2x128xf32>
    %53 = arith.mulf %52, %46 : vector<2x128xf32>
    %cst_43 = arith.constant 0.318309873 : f32
    %54 = vector.broadcast %cst_43 : f32 to vector<2x128xf32>
    %55 = arith.mulf %53, %54 : vector<2x128xf32>
    %c0_44 = arith.constant 0 : index
    %c4 = arith.constant 4 : index
    %c0_45 = arith.constant 0 : index
    %c0_46 = arith.constant 0 : index
    %56 = vector.load %arg4[%c0_44, %c4, %c0_45, %c0_46] : memref<1x24x2x128xf32, #tpu.memory_space<vmem>>, vector<1x1x2x128xf32>
    %57 = vector.shape_cast %56 : vector<1x1x2x128xf32> to vector<2x128xf32>
    %58 = arith.mulf %57, %48 : vector<2x128xf32>
    %cst_47 = arith.constant 0.318309873 : f32
    %59 = vector.broadcast %cst_47 : f32 to vector<2x128xf32>
    %60 = arith.mulf %58, %59 : vector<2x128xf32>
    %c0_48 = arith.constant 0 : index
    %c5 = arith.constant 5 : index
    %c0_49 = arith.constant 0 : index
    %c0_50 = arith.constant 0 : index
    %61 = vector.load %arg4[%c0_48, %c5, %c0_49, %c0_50] : memref<1x24x2x128xf32, #tpu.memory_space<vmem>>, vector<1x1x2x128xf32>
    %62 = vector.shape_cast %61 : vector<1x1x2x128xf32> to vector<2x128xf32>
    %63 = arith.mulf %62, %50 : vector<2x128xf32>
    %cst_51 = arith.constant 0.318309873 : f32
    %64 = vector.broadcast %cst_51 : f32 to vector<2x128xf32>
    %65 = arith.mulf %63, %64 : vector<2x128xf32>
    %c0_52 = arith.constant 0 : index
    %c12 = arith.constant 12 : index
    %c0_53 = arith.constant 0 : index
    %c0_54 = arith.constant 0 : index
    %66 = vector.load %arg4[%c0_52, %c12, %c0_53, %c0_54] : memref<1x24x2x128xf32, #tpu.memory_space<vmem>>, vector<1x1x2x128xf32>
    %67 = vector.shape_cast %66 : vector<1x1x2x128xf32> to vector<2x128xf32>
    %c0_55 = arith.constant 0 : index
    %c13 = arith.constant 13 : index
    %c0_56 = arith.constant 0 : index
    %c0_57 = arith.constant 0 : index
    %68 = vector.load %arg4[%c0_55, %c13, %c0_56, %c0_57] : memref<1x24x2x128xf32, #tpu.memory_space<vmem>>, vector<1x1x2x128xf32>
    %69 = vector.shape_cast %68 : vector<1x1x2x128xf32> to vector<2x128xf32>
    %c0_58 = arith.constant 0 : index
    %c14 = arith.constant 14 : index
    %c0_59 = arith.constant 0 : index
    %c0_60 = arith.constant 0 : index
    %70 = vector.load %arg4[%c0_58, %c14, %c0_59, %c0_60] : memref<1x24x2x128xf32, #tpu.memory_space<vmem>>, vector<1x1x2x128xf32>
    %71 = vector.shape_cast %70 : vector<1x1x2x128xf32> to vector<2x128xf32>
    %72 = arith.mulf %67, %67 : vector<2x128xf32>
    %73 = arith.mulf %69, %69 : vector<2x128xf32>
    %74 = arith.addf %72, %73 : vector<2x128xf32>
    %75 = arith.mulf %71, %71 : vector<2x128xf32>
    %76 = arith.addf %74, %75 : vector<2x128xf32>
    %cst_61 = arith.constant 9.99999996E-13 : f32
    %77 = vector.broadcast %cst_61 : f32 to vector<2x128xf32>
    %78 = arith.addf %76, %77 : vector<2x128xf32>
    %79 = math.rsqrt %78 : vector<2x128xf32>
    %80 = arith.mulf %67, %79 : vector<2x128xf32>
    %81 = arith.mulf %69, %79 : vector<2x128xf32>
    %82 = arith.mulf %71, %79 : vector<2x128xf32>
    %c0_62 = arith.constant 0 : index
    %c18 = arith.constant 18 : index
    %c0_63 = arith.constant 0 : index
    %c0_64 = arith.constant 0 : index
    %83 = vector.load %arg4[%c0_62, %c18, %c0_63, %c0_64] : memref<1x24x2x128xf32, #tpu.memory_space<vmem>>, vector<1x1x2x128xf32>
    %84 = vector.shape_cast %83 : vector<1x1x2x128xf32> to vector<2x128xf32>
    %c0_65 = arith.constant 0 : index
    %c19 = arith.constant 19 : index
    %c0_66 = arith.constant 0 : index
    %c0_67 = arith.constant 0 : index
    %85 = vector.load %arg4[%c0_65, %c19, %c0_66, %c0_67] : memref<1x24x2x128xf32, #tpu.memory_space<vmem>>, vector<1x1x2x128xf32>
    %86 = vector.shape_cast %85 : vector<1x1x2x128xf32> to vector<2x128xf32>
    %87 = arith.addf %84, %86 : vector<2x128xf32>
    %c0_68 = arith.constant 0 : index
    %c20 = arith.constant 20 : index
    %c0_69 = arith.constant 0 : index
    %c0_70 = arith.constant 0 : index
    %88 = vector.load %arg4[%c0_68, %c20, %c0_69, %c0_70] : memref<1x24x2x128xf32, #tpu.memory_space<vmem>>, vector<1x1x2x128xf32>
    %89 = vector.shape_cast %88 : vector<1x1x2x128xf32> to vector<2x128xf32>
    %90 = arith.addf %87, %89 : vector<2x128xf32>
    %cst_71 = arith.constant 0.333333343 : f32
    %91 = vector.broadcast %cst_71 : f32 to vector<2x128xf32>
    %92 = arith.mulf %90, %91 : vector<2x128xf32>
    %93 = arith.mulf %92, %92 : vector<2x128xf32>
    %cst_72 = arith.constant 1.000000e-03 : f32
    %94 = vector.broadcast %cst_72 : f32 to vector<2x128xf32>
    %95 = arith.maximumf %93, %94 : vector<2x128xf32>
    %96 = arith.mulf %95, %95 : vector<2x128xf32>
    %cst_73 = arith.constant 5.000000e-01 : f32
    %97 = vector.broadcast %cst_73 : f32 to vector<2x128xf32>
    %98 = arith.mulf %95, %97 : vector<2x128xf32>
    %cst_74 = arith.constant 1.000000e+00 : f32
    %99 = vector.broadcast %cst_74 : f32 to vector<2x128xf32>
    %100 = arith.subf %99, %98 : vector<2x128xf32>
    %c0_75 = arith.constant 0 : index
    %c21 = arith.constant 21 : index
    %c0_76 = arith.constant 0 : index
    %c0_77 = arith.constant 0 : index
    %101 = vector.load %arg4[%c0_75, %c21, %c0_76, %c0_77] : memref<1x24x2x128xf32, #tpu.memory_space<vmem>>, vector<1x1x2x128xf32>
    %102 = vector.shape_cast %101 : vector<1x1x2x128xf32> to vector<2x128xf32>
    %c0_78 = arith.constant 0 : index
    %c22 = arith.constant 22 : index
    %c0_79 = arith.constant 0 : index
    %c0_80 = arith.constant 0 : index
    %103 = vector.load %arg4[%c0_78, %c22, %c0_79, %c0_80] : memref<1x24x2x128xf32, #tpu.memory_space<vmem>>, vector<1x1x2x128xf32>
    %104 = vector.shape_cast %103 : vector<1x1x2x128xf32> to vector<2x128xf32>
    %c0_81 = arith.constant 0 : index
    %c23 = arith.constant 23 : index
    %c0_82 = arith.constant 0 : index
    %c0_83 = arith.constant 0 : index
    %105 = vector.load %arg4[%c0_81, %c23, %c0_82, %c0_83] : memref<1x24x2x128xf32, #tpu.memory_space<vmem>>, vector<1x1x2x128xf32>
    %106 = vector.shape_cast %105 : vector<1x1x2x128xf32> to vector<2x128xf32>
    %cst_84 = arith.constant 1.000000e+00 : f32
    %107 = vector.broadcast %cst_84 : f32 to vector<2x128xf32>
    %108 = arith.subf %107, %102 : vector<2x128xf32>
    %cst_85 = arith.constant 1.000000e+00 : f32
    %109 = vector.broadcast %cst_85 : f32 to vector<2x128xf32>
    %110 = arith.subf %109, %104 : vector<2x128xf32>
    %cst_86 = arith.constant 1.000000e+00 : f32
    %111 = vector.broadcast %cst_86 : f32 to vector<2x128xf32>
    %112 = arith.subf %111, %106 : vector<2x128xf32>
    %c0_87 = arith.constant 0 : index
    %c15 = arith.constant 15 : index
    %c0_88 = arith.constant 0 : index
    %c0_89 = arith.constant 0 : index
    %113 = vector.load %arg4[%c0_87, %c15, %c0_88, %c0_89] : memref<1x24x2x128xf32, #tpu.memory_space<vmem>>, vector<1x1x2x128xf32>
    %114 = vector.shape_cast %113 : vector<1x1x2x128xf32> to vector<2x128xf32>
    %115 = arith.mulf %114, %108 : vector<2x128xf32>
    %cst_90 = arith.constant 0.318309873 : f32
    %116 = vector.broadcast %cst_90 : f32 to vector<2x128xf32>
    %117 = arith.mulf %115, %116 : vector<2x128xf32>
    %c0_91 = arith.constant 0 : index
    %c16 = arith.constant 16 : index
    %c0_92 = arith.constant 0 : index
    %c0_93 = arith.constant 0 : index
    %118 = vector.load %arg4[%c0_91, %c16, %c0_92, %c0_93] : memref<1x24x2x128xf32, #tpu.memory_space<vmem>>, vector<1x1x2x128xf32>
    %119 = vector.shape_cast %118 : vector<1x1x2x128xf32> to vector<2x128xf32>
    %120 = arith.mulf %119, %110 : vector<2x128xf32>
    %cst_94 = arith.constant 0.318309873 : f32
    %121 = vector.broadcast %cst_94 : f32 to vector<2x128xf32>
    %122 = arith.mulf %120, %121 : vector<2x128xf32>
    %c0_95 = arith.constant 0 : index
    %c17 = arith.constant 17 : index
    %c0_96 = arith.constant 0 : index
    %c0_97 = arith.constant 0 : index
    %123 = vector.load %arg4[%c0_95, %c17, %c0_96, %c0_97] : memref<1x24x2x128xf32, #tpu.memory_space<vmem>>, vector<1x1x2x128xf32>
    %124 = vector.shape_cast %123 : vector<1x1x2x128xf32> to vector<2x128xf32>
    %125 = arith.mulf %124, %112 : vector<2x128xf32>
    %cst_98 = arith.constant 0.318309873 : f32
    %126 = vector.broadcast %cst_98 : f32 to vector<2x128xf32>
    %127 = arith.mulf %125, %126 : vector<2x128xf32>
    %cst_99 = arith.constant 0.000000e+00 : f32
    %128 = vector.broadcast %cst_99 : f32 to vector<2x128xf32>
    %c0_100 = arith.constant 0 : index
    %129 = memref.load %arg2[%c0_100] : memref<81xf32, #tpu.memory_space<smem>>
    %c1_101 = arith.constant 1 : index
    %130 = memref.load %arg2[%c1_101] : memref<81xf32, #tpu.memory_space<smem>>
    %c2_102 = arith.constant 2 : index
    %131 = memref.load %arg2[%c2_102] : memref<81xf32, #tpu.memory_space<smem>>
    %c3_103 = arith.constant 3 : index
    %132 = memref.load %arg2[%c3_103] : memref<81xf32, #tpu.memory_space<smem>>
    %c4_104 = arith.constant 4 : index
    %133 = memref.load %arg2[%c4_104] : memref<81xf32, #tpu.memory_space<smem>>
    %c5_105 = arith.constant 5 : index
    %134 = memref.load %arg2[%c5_105] : memref<81xf32, #tpu.memory_space<smem>>
    %c6_106 = arith.constant 6 : index
    %135 = memref.load %arg2[%c6_106] : memref<81xf32, #tpu.memory_space<smem>>
    %c7_107 = arith.constant 7 : index
    %136 = memref.load %arg2[%c7_107] : memref<81xf32, #tpu.memory_space<smem>>
    %c8_108 = arith.constant 8 : index
    %137 = memref.load %arg2[%c8_108] : memref<81xf32, #tpu.memory_space<smem>>
    %138 = vector.broadcast %129 : f32 to vector<2x128xf32>
    %139 = arith.subf %138, %1 : vector<2x128xf32>
    %140 = vector.broadcast %130 : f32 to vector<2x128xf32>
    %141 = arith.subf %140, %3 : vector<2x128xf32>
    %142 = arith.mulf %139, %139 : vector<2x128xf32>
    %143 = arith.mulf %141, %141 : vector<2x128xf32>
    %144 = arith.addf %142, %143 : vector<2x128xf32>
    %145 = arith.mulf %131, %131 : f32
    %146 = vector.broadcast %145 : f32 to vector<2x128xf32>
    %147 = arith.addf %144, %146 : vector<2x128xf32>
    %cst_109 = arith.constant 9.99999996E-13 : f32
    %148 = vector.broadcast %cst_109 : f32 to vector<2x128xf32>
    %149 = arith.addf %147, %148 : vector<2x128xf32>
    %150 = math.rsqrt %149 : vector<2x128xf32>
    %151 = arith.mulf %139, %150 : vector<2x128xf32>
    %152 = arith.mulf %141, %150 : vector<2x128xf32>
    %153 = vector.broadcast %131 : f32 to vector<2x128xf32>
    %154 = arith.mulf %153, %150 : vector<2x128xf32>
    %155 = arith.mulf %150, %150 : vector<2x128xf32>
    %156 = vector.broadcast %132 : f32 to vector<2x128xf32>
    %157 = arith.subf %156, %1 : vector<2x128xf32>
    %158 = vector.broadcast %133 : f32 to vector<2x128xf32>
    %159 = arith.subf %158, %3 : vector<2x128xf32>
    %160 = arith.mulf %157, %157 : vector<2x128xf32>
    %161 = arith.mulf %159, %159 : vector<2x128xf32>
    %162 = arith.addf %160, %161 : vector<2x128xf32>
    %163 = arith.mulf %134, %134 : f32
    %164 = vector.broadcast %163 : f32 to vector<2x128xf32>
    %165 = arith.addf %162, %164 : vector<2x128xf32>
    %cst_110 = arith.constant 9.99999996E-13 : f32
    %166 = vector.broadcast %cst_110 : f32 to vector<2x128xf32>
    %167 = arith.addf %165, %166 : vector<2x128xf32>
    %168 = math.rsqrt %167 : vector<2x128xf32>
    %169 = arith.mulf %157, %168 : vector<2x128xf32>
    %170 = arith.mulf %159, %168 : vector<2x128xf32>
    %171 = vector.broadcast %134 : f32 to vector<2x128xf32>
    %172 = arith.mulf %171, %168 : vector<2x128xf32>
    %173 = arith.addf %151, %169 : vector<2x128xf32>
    %174 = arith.addf %152, %170 : vector<2x128xf32>
    %175 = arith.addf %154, %172 : vector<2x128xf32>
    %176 = arith.mulf %173, %173 : vector<2x128xf32>
    %177 = arith.mulf %174, %174 : vector<2x128xf32>
    %178 = arith.addf %176, %177 : vector<2x128xf32>
    %179 = arith.mulf %175, %175 : vector<2x128xf32>
    %180 = arith.addf %178, %179 : vector<2x128xf32>
    %cst_111 = arith.constant 9.99999996E-13 : f32
    %181 = vector.broadcast %cst_111 : f32 to vector<2x128xf32>
    %182 = arith.addf %180, %181 : vector<2x128xf32>
    %183 = math.rsqrt %182 : vector<2x128xf32>
    %184 = arith.mulf %173, %183 : vector<2x128xf32>
    %185 = arith.mulf %174, %183 : vector<2x128xf32>
    %186 = arith.mulf %175, %183 : vector<2x128xf32>
    %187 = arith.mulf %169, %184 : vector<2x128xf32>
    %188 = arith.mulf %170, %185 : vector<2x128xf32>
    %189 = arith.addf %187, %188 : vector<2x128xf32>
    %190 = arith.mulf %172, %186 : vector<2x128xf32>
    %191 = arith.addf %189, %190 : vector<2x128xf32>
    %cst_112 = arith.constant 9.99999974E-5 : f32
    %192 = vector.broadcast %cst_112 : f32 to vector<2x128xf32>
    %193 = arith.maximumf %191, %192 : vector<2x128xf32>
    %cst_113 = arith.constant -5.554730e+00 : f32
    %194 = vector.broadcast %cst_113 : f32 to vector<2x128xf32>
    %195 = arith.mulf %194, %193 : vector<2x128xf32>
    %cst_114 = arith.constant 6.983160e+00 : f32
    %196 = vector.broadcast %cst_114 : f32 to vector<2x128xf32>
    %197 = arith.subf %195, %196 : vector<2x128xf32>
    %198 = arith.mulf %197, %193 : vector<2x128xf32>
    %199 = math.exp2 %198 : vector<2x128xf32>
    %200 = arith.mulf %18, %151 : vector<2x128xf32>
    %201 = arith.mulf %19, %152 : vector<2x128xf32>
    %202 = arith.addf %200, %201 : vector<2x128xf32>
    %203 = arith.mulf %20, %154 : vector<2x128xf32>
    %204 = arith.addf %202, %203 : vector<2x128xf32>
    %cst_115 = arith.constant 0.000000e+00 : f32
    %205 = vector.broadcast %cst_115 : f32 to vector<2x128xf32>
    %206 = arith.maximumf %204, %205 : vector<2x128xf32>
    %207 = arith.mulf %18, %169 : vector<2x128xf32>
    %208 = arith.mulf %19, %170 : vector<2x128xf32>
    %209 = arith.addf %207, %208 : vector<2x128xf32>
    %210 = arith.mulf %20, %172 : vector<2x128xf32>
    %211 = arith.addf %209, %210 : vector<2x128xf32>
    %cst_116 = arith.constant 9.99999974E-5 : f32
    %212 = vector.broadcast %cst_116 : f32 to vector<2x128xf32>
    %213 = arith.maximumf %211, %212 : vector<2x128xf32>
    %214 = arith.mulf %18, %184 : vector<2x128xf32>
    %215 = arith.mulf %19, %185 : vector<2x128xf32>
    %216 = arith.addf %214, %215 : vector<2x128xf32>
    %217 = arith.mulf %20, %186 : vector<2x128xf32>
    %218 = arith.addf %216, %217 : vector<2x128xf32>
    %cst_117 = arith.constant 0.000000e+00 : f32
    %219 = vector.broadcast %cst_117 : f32 to vector<2x128xf32>
    %220 = arith.maximumf %218, %219 : vector<2x128xf32>
    %221 = arith.mulf %220, %220 : vector<2x128xf32>
    %cst_118 = arith.constant 1.000000e+00 : f32
    %222 = vector.broadcast %cst_118 : f32 to vector<2x128xf32>
    %223 = arith.subf %34, %222 : vector<2x128xf32>
    %224 = arith.mulf %221, %223 : vector<2x128xf32>
    %cst_119 = arith.constant 1.000000e+00 : f32
    %225 = vector.broadcast %cst_119 : f32 to vector<2x128xf32>
    %226 = arith.addf %224, %225 : vector<2x128xf32>
    %227 = arith.mulf %226, %226 : vector<2x128xf32>
    %cst_120 = arith.constant 12.566371 : f32
    %228 = vector.broadcast %cst_120 : f32 to vector<2x128xf32>
    %229 = arith.mulf %228, %227 : vector<2x128xf32>
    %230 = arith.mulf %206, %38 : vector<2x128xf32>
    %231 = arith.addf %230, %36 : vector<2x128xf32>
    %cst_121 = arith.constant 9.99999997E-7 : f32
    %232 = vector.broadcast %cst_121 : f32 to vector<2x128xf32>
    %233 = arith.addf %231, %232 : vector<2x128xf32>
    %234 = arith.mulf %229, %233 : vector<2x128xf32>
    %235 = arith.mulf %213, %38 : vector<2x128xf32>
    %236 = arith.addf %235, %36 : vector<2x128xf32>
    %cst_122 = arith.constant 9.99999997E-7 : f32
    %237 = vector.broadcast %cst_122 : f32 to vector<2x128xf32>
    %238 = arith.addf %236, %237 : vector<2x128xf32>
    %239 = arith.mulf %234, %238 : vector<2x128xf32>
    %240 = tpu.reciprocal %239 {approx = true} : vector<2x128xf32> -> vector<2x128xf32>
    %241 = arith.mulf %34, %240 : vector<2x128xf32>
    %242 = arith.mulf %206, %155 : vector<2x128xf32>
    %243 = arith.mulf %46, %199 : vector<2x128xf32>
    %244 = arith.addf %40, %243 : vector<2x128xf32>
    %245 = arith.mulf %241, %244 : vector<2x128xf32>
    %246 = arith.addf %55, %245 : vector<2x128xf32>
    %247 = arith.mulf %246, %242 : vector<2x128xf32>
    %248 = vector.broadcast %135 : f32 to vector<2x128xf32>
    %249 = arith.mulf %247, %248 : vector<2x128xf32>
    %250 = arith.mulf %48, %199 : vector<2x128xf32>
    %251 = arith.addf %42, %250 : vector<2x128xf32>
    %252 = arith.mulf %241, %251 : vector<2x128xf32>
    %253 = arith.addf %60, %252 : vector<2x128xf32>
    %254 = arith.mulf %253, %242 : vector<2x128xf32>
    %255 = vector.broadcast %136 : f32 to vector<2x128xf32>
    %256 = arith.mulf %254, %255 : vector<2x128xf32>
    %257 = arith.mulf %50, %199 : vector<2x128xf32>
    %258 = arith.addf %44, %257 : vector<2x128xf32>
    %259 = arith.mulf %241, %258 : vector<2x128xf32>
    %260 = arith.addf %65, %259 : vector<2x128xf32>
    %261 = arith.mulf %260, %242 : vector<2x128xf32>
    %262 = vector.broadcast %137 : f32 to vector<2x128xf32>
    %263 = arith.mulf %261, %262 : vector<2x128xf32>
    %264 = arith.mulf %80, %151 : vector<2x128xf32>
    %265 = arith.mulf %81, %152 : vector<2x128xf32>
    %266 = arith.addf %264, %265 : vector<2x128xf32>
    %267 = arith.mulf %82, %154 : vector<2x128xf32>
    %268 = arith.addf %266, %267 : vector<2x128xf32>
    %cst_123 = arith.constant 0.000000e+00 : f32
    %269 = vector.broadcast %cst_123 : f32 to vector<2x128xf32>
    %270 = arith.maximumf %268, %269 : vector<2x128xf32>
    %271 = arith.mulf %80, %169 : vector<2x128xf32>
    %272 = arith.mulf %81, %170 : vector<2x128xf32>
    %273 = arith.addf %271, %272 : vector<2x128xf32>
    %274 = arith.mulf %82, %172 : vector<2x128xf32>
    %275 = arith.addf %273, %274 : vector<2x128xf32>
    %cst_124 = arith.constant 9.99999974E-5 : f32
    %276 = vector.broadcast %cst_124 : f32 to vector<2x128xf32>
    %277 = arith.maximumf %275, %276 : vector<2x128xf32>
    %278 = arith.mulf %80, %184 : vector<2x128xf32>
    %279 = arith.mulf %81, %185 : vector<2x128xf32>
    %280 = arith.addf %278, %279 : vector<2x128xf32>
    %281 = arith.mulf %82, %186 : vector<2x128xf32>
    %282 = arith.addf %280, %281 : vector<2x128xf32>
    %cst_125 = arith.constant 0.000000e+00 : f32
    %283 = vector.broadcast %cst_125 : f32 to vector<2x128xf32>
    %284 = arith.maximumf %282, %283 : vector<2x128xf32>
    %285 = arith.mulf %284, %284 : vector<2x128xf32>
    %cst_126 = arith.constant 1.000000e+00 : f32
    %286 = vector.broadcast %cst_126 : f32 to vector<2x128xf32>
    %287 = arith.subf %96, %286 : vector<2x128xf32>
    %288 = arith.mulf %285, %287 : vector<2x128xf32>
    %cst_127 = arith.constant 1.000000e+00 : f32
    %289 = vector.broadcast %cst_127 : f32 to vector<2x128xf32>
    %290 = arith.addf %288, %289 : vector<2x128xf32>
    %291 = arith.mulf %290, %290 : vector<2x128xf32>
    %cst_128 = arith.constant 12.566371 : f32
    %292 = vector.broadcast %cst_128 : f32 to vector<2x128xf32>
    %293 = arith.mulf %292, %291 : vector<2x128xf32>
    %294 = arith.mulf %270, %100 : vector<2x128xf32>
    %295 = arith.addf %294, %98 : vector<2x128xf32>
    %cst_129 = arith.constant 9.99999997E-7 : f32
    %296 = vector.broadcast %cst_129 : f32 to vector<2x128xf32>
    %297 = arith.addf %295, %296 : vector<2x128xf32>
    %298 = arith.mulf %293, %297 : vector<2x128xf32>
    %299 = arith.mulf %277, %100 : vector<2x128xf32>
    %300 = arith.addf %299, %98 : vector<2x128xf32>
    %cst_130 = arith.constant 9.99999997E-7 : f32
    %301 = vector.broadcast %cst_130 : f32 to vector<2x128xf32>
    %302 = arith.addf %300, %301 : vector<2x128xf32>
    %303 = arith.mulf %298, %302 : vector<2x128xf32>
    %304 = tpu.reciprocal %303 {approx = true} : vector<2x128xf32> -> vector<2x128xf32>
    %305 = arith.mulf %96, %304 : vector<2x128xf32>
    %306 = arith.mulf %270, %155 : vector<2x128xf32>
    %307 = arith.mulf %108, %199 : vector<2x128xf32>
    %308 = arith.addf %102, %307 : vector<2x128xf32>
    %309 = arith.mulf %305, %308 : vector<2x128xf32>
    %310 = arith.addf %117, %309 : vector<2x128xf32>
    %311 = arith.mulf %310, %306 : vector<2x128xf32>
    %312 = vector.broadcast %135 : f32 to vector<2x128xf32>
    %313 = arith.mulf %311, %312 : vector<2x128xf32>
    %314 = arith.mulf %110, %199 : vector<2x128xf32>
    %315 = arith.addf %104, %314 : vector<2x128xf32>
    %316 = arith.mulf %305, %315 : vector<2x128xf32>
    %317 = arith.addf %122, %316 : vector<2x128xf32>
    %318 = arith.mulf %317, %306 : vector<2x128xf32>
    %319 = vector.broadcast %136 : f32 to vector<2x128xf32>
    %320 = arith.mulf %318, %319 : vector<2x128xf32>
    %321 = arith.mulf %112, %199 : vector<2x128xf32>
    %322 = arith.addf %106, %321 : vector<2x128xf32>
    %323 = arith.mulf %305, %322 : vector<2x128xf32>
    %324 = arith.addf %127, %323 : vector<2x128xf32>
    %325 = arith.mulf %324, %306 : vector<2x128xf32>
    %326 = vector.broadcast %137 : f32 to vector<2x128xf32>
    %327 = arith.mulf %325, %326 : vector<2x128xf32>
    %cst_131 = arith.constant 9.99999974E-6 : f32
    %328 = vector.broadcast %cst_131 : f32 to vector<2x128xf32>
    %329 = arith.addf %249, %328 : vector<2x128xf32>
    %cst_132 = arith.constant 9.99999974E-6 : f32
    %330 = vector.broadcast %cst_132 : f32 to vector<2x128xf32>
    %331 = arith.addf %313, %330 : vector<2x128xf32>
    %332 = arith.divf %329, %331 : vector<2x128xf32>
    %333 = math.log %332 : vector<2x128xf32>
    %334 = math.absf %333 : vector<2x128xf32>
    %335 = arith.addf %128, %334 : vector<2x128xf32>
    %cst_133 = arith.constant 9.99999974E-6 : f32
    %336 = vector.broadcast %cst_133 : f32 to vector<2x128xf32>
    %337 = arith.addf %256, %336 : vector<2x128xf32>
    %cst_134 = arith.constant 9.99999974E-6 : f32
    %338 = vector.broadcast %cst_134 : f32 to vector<2x128xf32>
    %339 = arith.addf %320, %338 : vector<2x128xf32>
    %340 = arith.divf %337, %339 : vector<2x128xf32>
    %341 = math.log %340 : vector<2x128xf32>
    %342 = math.absf %341 : vector<2x128xf32>
    %343 = arith.addf %335, %342 : vector<2x128xf32>
    %cst_135 = arith.constant 9.99999974E-6 : f32
    %344 = vector.broadcast %cst_135 : f32 to vector<2x128xf32>
    %345 = arith.addf %263, %344 : vector<2x128xf32>
    %cst_136 = arith.constant 9.99999974E-6 : f32
    %346 = vector.broadcast %cst_136 : f32 to vector<2x128xf32>
    %347 = arith.addf %327, %346 : vector<2x128xf32>
    %348 = arith.divf %345, %347 : vector<2x128xf32>
    %349 = math.log %348 : vector<2x128xf32>
    %350 = math.absf %349 : vector<2x128xf32>
    %351 = arith.addf %343, %350 : vector<2x128xf32>
    %c9_137 = arith.constant 9 : index
    %352 = memref.load %arg2[%c9_137] : memref<81xf32, #tpu.memory_space<smem>>
    %c10_138 = arith.constant 10 : index
    %353 = memref.load %arg2[%c10_138] : memref<81xf32, #tpu.memory_space<smem>>
    %c11_139 = arith.constant 11 : index
    %354 = memref.load %arg2[%c11_139] : memref<81xf32, #tpu.memory_space<smem>>
    %c12_140 = arith.constant 12 : index
    %355 = memref.load %arg2[%c12_140] : memref<81xf32, #tpu.memory_space<smem>>
    %c13_141 = arith.constant 13 : index
    %356 = memref.load %arg2[%c13_141] : memref<81xf32, #tpu.memory_space<smem>>
    %c14_142 = arith.constant 14 : index
    %357 = memref.load %arg2[%c14_142] : memref<81xf32, #tpu.memory_space<smem>>
    %c15_143 = arith.constant 15 : index
    %358 = memref.load %arg2[%c15_143] : memref<81xf32, #tpu.memory_space<smem>>
    %c16_144 = arith.constant 16 : index
    %359 = memref.load %arg2[%c16_144] : memref<81xf32, #tpu.memory_space<smem>>
    %c17_145 = arith.constant 17 : index
    %360 = memref.load %arg2[%c17_145] : memref<81xf32, #tpu.memory_space<smem>>
    %361 = vector.broadcast %352 : f32 to vector<2x128xf32>
    %362 = arith.subf %361, %1 : vector<2x128xf32>
    %363 = vector.broadcast %353 : f32 to vector<2x128xf32>
    %364 = arith.subf %363, %3 : vector<2x128xf32>
    %365 = arith.mulf %362, %362 : vector<2x128xf32>
    %366 = arith.mulf %364, %364 : vector<2x128xf32>
    %367 = arith.addf %365, %366 : vector<2x128xf32>
    %368 = arith.mulf %354, %354 : f32
    %369 = vector.broadcast %368 : f32 to vector<2x128xf32>
    %370 = arith.addf %367, %369 : vector<2x128xf32>
    %cst_146 = arith.constant 9.99999996E-13 : f32
    %371 = vector.broadcast %cst_146 : f32 to vector<2x128xf32>
    %372 = arith.addf %370, %371 : vector<2x128xf32>
    %373 = math.rsqrt %372 : vector<2x128xf32>
    %374 = arith.mulf %362, %373 : vector<2x128xf32>
    %375 = arith.mulf %364, %373 : vector<2x128xf32>
    %376 = vector.broadcast %354 : f32 to vector<2x128xf32>
    %377 = arith.mulf %376, %373 : vector<2x128xf32>
    %378 = arith.mulf %373, %373 : vector<2x128xf32>
    %379 = vector.broadcast %355 : f32 to vector<2x128xf32>
    %380 = arith.subf %379, %1 : vector<2x128xf32>
    %381 = vector.broadcast %356 : f32 to vector<2x128xf32>
    %382 = arith.subf %381, %3 : vector<2x128xf32>
    %383 = arith.mulf %380, %380 : vector<2x128xf32>
    %384 = arith.mulf %382, %382 : vector<2x128xf32>
    %385 = arith.addf %383, %384 : vector<2x128xf32>
    %386 = arith.mulf %357, %357 : f32
    %387 = vector.broadcast %386 : f32 to vector<2x128xf32>
    %388 = arith.addf %385, %387 : vector<2x128xf32>
    %cst_147 = arith.constant 9.99999996E-13 : f32
    %389 = vector.broadcast %cst_147 : f32 to vector<2x128xf32>
    %390 = arith.addf %388, %389 : vector<2x128xf32>
    %391 = math.rsqrt %390 : vector<2x128xf32>
    %392 = arith.mulf %380, %391 : vector<2x128xf32>
    %393 = arith.mulf %382, %391 : vector<2x128xf32>
    %394 = vector.broadcast %357 : f32 to vector<2x128xf32>
    %395 = arith.mulf %394, %391 : vector<2x128xf32>
    %396 = arith.addf %374, %392 : vector<2x128xf32>
    %397 = arith.addf %375, %393 : vector<2x128xf32>
    %398 = arith.addf %377, %395 : vector<2x128xf32>
    %399 = arith.mulf %396, %396 : vector<2x128xf32>
    %400 = arith.mulf %397, %397 : vector<2x128xf32>
    %401 = arith.addf %399, %400 : vector<2x128xf32>
    %402 = arith.mulf %398, %398 : vector<2x128xf32>
    %403 = arith.addf %401, %402 : vector<2x128xf32>
    %cst_148 = arith.constant 9.99999996E-13 : f32
    %404 = vector.broadcast %cst_148 : f32 to vector<2x128xf32>
    %405 = arith.addf %403, %404 : vector<2x128xf32>
    %406 = math.rsqrt %405 : vector<2x128xf32>
    %407 = arith.mulf %396, %406 : vector<2x128xf32>
    %408 = arith.mulf %397, %406 : vector<2x128xf32>
    %409 = arith.mulf %398, %406 : vector<2x128xf32>
    %410 = arith.mulf %392, %407 : vector<2x128xf32>
    %411 = arith.mulf %393, %408 : vector<2x128xf32>
    %412 = arith.addf %410, %411 : vector<2x128xf32>
    %413 = arith.mulf %395, %409 : vector<2x128xf32>
    %414 = arith.addf %412, %413 : vector<2x128xf32>
    %cst_149 = arith.constant 9.99999974E-5 : f32
    %415 = vector.broadcast %cst_149 : f32 to vector<2x128xf32>
    %416 = arith.maximumf %414, %415 : vector<2x128xf32>
    %cst_150 = arith.constant -5.554730e+00 : f32
    %417 = vector.broadcast %cst_150 : f32 to vector<2x128xf32>
    %418 = arith.mulf %417, %416 : vector<2x128xf32>
    %cst_151 = arith.constant 6.983160e+00 : f32
    %419 = vector.broadcast %cst_151 : f32 to vector<2x128xf32>
    %420 = arith.subf %418, %419 : vector<2x128xf32>
    %421 = arith.mulf %420, %416 : vector<2x128xf32>
    %422 = math.exp2 %421 : vector<2x128xf32>
    %423 = arith.mulf %18, %374 : vector<2x128xf32>
    %424 = arith.mulf %19, %375 : vector<2x128xf32>
    %425 = arith.addf %423, %424 : vector<2x128xf32>
    %426 = arith.mulf %20, %377 : vector<2x128xf32>
    %427 = arith.addf %425, %426 : vector<2x128xf32>
    %cst_152 = arith.constant 0.000000e+00 : f32
    %428 = vector.broadcast %cst_152 : f32 to vector<2x128xf32>
    %429 = arith.maximumf %427, %428 : vector<2x128xf32>
    %430 = arith.mulf %18, %392 : vector<2x128xf32>
    %431 = arith.mulf %19, %393 : vector<2x128xf32>
    %432 = arith.addf %430, %431 : vector<2x128xf32>
    %433 = arith.mulf %20, %395 : vector<2x128xf32>
    %434 = arith.addf %432, %433 : vector<2x128xf32>
    %cst_153 = arith.constant 9.99999974E-5 : f32
    %435 = vector.broadcast %cst_153 : f32 to vector<2x128xf32>
    %436 = arith.maximumf %434, %435 : vector<2x128xf32>
    %437 = arith.mulf %18, %407 : vector<2x128xf32>
    %438 = arith.mulf %19, %408 : vector<2x128xf32>
    %439 = arith.addf %437, %438 : vector<2x128xf32>
    %440 = arith.mulf %20, %409 : vector<2x128xf32>
    %441 = arith.addf %439, %440 : vector<2x128xf32>
    %cst_154 = arith.constant 0.000000e+00 : f32
    %442 = vector.broadcast %cst_154 : f32 to vector<2x128xf32>
    %443 = arith.maximumf %441, %442 : vector<2x128xf32>
    %444 = arith.mulf %443, %443 : vector<2x128xf32>
    %cst_155 = arith.constant 1.000000e+00 : f32
    %445 = vector.broadcast %cst_155 : f32 to vector<2x128xf32>
    %446 = arith.subf %34, %445 : vector<2x128xf32>
    %447 = arith.mulf %444, %446 : vector<2x128xf32>
    %cst_156 = arith.constant 1.000000e+00 : f32
    %448 = vector.broadcast %cst_156 : f32 to vector<2x128xf32>
    %449 = arith.addf %447, %448 : vector<2x128xf32>
    %450 = arith.mulf %449, %449 : vector<2x128xf32>
    %cst_157 = arith.constant 12.566371 : f32
    %451 = vector.broadcast %cst_157 : f32 to vector<2x128xf32>
    %452 = arith.mulf %451, %450 : vector<2x128xf32>
    %453 = arith.mulf %429, %38 : vector<2x128xf32>
    %454 = arith.addf %453, %36 : vector<2x128xf32>
    %cst_158 = arith.constant 9.99999997E-7 : f32
    %455 = vector.broadcast %cst_158 : f32 to vector<2x128xf32>
    %456 = arith.addf %454, %455 : vector<2x128xf32>
    %457 = arith.mulf %452, %456 : vector<2x128xf32>
    %458 = arith.mulf %436, %38 : vector<2x128xf32>
    %459 = arith.addf %458, %36 : vector<2x128xf32>
    %cst_159 = arith.constant 9.99999997E-7 : f32
    %460 = vector.broadcast %cst_159 : f32 to vector<2x128xf32>
    %461 = arith.addf %459, %460 : vector<2x128xf32>
    %462 = arith.mulf %457, %461 : vector<2x128xf32>
    %463 = tpu.reciprocal %462 {approx = true} : vector<2x128xf32> -> vector<2x128xf32>
    %464 = arith.mulf %34, %463 : vector<2x128xf32>
    %465 = arith.mulf %429, %378 : vector<2x128xf32>
    %466 = arith.mulf %46, %422 : vector<2x128xf32>
    %467 = arith.addf %40, %466 : vector<2x128xf32>
    %468 = arith.mulf %464, %467 : vector<2x128xf32>
    %469 = arith.addf %55, %468 : vector<2x128xf32>
    %470 = arith.mulf %469, %465 : vector<2x128xf32>
    %471 = vector.broadcast %358 : f32 to vector<2x128xf32>
    %472 = arith.mulf %470, %471 : vector<2x128xf32>
    %473 = arith.mulf %48, %422 : vector<2x128xf32>
    %474 = arith.addf %42, %473 : vector<2x128xf32>
    %475 = arith.mulf %464, %474 : vector<2x128xf32>
    %476 = arith.addf %60, %475 : vector<2x128xf32>
    %477 = arith.mulf %476, %465 : vector<2x128xf32>
    %478 = vector.broadcast %359 : f32 to vector<2x128xf32>
    %479 = arith.mulf %477, %478 : vector<2x128xf32>
    %480 = arith.mulf %50, %422 : vector<2x128xf32>
    %481 = arith.addf %44, %480 : vector<2x128xf32>
    %482 = arith.mulf %464, %481 : vector<2x128xf32>
    %483 = arith.addf %65, %482 : vector<2x128xf32>
    %484 = arith.mulf %483, %465 : vector<2x128xf32>
    %485 = vector.broadcast %360 : f32 to vector<2x128xf32>
    %486 = arith.mulf %484, %485 : vector<2x128xf32>
    %487 = arith.mulf %80, %374 : vector<2x128xf32>
    %488 = arith.mulf %81, %375 : vector<2x128xf32>
    %489 = arith.addf %487, %488 : vector<2x128xf32>
    %490 = arith.mulf %82, %377 : vector<2x128xf32>
    %491 = arith.addf %489, %490 : vector<2x128xf32>
    %cst_160 = arith.constant 0.000000e+00 : f32
    %492 = vector.broadcast %cst_160 : f32 to vector<2x128xf32>
    %493 = arith.maximumf %491, %492 : vector<2x128xf32>
    %494 = arith.mulf %80, %392 : vector<2x128xf32>
    %495 = arith.mulf %81, %393 : vector<2x128xf32>
    %496 = arith.addf %494, %495 : vector<2x128xf32>
    %497 = arith.mulf %82, %395 : vector<2x128xf32>
    %498 = arith.addf %496, %497 : vector<2x128xf32>
    %cst_161 = arith.constant 9.99999974E-5 : f32
    %499 = vector.broadcast %cst_161 : f32 to vector<2x128xf32>
    %500 = arith.maximumf %498, %499 : vector<2x128xf32>
    %501 = arith.mulf %80, %407 : vector<2x128xf32>
    %502 = arith.mulf %81, %408 : vector<2x128xf32>
    %503 = arith.addf %501, %502 : vector<2x128xf32>
    %504 = arith.mulf %82, %409 : vector<2x128xf32>
    %505 = arith.addf %503, %504 : vector<2x128xf32>
    %cst_162 = arith.constant 0.000000e+00 : f32
    %506 = vector.broadcast %cst_162 : f32 to vector<2x128xf32>
    %507 = arith.maximumf %505, %506 : vector<2x128xf32>
    %508 = arith.mulf %507, %507 : vector<2x128xf32>
    %cst_163 = arith.constant 1.000000e+00 : f32
    %509 = vector.broadcast %cst_163 : f32 to vector<2x128xf32>
    %510 = arith.subf %96, %509 : vector<2x128xf32>
    %511 = arith.mulf %508, %510 : vector<2x128xf32>
    %cst_164 = arith.constant 1.000000e+00 : f32
    %512 = vector.broadcast %cst_164 : f32 to vector<2x128xf32>
    %513 = arith.addf %511, %512 : vector<2x128xf32>
    %514 = arith.mulf %513, %513 : vector<2x128xf32>
    %cst_165 = arith.constant 12.566371 : f32
    %515 = vector.broadcast %cst_165 : f32 to vector<2x128xf32>
    %516 = arith.mulf %515, %514 : vector<2x128xf32>
    %517 = arith.mulf %493, %100 : vector<2x128xf32>
    %518 = arith.addf %517, %98 : vector<2x128xf32>
    %cst_166 = arith.constant 9.99999997E-7 : f32
    %519 = vector.broadcast %cst_166 : f32 to vector<2x128xf32>
    %520 = arith.addf %518, %519 : vector<2x128xf32>
    %521 = arith.mulf %516, %520 : vector<2x128xf32>
    %522 = arith.mulf %500, %100 : vector<2x128xf32>
    %523 = arith.addf %522, %98 : vector<2x128xf32>
    %cst_167 = arith.constant 9.99999997E-7 : f32
    %524 = vector.broadcast %cst_167 : f32 to vector<2x128xf32>
    %525 = arith.addf %523, %524 : vector<2x128xf32>
    %526 = arith.mulf %521, %525 : vector<2x128xf32>
    %527 = tpu.reciprocal %526 {approx = true} : vector<2x128xf32> -> vector<2x128xf32>
    %528 = arith.mulf %96, %527 : vector<2x128xf32>
    %529 = arith.mulf %493, %378 : vector<2x128xf32>
    %530 = arith.mulf %108, %422 : vector<2x128xf32>
    %531 = arith.addf %102, %530 : vector<2x128xf32>
    %532 = arith.mulf %528, %531 : vector<2x128xf32>
    %533 = arith.addf %117, %532 : vector<2x128xf32>
    %534 = arith.mulf %533, %529 : vector<2x128xf32>
    %535 = vector.broadcast %358 : f32 to vector<2x128xf32>
    %536 = arith.mulf %534, %535 : vector<2x128xf32>
    %537 = arith.mulf %110, %422 : vector<2x128xf32>
    %538 = arith.addf %104, %537 : vector<2x128xf32>
    %539 = arith.mulf %528, %538 : vector<2x128xf32>
    %540 = arith.addf %122, %539 : vector<2x128xf32>
    %541 = arith.mulf %540, %529 : vector<2x128xf32>
    %542 = vector.broadcast %359 : f32 to vector<2x128xf32>
    %543 = arith.mulf %541, %542 : vector<2x128xf32>
    %544 = arith.mulf %112, %422 : vector<2x128xf32>
    %545 = arith.addf %106, %544 : vector<2x128xf32>
    %546 = arith.mulf %528, %545 : vector<2x128xf32>
    %547 = arith.addf %127, %546 : vector<2x128xf32>
    %548 = arith.mulf %547, %529 : vector<2x128xf32>
    %549 = vector.broadcast %360 : f32 to vector<2x128xf32>
    %550 = arith.mulf %548, %549 : vector<2x128xf32>
    %cst_168 = arith.constant 9.99999974E-6 : f32
    %551 = vector.broadcast %cst_168 : f32 to vector<2x128xf32>
    %552 = arith.addf %472, %551 : vector<2x128xf32>
    %cst_169 = arith.constant 9.99999974E-6 : f32
    %553 = vector.broadcast %cst_169 : f32 to vector<2x128xf32>
    %554 = arith.addf %536, %553 : vector<2x128xf32>
    %555 = arith.divf %552, %554 : vector<2x128xf32>
    %556 = math.log %555 : vector<2x128xf32>
    %557 = math.absf %556 : vector<2x128xf32>
    %558 = arith.addf %351, %557 : vector<2x128xf32>
    %cst_170 = arith.constant 9.99999974E-6 : f32
    %559 = vector.broadcast %cst_170 : f32 to vector<2x128xf32>
    %560 = arith.addf %479, %559 : vector<2x128xf32>
    %cst_171 = arith.constant 9.99999974E-6 : f32
    %561 = vector.broadcast %cst_171 : f32 to vector<2x128xf32>
    %562 = arith.addf %543, %561 : vector<2x128xf32>
    %563 = arith.divf %560, %562 : vector<2x128xf32>
    %564 = math.log %563 : vector<2x128xf32>
    %565 = math.absf %564 : vector<2x128xf32>
    %566 = arith.addf %558, %565 : vector<2x128xf32>
    %cst_172 = arith.constant 9.99999974E-6 : f32
    %567 = vector.broadcast %cst_172 : f32 to vector<2x128xf32>
    %568 = arith.addf %486, %567 : vector<2x128xf32>
    %cst_173 = arith.constant 9.99999974E-6 : f32
    %569 = vector.broadcast %cst_173 : f32 to vector<2x128xf32>
    %570 = arith.addf %550, %569 : vector<2x128xf32>
    %571 = arith.divf %568, %570 : vector<2x128xf32>
    %572 = math.log %571 : vector<2x128xf32>
    %573 = math.absf %572 : vector<2x128xf32>
    %574 = arith.addf %566, %573 : vector<2x128xf32>
    %c18_174 = arith.constant 18 : index
    %575 = memref.load %arg2[%c18_174] : memref<81xf32, #tpu.memory_space<smem>>
    %c19_175 = arith.constant 19 : index
    %576 = memref.load %arg2[%c19_175] : memref<81xf32, #tpu.memory_space<smem>>
    %c20_176 = arith.constant 20 : index
    %577 = memref.load %arg2[%c20_176] : memref<81xf32, #tpu.memory_space<smem>>
    %c21_177 = arith.constant 21 : index
    %578 = memref.load %arg2[%c21_177] : memref<81xf32, #tpu.memory_space<smem>>
    %c22_178 = arith.constant 22 : index
    %579 = memref.load %arg2[%c22_178] : memref<81xf32, #tpu.memory_space<smem>>
    %c23_179 = arith.constant 23 : index
    %580 = memref.load %arg2[%c23_179] : memref<81xf32, #tpu.memory_space<smem>>
    %c24 = arith.constant 24 : index
    %581 = memref.load %arg2[%c24] : memref<81xf32, #tpu.memory_space<smem>>
    %c25 = arith.constant 25 : index
    %582 = memref.load %arg2[%c25] : memref<81xf32, #tpu.memory_space<smem>>
    %c26 = arith.constant 26 : index
    %583 = memref.load %arg2[%c26] : memref<81xf32, #tpu.memory_space<smem>>
    %584 = vector.broadcast %575 : f32 to vector<2x128xf32>
    %585 = arith.subf %584, %1 : vector<2x128xf32>
    %586 = vector.broadcast %576 : f32 to vector<2x128xf32>
    %587 = arith.subf %586, %3 : vector<2x128xf32>
    %588 = arith.mulf %585, %585 : vector<2x128xf32>
    %589 = arith.mulf %587, %587 : vector<2x128xf32>
    %590 = arith.addf %588, %589 : vector<2x128xf32>
    %591 = arith.mulf %577, %577 : f32
    %592 = vector.broadcast %591 : f32 to vector<2x128xf32>
    %593 = arith.addf %590, %592 : vector<2x128xf32>
    %cst_180 = arith.constant 9.99999996E-13 : f32
    %594 = vector.broadcast %cst_180 : f32 to vector<2x128xf32>
    %595 = arith.addf %593, %594 : vector<2x128xf32>
    %596 = math.rsqrt %595 : vector<2x128xf32>
    %597 = arith.mulf %585, %596 : vector<2x128xf32>
    %598 = arith.mulf %587, %596 : vector<2x128xf32>
    %599 = vector.broadcast %577 : f32 to vector<2x128xf32>
    %600 = arith.mulf %599, %596 : vector<2x128xf32>
    %601 = arith.mulf %596, %596 : vector<2x128xf32>
    %602 = vector.broadcast %578 : f32 to vector<2x128xf32>
    %603 = arith.subf %602, %1 : vector<2x128xf32>
    %604 = vector.broadcast %579 : f32 to vector<2x128xf32>
    %605 = arith.subf %604, %3 : vector<2x128xf32>
    %606 = arith.mulf %603, %603 : vector<2x128xf32>
    %607 = arith.mulf %605, %605 : vector<2x128xf32>
    %608 = arith.addf %606, %607 : vector<2x128xf32>
    %609 = arith.mulf %580, %580 : f32
    %610 = vector.broadcast %609 : f32 to vector<2x128xf32>
    %611 = arith.addf %608, %610 : vector<2x128xf32>
    %cst_181 = arith.constant 9.99999996E-13 : f32
    %612 = vector.broadcast %cst_181 : f32 to vector<2x128xf32>
    %613 = arith.addf %611, %612 : vector<2x128xf32>
    %614 = math.rsqrt %613 : vector<2x128xf32>
    %615 = arith.mulf %603, %614 : vector<2x128xf32>
    %616 = arith.mulf %605, %614 : vector<2x128xf32>
    %617 = vector.broadcast %580 : f32 to vector<2x128xf32>
    %618 = arith.mulf %617, %614 : vector<2x128xf32>
    %619 = arith.addf %597, %615 : vector<2x128xf32>
    %620 = arith.addf %598, %616 : vector<2x128xf32>
    %621 = arith.addf %600, %618 : vector<2x128xf32>
    %622 = arith.mulf %619, %619 : vector<2x128xf32>
    %623 = arith.mulf %620, %620 : vector<2x128xf32>
    %624 = arith.addf %622, %623 : vector<2x128xf32>
    %625 = arith.mulf %621, %621 : vector<2x128xf32>
    %626 = arith.addf %624, %625 : vector<2x128xf32>
    %cst_182 = arith.constant 9.99999996E-13 : f32
    %627 = vector.broadcast %cst_182 : f32 to vector<2x128xf32>
    %628 = arith.addf %626, %627 : vector<2x128xf32>
    %629 = math.rsqrt %628 : vector<2x128xf32>
    %630 = arith.mulf %619, %629 : vector<2x128xf32>
    %631 = arith.mulf %620, %629 : vector<2x128xf32>
    %632 = arith.mulf %621, %629 : vector<2x128xf32>
    %633 = arith.mulf %615, %630 : vector<2x128xf32>
    %634 = arith.mulf %616, %631 : vector<2x128xf32>
    %635 = arith.addf %633, %634 : vector<2x128xf32>
    %636 = arith.mulf %618, %632 : vector<2x128xf32>
    %637 = arith.addf %635, %636 : vector<2x128xf32>
    %cst_183 = arith.constant 9.99999974E-5 : f32
    %638 = vector.broadcast %cst_183 : f32 to vector<2x128xf32>
    %639 = arith.maximumf %637, %638 : vector<2x128xf32>
    %cst_184 = arith.constant -5.554730e+00 : f32
    %640 = vector.broadcast %cst_184 : f32 to vector<2x128xf32>
    %641 = arith.mulf %640, %639 : vector<2x128xf32>
    %cst_185 = arith.constant 6.983160e+00 : f32
    %642 = vector.broadcast %cst_185 : f32 to vector<2x128xf32>
    %643 = arith.subf %641, %642 : vector<2x128xf32>
    %644 = arith.mulf %643, %639 : vector<2x128xf32>
    %645 = math.exp2 %644 : vector<2x128xf32>
    %646 = arith.mulf %18, %597 : vector<2x128xf32>
    %647 = arith.mulf %19, %598 : vector<2x128xf32>
    %648 = arith.addf %646, %647 : vector<2x128xf32>
    %649 = arith.mulf %20, %600 : vector<2x128xf32>
    %650 = arith.addf %648, %649 : vector<2x128xf32>
    %cst_186 = arith.constant 0.000000e+00 : f32
    %651 = vector.broadcast %cst_186 : f32 to vector<2x128xf32>
    %652 = arith.maximumf %650, %651 : vector<2x128xf32>
    %653 = arith.mulf %18, %615 : vector<2x128xf32>
    %654 = arith.mulf %19, %616 : vector<2x128xf32>
    %655 = arith.addf %653, %654 : vector<2x128xf32>
    %656 = arith.mulf %20, %618 : vector<2x128xf32>
    %657 = arith.addf %655, %656 : vector<2x128xf32>
    %cst_187 = arith.constant 9.99999974E-5 : f32
    %658 = vector.broadcast %cst_187 : f32 to vector<2x128xf32>
    %659 = arith.maximumf %657, %658 : vector<2x128xf32>
    %660 = arith.mulf %18, %630 : vector<2x128xf32>
    %661 = arith.mulf %19, %631 : vector<2x128xf32>
    %662 = arith.addf %660, %661 : vector<2x128xf32>
    %663 = arith.mulf %20, %632 : vector<2x128xf32>
    %664 = arith.addf %662, %663 : vector<2x128xf32>
    %cst_188 = arith.constant 0.000000e+00 : f32
    %665 = vector.broadcast %cst_188 : f32 to vector<2x128xf32>
    %666 = arith.maximumf %664, %665 : vector<2x128xf32>
    %667 = arith.mulf %666, %666 : vector<2x128xf32>
    %cst_189 = arith.constant 1.000000e+00 : f32
    %668 = vector.broadcast %cst_189 : f32 to vector<2x128xf32>
    %669 = arith.subf %34, %668 : vector<2x128xf32>
    %670 = arith.mulf %667, %669 : vector<2x128xf32>
    %cst_190 = arith.constant 1.000000e+00 : f32
    %671 = vector.broadcast %cst_190 : f32 to vector<2x128xf32>
    %672 = arith.addf %670, %671 : vector<2x128xf32>
    %673 = arith.mulf %672, %672 : vector<2x128xf32>
    %cst_191 = arith.constant 12.566371 : f32
    %674 = vector.broadcast %cst_191 : f32 to vector<2x128xf32>
    %675 = arith.mulf %674, %673 : vector<2x128xf32>
    %676 = arith.mulf %652, %38 : vector<2x128xf32>
    %677 = arith.addf %676, %36 : vector<2x128xf32>
    %cst_192 = arith.constant 9.99999997E-7 : f32
    %678 = vector.broadcast %cst_192 : f32 to vector<2x128xf32>
    %679 = arith.addf %677, %678 : vector<2x128xf32>
    %680 = arith.mulf %675, %679 : vector<2x128xf32>
    %681 = arith.mulf %659, %38 : vector<2x128xf32>
    %682 = arith.addf %681, %36 : vector<2x128xf32>
    %cst_193 = arith.constant 9.99999997E-7 : f32
    %683 = vector.broadcast %cst_193 : f32 to vector<2x128xf32>
    %684 = arith.addf %682, %683 : vector<2x128xf32>
    %685 = arith.mulf %680, %684 : vector<2x128xf32>
    %686 = tpu.reciprocal %685 {approx = true} : vector<2x128xf32> -> vector<2x128xf32>
    %687 = arith.mulf %34, %686 : vector<2x128xf32>
    %688 = arith.mulf %652, %601 : vector<2x128xf32>
    %689 = arith.mulf %46, %645 : vector<2x128xf32>
    %690 = arith.addf %40, %689 : vector<2x128xf32>
    %691 = arith.mulf %687, %690 : vector<2x128xf32>
    %692 = arith.addf %55, %691 : vector<2x128xf32>
    %693 = arith.mulf %692, %688 : vector<2x128xf32>
    %694 = vector.broadcast %581 : f32 to vector<2x128xf32>
    %695 = arith.mulf %693, %694 : vector<2x128xf32>
    %696 = arith.mulf %48, %645 : vector<2x128xf32>
    %697 = arith.addf %42, %696 : vector<2x128xf32>
    %698 = arith.mulf %687, %697 : vector<2x128xf32>
    %699 = arith.addf %60, %698 : vector<2x128xf32>
    %700 = arith.mulf %699, %688 : vector<2x128xf32>
    %701 = vector.broadcast %582 : f32 to vector<2x128xf32>
    %702 = arith.mulf %700, %701 : vector<2x128xf32>
    %703 = arith.mulf %50, %645 : vector<2x128xf32>
    %704 = arith.addf %44, %703 : vector<2x128xf32>
    %705 = arith.mulf %687, %704 : vector<2x128xf32>
    %706 = arith.addf %65, %705 : vector<2x128xf32>
    %707 = arith.mulf %706, %688 : vector<2x128xf32>
    %708 = vector.broadcast %583 : f32 to vector<2x128xf32>
    %709 = arith.mulf %707, %708 : vector<2x128xf32>
    %710 = arith.mulf %80, %597 : vector<2x128xf32>
    %711 = arith.mulf %81, %598 : vector<2x128xf32>
    %712 = arith.addf %710, %711 : vector<2x128xf32>
    %713 = arith.mulf %82, %600 : vector<2x128xf32>
    %714 = arith.addf %712, %713 : vector<2x128xf32>
    %cst_194 = arith.constant 0.000000e+00 : f32
    %715 = vector.broadcast %cst_194 : f32 to vector<2x128xf32>
    %716 = arith.maximumf %714, %715 : vector<2x128xf32>
    %717 = arith.mulf %80, %615 : vector<2x128xf32>
    %718 = arith.mulf %81, %616 : vector<2x128xf32>
    %719 = arith.addf %717, %718 : vector<2x128xf32>
    %720 = arith.mulf %82, %618 : vector<2x128xf32>
    %721 = arith.addf %719, %720 : vector<2x128xf32>
    %cst_195 = arith.constant 9.99999974E-5 : f32
    %722 = vector.broadcast %cst_195 : f32 to vector<2x128xf32>
    %723 = arith.maximumf %721, %722 : vector<2x128xf32>
    %724 = arith.mulf %80, %630 : vector<2x128xf32>
    %725 = arith.mulf %81, %631 : vector<2x128xf32>
    %726 = arith.addf %724, %725 : vector<2x128xf32>
    %727 = arith.mulf %82, %632 : vector<2x128xf32>
    %728 = arith.addf %726, %727 : vector<2x128xf32>
    %cst_196 = arith.constant 0.000000e+00 : f32
    %729 = vector.broadcast %cst_196 : f32 to vector<2x128xf32>
    %730 = arith.maximumf %728, %729 : vector<2x128xf32>
    %731 = arith.mulf %730, %730 : vector<2x128xf32>
    %cst_197 = arith.constant 1.000000e+00 : f32
    %732 = vector.broadcast %cst_197 : f32 to vector<2x128xf32>
    %733 = arith.subf %96, %732 : vector<2x128xf32>
    %734 = arith.mulf %731, %733 : vector<2x128xf32>
    %cst_198 = arith.constant 1.000000e+00 : f32
    %735 = vector.broadcast %cst_198 : f32 to vector<2x128xf32>
    %736 = arith.addf %734, %735 : vector<2x128xf32>
    %737 = arith.mulf %736, %736 : vector<2x128xf32>
    %cst_199 = arith.constant 12.566371 : f32
    %738 = vector.broadcast %cst_199 : f32 to vector<2x128xf32>
    %739 = arith.mulf %738, %737 : vector<2x128xf32>
    %740 = arith.mulf %716, %100 : vector<2x128xf32>
    %741 = arith.addf %740, %98 : vector<2x128xf32>
    %cst_200 = arith.constant 9.99999997E-7 : f32
    %742 = vector.broadcast %cst_200 : f32 to vector<2x128xf32>
    %743 = arith.addf %741, %742 : vector<2x128xf32>
    %744 = arith.mulf %739, %743 : vector<2x128xf32>
    %745 = arith.mulf %723, %100 : vector<2x128xf32>
    %746 = arith.addf %745, %98 : vector<2x128xf32>
    %cst_201 = arith.constant 9.99999997E-7 : f32
    %747 = vector.broadcast %cst_201 : f32 to vector<2x128xf32>
    %748 = arith.addf %746, %747 : vector<2x128xf32>
    %749 = arith.mulf %744, %748 : vector<2x128xf32>
    %750 = tpu.reciprocal %749 {approx = true} : vector<2x128xf32> -> vector<2x128xf32>
    %751 = arith.mulf %96, %750 : vector<2x128xf32>
    %752 = arith.mulf %716, %601 : vector<2x128xf32>
    %753 = arith.mulf %108, %645 : vector<2x128xf32>
    %754 = arith.addf %102, %753 : vector<2x128xf32>
    %755 = arith.mulf %751, %754 : vector<2x128xf32>
    %756 = arith.addf %117, %755 : vector<2x128xf32>
    %757 = arith.mulf %756, %752 : vector<2x128xf32>
    %758 = vector.broadcast %581 : f32 to vector<2x128xf32>
    %759 = arith.mulf %757, %758 : vector<2x128xf32>
    %760 = arith.mulf %110, %645 : vector<2x128xf32>
    %761 = arith.addf %104, %760 : vector<2x128xf32>
    %762 = arith.mulf %751, %761 : vector<2x128xf32>
    %763 = arith.addf %122, %762 : vector<2x128xf32>
    %764 = arith.mulf %763, %752 : vector<2x128xf32>
    %765 = vector.broadcast %582 : f32 to vector<2x128xf32>
    %766 = arith.mulf %764, %765 : vector<2x128xf32>
    %767 = arith.mulf %112, %645 : vector<2x128xf32>
    %768 = arith.addf %106, %767 : vector<2x128xf32>
    %769 = arith.mulf %751, %768 : vector<2x128xf32>
    %770 = arith.addf %127, %769 : vector<2x128xf32>
    %771 = arith.mulf %770, %752 : vector<2x128xf32>
    %772 = vector.broadcast %583 : f32 to vector<2x128xf32>
    %773 = arith.mulf %771, %772 : vector<2x128xf32>
    %cst_202 = arith.constant 9.99999974E-6 : f32
    %774 = vector.broadcast %cst_202 : f32 to vector<2x128xf32>
    %775 = arith.addf %695, %774 : vector<2x128xf32>
    %cst_203 = arith.constant 9.99999974E-6 : f32
    %776 = vector.broadcast %cst_203 : f32 to vector<2x128xf32>
    %777 = arith.addf %759, %776 : vector<2x128xf32>
    %778 = arith.divf %775, %777 : vector<2x128xf32>
    %779 = math.log %778 : vector<2x128xf32>
    %780 = math.absf %779 : vector<2x128xf32>
    %781 = arith.addf %574, %780 : vector<2x128xf32>
    %cst_204 = arith.constant 9.99999974E-6 : f32
    %782 = vector.broadcast %cst_204 : f32 to vector<2x128xf32>
    %783 = arith.addf %702, %782 : vector<2x128xf32>
    %cst_205 = arith.constant 9.99999974E-6 : f32
    %784 = vector.broadcast %cst_205 : f32 to vector<2x128xf32>
    %785 = arith.addf %766, %784 : vector<2x128xf32>
    %786 = arith.divf %783, %785 : vector<2x128xf32>
    %787 = math.log %786 : vector<2x128xf32>
    %788 = math.absf %787 : vector<2x128xf32>
    %789 = arith.addf %781, %788 : vector<2x128xf32>
    %cst_206 = arith.constant 9.99999974E-6 : f32
    %790 = vector.broadcast %cst_206 : f32 to vector<2x128xf32>
    %791 = arith.addf %709, %790 : vector<2x128xf32>
    %cst_207 = arith.constant 9.99999974E-6 : f32
    %792 = vector.broadcast %cst_207 : f32 to vector<2x128xf32>
    %793 = arith.addf %773, %792 : vector<2x128xf32>
    %794 = arith.divf %791, %793 : vector<2x128xf32>
    %795 = math.log %794 : vector<2x128xf32>
    %796 = math.absf %795 : vector<2x128xf32>
    %797 = arith.addf %789, %796 : vector<2x128xf32>
    %c27 = arith.constant 27 : index
    %798 = memref.load %arg2[%c27] : memref<81xf32, #tpu.memory_space<smem>>
    %c28 = arith.constant 28 : index
    %799 = memref.load %arg2[%c28] : memref<81xf32, #tpu.memory_space<smem>>
    %c29 = arith.constant 29 : index
    %800 = memref.load %arg2[%c29] : memref<81xf32, #tpu.memory_space<smem>>
    %c30 = arith.constant 30 : index
    %801 = memref.load %arg2[%c30] : memref<81xf32, #tpu.memory_space<smem>>
    %c31 = arith.constant 31 : index
    %802 = memref.load %arg2[%c31] : memref<81xf32, #tpu.memory_space<smem>>
    %c32 = arith.constant 32 : index
    %803 = memref.load %arg2[%c32] : memref<81xf32, #tpu.memory_space<smem>>
    %c33 = arith.constant 33 : index
    %804 = memref.load %arg2[%c33] : memref<81xf32, #tpu.memory_space<smem>>
    %c34 = arith.constant 34 : index
    %805 = memref.load %arg2[%c34] : memref<81xf32, #tpu.memory_space<smem>>
    %c35 = arith.constant 35 : index
    %806 = memref.load %arg2[%c35] : memref<81xf32, #tpu.memory_space<smem>>
    %807 = vector.broadcast %798 : f32 to vector<2x128xf32>
    %808 = arith.subf %807, %1 : vector<2x128xf32>
    %809 = vector.broadcast %799 : f32 to vector<2x128xf32>
    %810 = arith.subf %809, %3 : vector<2x128xf32>
    %811 = arith.mulf %808, %808 : vector<2x128xf32>
    %812 = arith.mulf %810, %810 : vector<2x128xf32>
    %813 = arith.addf %811, %812 : vector<2x128xf32>
    %814 = arith.mulf %800, %800 : f32
    %815 = vector.broadcast %814 : f32 to vector<2x128xf32>
    %816 = arith.addf %813, %815 : vector<2x128xf32>
    %cst_208 = arith.constant 9.99999996E-13 : f32
    %817 = vector.broadcast %cst_208 : f32 to vector<2x128xf32>
    %818 = arith.addf %816, %817 : vector<2x128xf32>
    %819 = math.rsqrt %818 : vector<2x128xf32>
    %820 = arith.mulf %808, %819 : vector<2x128xf32>
    %821 = arith.mulf %810, %819 : vector<2x128xf32>
    %822 = vector.broadcast %800 : f32 to vector<2x128xf32>
    %823 = arith.mulf %822, %819 : vector<2x128xf32>
    %824 = arith.mulf %819, %819 : vector<2x128xf32>
    %825 = vector.broadcast %801 : f32 to vector<2x128xf32>
    %826 = arith.subf %825, %1 : vector<2x128xf32>
    %827 = vector.broadcast %802 : f32 to vector<2x128xf32>
    %828 = arith.subf %827, %3 : vector<2x128xf32>
    %829 = arith.mulf %826, %826 : vector<2x128xf32>
    %830 = arith.mulf %828, %828 : vector<2x128xf32>
    %831 = arith.addf %829, %830 : vector<2x128xf32>
    %832 = arith.mulf %803, %803 : f32
    %833 = vector.broadcast %832 : f32 to vector<2x128xf32>
    %834 = arith.addf %831, %833 : vector<2x128xf32>
    %cst_209 = arith.constant 9.99999996E-13 : f32
    %835 = vector.broadcast %cst_209 : f32 to vector<2x128xf32>
    %836 = arith.addf %834, %835 : vector<2x128xf32>
    %837 = math.rsqrt %836 : vector<2x128xf32>
    %838 = arith.mulf %826, %837 : vector<2x128xf32>
    %839 = arith.mulf %828, %837 : vector<2x128xf32>
    %840 = vector.broadcast %803 : f32 to vector<2x128xf32>
    %841 = arith.mulf %840, %837 : vector<2x128xf32>
    %842 = arith.addf %820, %838 : vector<2x128xf32>
    %843 = arith.addf %821, %839 : vector<2x128xf32>
    %844 = arith.addf %823, %841 : vector<2x128xf32>
    %845 = arith.mulf %842, %842 : vector<2x128xf32>
    %846 = arith.mulf %843, %843 : vector<2x128xf32>
    %847 = arith.addf %845, %846 : vector<2x128xf32>
    %848 = arith.mulf %844, %844 : vector<2x128xf32>
    %849 = arith.addf %847, %848 : vector<2x128xf32>
    %cst_210 = arith.constant 9.99999996E-13 : f32
    %850 = vector.broadcast %cst_210 : f32 to vector<2x128xf32>
    %851 = arith.addf %849, %850 : vector<2x128xf32>
    %852 = math.rsqrt %851 : vector<2x128xf32>
    %853 = arith.mulf %842, %852 : vector<2x128xf32>
    %854 = arith.mulf %843, %852 : vector<2x128xf32>
    %855 = arith.mulf %844, %852 : vector<2x128xf32>
    %856 = arith.mulf %838, %853 : vector<2x128xf32>
    %857 = arith.mulf %839, %854 : vector<2x128xf32>
    %858 = arith.addf %856, %857 : vector<2x128xf32>
    %859 = arith.mulf %841, %855 : vector<2x128xf32>
    %860 = arith.addf %858, %859 : vector<2x128xf32>
    %cst_211 = arith.constant 9.99999974E-5 : f32
    %861 = vector.broadcast %cst_211 : f32 to vector<2x128xf32>
    %862 = arith.maximumf %860, %861 : vector<2x128xf32>
    %cst_212 = arith.constant -5.554730e+00 : f32
    %863 = vector.broadcast %cst_212 : f32 to vector<2x128xf32>
    %864 = arith.mulf %863, %862 : vector<2x128xf32>
    %cst_213 = arith.constant 6.983160e+00 : f32
    %865 = vector.broadcast %cst_213 : f32 to vector<2x128xf32>
    %866 = arith.subf %864, %865 : vector<2x128xf32>
    %867 = arith.mulf %866, %862 : vector<2x128xf32>
    %868 = math.exp2 %867 : vector<2x128xf32>
    %869 = arith.mulf %18, %820 : vector<2x128xf32>
    %870 = arith.mulf %19, %821 : vector<2x128xf32>
    %871 = arith.addf %869, %870 : vector<2x128xf32>
    %872 = arith.mulf %20, %823 : vector<2x128xf32>
    %873 = arith.addf %871, %872 : vector<2x128xf32>
    %cst_214 = arith.constant 0.000000e+00 : f32
    %874 = vector.broadcast %cst_214 : f32 to vector<2x128xf32>
    %875 = arith.maximumf %873, %874 : vector<2x128xf32>
    %876 = arith.mulf %18, %838 : vector<2x128xf32>
    %877 = arith.mulf %19, %839 : vector<2x128xf32>
    %878 = arith.addf %876, %877 : vector<2x128xf32>
    %879 = arith.mulf %20, %841 : vector<2x128xf32>
    %880 = arith.addf %878, %879 : vector<2x128xf32>
    %cst_215 = arith.constant 9.99999974E-5 : f32
    %881 = vector.broadcast %cst_215 : f32 to vector<2x128xf32>
    %882 = arith.maximumf %880, %881 : vector<2x128xf32>
    %883 = arith.mulf %18, %853 : vector<2x128xf32>
    %884 = arith.mulf %19, %854 : vector<2x128xf32>
    %885 = arith.addf %883, %884 : vector<2x128xf32>
    %886 = arith.mulf %20, %855 : vector<2x128xf32>
    %887 = arith.addf %885, %886 : vector<2x128xf32>
    %cst_216 = arith.constant 0.000000e+00 : f32
    %888 = vector.broadcast %cst_216 : f32 to vector<2x128xf32>
    %889 = arith.maximumf %887, %888 : vector<2x128xf32>
    %890 = arith.mulf %889, %889 : vector<2x128xf32>
    %cst_217 = arith.constant 1.000000e+00 : f32
    %891 = vector.broadcast %cst_217 : f32 to vector<2x128xf32>
    %892 = arith.subf %34, %891 : vector<2x128xf32>
    %893 = arith.mulf %890, %892 : vector<2x128xf32>
    %cst_218 = arith.constant 1.000000e+00 : f32
    %894 = vector.broadcast %cst_218 : f32 to vector<2x128xf32>
    %895 = arith.addf %893, %894 : vector<2x128xf32>
    %896 = arith.mulf %895, %895 : vector<2x128xf32>
    %cst_219 = arith.constant 12.566371 : f32
    %897 = vector.broadcast %cst_219 : f32 to vector<2x128xf32>
    %898 = arith.mulf %897, %896 : vector<2x128xf32>
    %899 = arith.mulf %875, %38 : vector<2x128xf32>
    %900 = arith.addf %899, %36 : vector<2x128xf32>
    %cst_220 = arith.constant 9.99999997E-7 : f32
    %901 = vector.broadcast %cst_220 : f32 to vector<2x128xf32>
    %902 = arith.addf %900, %901 : vector<2x128xf32>
    %903 = arith.mulf %898, %902 : vector<2x128xf32>
    %904 = arith.mulf %882, %38 : vector<2x128xf32>
    %905 = arith.addf %904, %36 : vector<2x128xf32>
    %cst_221 = arith.constant 9.99999997E-7 : f32
    %906 = vector.broadcast %cst_221 : f32 to vector<2x128xf32>
    %907 = arith.addf %905, %906 : vector<2x128xf32>
    %908 = arith.mulf %903, %907 : vector<2x128xf32>
    %909 = tpu.reciprocal %908 {approx = true} : vector<2x128xf32> -> vector<2x128xf32>
    %910 = arith.mulf %34, %909 : vector<2x128xf32>
    %911 = arith.mulf %875, %824 : vector<2x128xf32>
    %912 = arith.mulf %46, %868 : vector<2x128xf32>
    %913 = arith.addf %40, %912 : vector<2x128xf32>
    %914 = arith.mulf %910, %913 : vector<2x128xf32>
    %915 = arith.addf %55, %914 : vector<2x128xf32>
    %916 = arith.mulf %915, %911 : vector<2x128xf32>
    %917 = vector.broadcast %804 : f32 to vector<2x128xf32>
    %918 = arith.mulf %916, %917 : vector<2x128xf32>
    %919 = arith.mulf %48, %868 : vector<2x128xf32>
    %920 = arith.addf %42, %919 : vector<2x128xf32>
    %921 = arith.mulf %910, %920 : vector<2x128xf32>
    %922 = arith.addf %60, %921 : vector<2x128xf32>
    %923 = arith.mulf %922, %911 : vector<2x128xf32>
    %924 = vector.broadcast %805 : f32 to vector<2x128xf32>
    %925 = arith.mulf %923, %924 : vector<2x128xf32>
    %926 = arith.mulf %50, %868 : vector<2x128xf32>
    %927 = arith.addf %44, %926 : vector<2x128xf32>
    %928 = arith.mulf %910, %927 : vector<2x128xf32>
    %929 = arith.addf %65, %928 : vector<2x128xf32>
    %930 = arith.mulf %929, %911 : vector<2x128xf32>
    %931 = vector.broadcast %806 : f32 to vector<2x128xf32>
    %932 = arith.mulf %930, %931 : vector<2x128xf32>
    %933 = arith.mulf %80, %820 : vector<2x128xf32>
    %934 = arith.mulf %81, %821 : vector<2x128xf32>
    %935 = arith.addf %933, %934 : vector<2x128xf32>
    %936 = arith.mulf %82, %823 : vector<2x128xf32>
    %937 = arith.addf %935, %936 : vector<2x128xf32>
    %cst_222 = arith.constant 0.000000e+00 : f32
    %938 = vector.broadcast %cst_222 : f32 to vector<2x128xf32>
    %939 = arith.maximumf %937, %938 : vector<2x128xf32>
    %940 = arith.mulf %80, %838 : vector<2x128xf32>
    %941 = arith.mulf %81, %839 : vector<2x128xf32>
    %942 = arith.addf %940, %941 : vector<2x128xf32>
    %943 = arith.mulf %82, %841 : vector<2x128xf32>
    %944 = arith.addf %942, %943 : vector<2x128xf32>
    %cst_223 = arith.constant 9.99999974E-5 : f32
    %945 = vector.broadcast %cst_223 : f32 to vector<2x128xf32>
    %946 = arith.maximumf %944, %945 : vector<2x128xf32>
    %947 = arith.mulf %80, %853 : vector<2x128xf32>
    %948 = arith.mulf %81, %854 : vector<2x128xf32>
    %949 = arith.addf %947, %948 : vector<2x128xf32>
    %950 = arith.mulf %82, %855 : vector<2x128xf32>
    %951 = arith.addf %949, %950 : vector<2x128xf32>
    %cst_224 = arith.constant 0.000000e+00 : f32
    %952 = vector.broadcast %cst_224 : f32 to vector<2x128xf32>
    %953 = arith.maximumf %951, %952 : vector<2x128xf32>
    %954 = arith.mulf %953, %953 : vector<2x128xf32>
    %cst_225 = arith.constant 1.000000e+00 : f32
    %955 = vector.broadcast %cst_225 : f32 to vector<2x128xf32>
    %956 = arith.subf %96, %955 : vector<2x128xf32>
    %957 = arith.mulf %954, %956 : vector<2x128xf32>
    %cst_226 = arith.constant 1.000000e+00 : f32
    %958 = vector.broadcast %cst_226 : f32 to vector<2x128xf32>
    %959 = arith.addf %957, %958 : vector<2x128xf32>
    %960 = arith.mulf %959, %959 : vector<2x128xf32>
    %cst_227 = arith.constant 12.566371 : f32
    %961 = vector.broadcast %cst_227 : f32 to vector<2x128xf32>
    %962 = arith.mulf %961, %960 : vector<2x128xf32>
    %963 = arith.mulf %939, %100 : vector<2x128xf32>
    %964 = arith.addf %963, %98 : vector<2x128xf32>
    %cst_228 = arith.constant 9.99999997E-7 : f32
    %965 = vector.broadcast %cst_228 : f32 to vector<2x128xf32>
    %966 = arith.addf %964, %965 : vector<2x128xf32>
    %967 = arith.mulf %962, %966 : vector<2x128xf32>
    %968 = arith.mulf %946, %100 : vector<2x128xf32>
    %969 = arith.addf %968, %98 : vector<2x128xf32>
    %cst_229 = arith.constant 9.99999997E-7 : f32
    %970 = vector.broadcast %cst_229 : f32 to vector<2x128xf32>
    %971 = arith.addf %969, %970 : vector<2x128xf32>
    %972 = arith.mulf %967, %971 : vector<2x128xf32>
    %973 = tpu.reciprocal %972 {approx = true} : vector<2x128xf32> -> vector<2x128xf32>
    %974 = arith.mulf %96, %973 : vector<2x128xf32>
    %975 = arith.mulf %939, %824 : vector<2x128xf32>
    %976 = arith.mulf %108, %868 : vector<2x128xf32>
    %977 = arith.addf %102, %976 : vector<2x128xf32>
    %978 = arith.mulf %974, %977 : vector<2x128xf32>
    %979 = arith.addf %117, %978 : vector<2x128xf32>
    %980 = arith.mulf %979, %975 : vector<2x128xf32>
    %981 = vector.broadcast %804 : f32 to vector<2x128xf32>
    %982 = arith.mulf %980, %981 : vector<2x128xf32>
    %983 = arith.mulf %110, %868 : vector<2x128xf32>
    %984 = arith.addf %104, %983 : vector<2x128xf32>
    %985 = arith.mulf %974, %984 : vector<2x128xf32>
    %986 = arith.addf %122, %985 : vector<2x128xf32>
    %987 = arith.mulf %986, %975 : vector<2x128xf32>
    %988 = vector.broadcast %805 : f32 to vector<2x128xf32>
    %989 = arith.mulf %987, %988 : vector<2x128xf32>
    %990 = arith.mulf %112, %868 : vector<2x128xf32>
    %991 = arith.addf %106, %990 : vector<2x128xf32>
    %992 = arith.mulf %974, %991 : vector<2x128xf32>
    %993 = arith.addf %127, %992 : vector<2x128xf32>
    %994 = arith.mulf %993, %975 : vector<2x128xf32>
    %995 = vector.broadcast %806 : f32 to vector<2x128xf32>
    %996 = arith.mulf %994, %995 : vector<2x128xf32>
    %cst_230 = arith.constant 9.99999974E-6 : f32
    %997 = vector.broadcast %cst_230 : f32 to vector<2x128xf32>
    %998 = arith.addf %918, %997 : vector<2x128xf32>
    %cst_231 = arith.constant 9.99999974E-6 : f32
    %999 = vector.broadcast %cst_231 : f32 to vector<2x128xf32>
    %1000 = arith.addf %982, %999 : vector<2x128xf32>
    %1001 = arith.divf %998, %1000 : vector<2x128xf32>
    %1002 = math.log %1001 : vector<2x128xf32>
    %1003 = math.absf %1002 : vector<2x128xf32>
    %1004 = arith.addf %797, %1003 : vector<2x128xf32>
    %cst_232 = arith.constant 9.99999974E-6 : f32
    %1005 = vector.broadcast %cst_232 : f32 to vector<2x128xf32>
    %1006 = arith.addf %925, %1005 : vector<2x128xf32>
    %cst_233 = arith.constant 9.99999974E-6 : f32
    %1007 = vector.broadcast %cst_233 : f32 to vector<2x128xf32>
    %1008 = arith.addf %989, %1007 : vector<2x128xf32>
    %1009 = arith.divf %1006, %1008 : vector<2x128xf32>
    %1010 = math.log %1009 : vector<2x128xf32>
    %1011 = math.absf %1010 : vector<2x128xf32>
    %1012 = arith.addf %1004, %1011 : vector<2x128xf32>
    %cst_234 = arith.constant 9.99999974E-6 : f32
    %1013 = vector.broadcast %cst_234 : f32 to vector<2x128xf32>
    %1014 = arith.addf %932, %1013 : vector<2x128xf32>
    %cst_235 = arith.constant 9.99999974E-6 : f32
    %1015 = vector.broadcast %cst_235 : f32 to vector<2x128xf32>
    %1016 = arith.addf %996, %1015 : vector<2x128xf32>
    %1017 = arith.divf %1014, %1016 : vector<2x128xf32>
    %1018 = math.log %1017 : vector<2x128xf32>
    %1019 = math.absf %1018 : vector<2x128xf32>
    %1020 = arith.addf %1012, %1019 : vector<2x128xf32>
    %c36 = arith.constant 36 : index
    %1021 = memref.load %arg2[%c36] : memref<81xf32, #tpu.memory_space<smem>>
    %c37 = arith.constant 37 : index
    %1022 = memref.load %arg2[%c37] : memref<81xf32, #tpu.memory_space<smem>>
    %c38 = arith.constant 38 : index
    %1023 = memref.load %arg2[%c38] : memref<81xf32, #tpu.memory_space<smem>>
    %c39 = arith.constant 39 : index
    %1024 = memref.load %arg2[%c39] : memref<81xf32, #tpu.memory_space<smem>>
    %c40 = arith.constant 40 : index
    %1025 = memref.load %arg2[%c40] : memref<81xf32, #tpu.memory_space<smem>>
    %c41 = arith.constant 41 : index
    %1026 = memref.load %arg2[%c41] : memref<81xf32, #tpu.memory_space<smem>>
    %c42 = arith.constant 42 : index
    %1027 = memref.load %arg2[%c42] : memref<81xf32, #tpu.memory_space<smem>>
    %c43 = arith.constant 43 : index
    %1028 = memref.load %arg2[%c43] : memref<81xf32, #tpu.memory_space<smem>>
    %c44 = arith.constant 44 : index
    %1029 = memref.load %arg2[%c44] : memref<81xf32, #tpu.memory_space<smem>>
    %1030 = vector.broadcast %1021 : f32 to vector<2x128xf32>
    %1031 = arith.subf %1030, %1 : vector<2x128xf32>
    %1032 = vector.broadcast %1022 : f32 to vector<2x128xf32>
    %1033 = arith.subf %1032, %3 : vector<2x128xf32>
    %1034 = arith.mulf %1031, %1031 : vector<2x128xf32>
    %1035 = arith.mulf %1033, %1033 : vector<2x128xf32>
    %1036 = arith.addf %1034, %1035 : vector<2x128xf32>
    %1037 = arith.mulf %1023, %1023 : f32
    %1038 = vector.broadcast %1037 : f32 to vector<2x128xf32>
    %1039 = arith.addf %1036, %1038 : vector<2x128xf32>
    %cst_236 = arith.constant 9.99999996E-13 : f32
    %1040 = vector.broadcast %cst_236 : f32 to vector<2x128xf32>
    %1041 = arith.addf %1039, %1040 : vector<2x128xf32>
    %1042 = math.rsqrt %1041 : vector<2x128xf32>
    %1043 = arith.mulf %1031, %1042 : vector<2x128xf32>
    %1044 = arith.mulf %1033, %1042 : vector<2x128xf32>
    %1045 = vector.broadcast %1023 : f32 to vector<2x128xf32>
    %1046 = arith.mulf %1045, %1042 : vector<2x128xf32>
    %1047 = arith.mulf %1042, %1042 : vector<2x128xf32>
    %1048 = vector.broadcast %1024 : f32 to vector<2x128xf32>
    %1049 = arith.subf %1048, %1 : vector<2x128xf32>
    %1050 = vector.broadcast %1025 : f32 to vector<2x128xf32>
    %1051 = arith.subf %1050, %3 : vector<2x128xf32>
    %1052 = arith.mulf %1049, %1049 : vector<2x128xf32>
    %1053 = arith.mulf %1051, %1051 : vector<2x128xf32>
    %1054 = arith.addf %1052, %1053 : vector<2x128xf32>
    %1055 = arith.mulf %1026, %1026 : f32
    %1056 = vector.broadcast %1055 : f32 to vector<2x128xf32>
    %1057 = arith.addf %1054, %1056 : vector<2x128xf32>
    %cst_237 = arith.constant 9.99999996E-13 : f32
    %1058 = vector.broadcast %cst_237 : f32 to vector<2x128xf32>
    %1059 = arith.addf %1057, %1058 : vector<2x128xf32>
    %1060 = math.rsqrt %1059 : vector<2x128xf32>
    %1061 = arith.mulf %1049, %1060 : vector<2x128xf32>
    %1062 = arith.mulf %1051, %1060 : vector<2x128xf32>
    %1063 = vector.broadcast %1026 : f32 to vector<2x128xf32>
    %1064 = arith.mulf %1063, %1060 : vector<2x128xf32>
    %1065 = arith.addf %1043, %1061 : vector<2x128xf32>
    %1066 = arith.addf %1044, %1062 : vector<2x128xf32>
    %1067 = arith.addf %1046, %1064 : vector<2x128xf32>
    %1068 = arith.mulf %1065, %1065 : vector<2x128xf32>
    %1069 = arith.mulf %1066, %1066 : vector<2x128xf32>
    %1070 = arith.addf %1068, %1069 : vector<2x128xf32>
    %1071 = arith.mulf %1067, %1067 : vector<2x128xf32>
    %1072 = arith.addf %1070, %1071 : vector<2x128xf32>
    %cst_238 = arith.constant 9.99999996E-13 : f32
    %1073 = vector.broadcast %cst_238 : f32 to vector<2x128xf32>
    %1074 = arith.addf %1072, %1073 : vector<2x128xf32>
    %1075 = math.rsqrt %1074 : vector<2x128xf32>
    %1076 = arith.mulf %1065, %1075 : vector<2x128xf32>
    %1077 = arith.mulf %1066, %1075 : vector<2x128xf32>
    %1078 = arith.mulf %1067, %1075 : vector<2x128xf32>
    %1079 = arith.mulf %1061, %1076 : vector<2x128xf32>
    %1080 = arith.mulf %1062, %1077 : vector<2x128xf32>
    %1081 = arith.addf %1079, %1080 : vector<2x128xf32>
    %1082 = arith.mulf %1064, %1078 : vector<2x128xf32>
    %1083 = arith.addf %1081, %1082 : vector<2x128xf32>
    %cst_239 = arith.constant 9.99999974E-5 : f32
    %1084 = vector.broadcast %cst_239 : f32 to vector<2x128xf32>
    %1085 = arith.maximumf %1083, %1084 : vector<2x128xf32>
    %cst_240 = arith.constant -5.554730e+00 : f32
    %1086 = vector.broadcast %cst_240 : f32 to vector<2x128xf32>
    %1087 = arith.mulf %1086, %1085 : vector<2x128xf32>
    %cst_241 = arith.constant 6.983160e+00 : f32
    %1088 = vector.broadcast %cst_241 : f32 to vector<2x128xf32>
    %1089 = arith.subf %1087, %1088 : vector<2x128xf32>
    %1090 = arith.mulf %1089, %1085 : vector<2x128xf32>
    %1091 = math.exp2 %1090 : vector<2x128xf32>
    %1092 = arith.mulf %18, %1043 : vector<2x128xf32>
    %1093 = arith.mulf %19, %1044 : vector<2x128xf32>
    %1094 = arith.addf %1092, %1093 : vector<2x128xf32>
    %1095 = arith.mulf %20, %1046 : vector<2x128xf32>
    %1096 = arith.addf %1094, %1095 : vector<2x128xf32>
    %cst_242 = arith.constant 0.000000e+00 : f32
    %1097 = vector.broadcast %cst_242 : f32 to vector<2x128xf32>
    %1098 = arith.maximumf %1096, %1097 : vector<2x128xf32>
    %1099 = arith.mulf %18, %1061 : vector<2x128xf32>
    %1100 = arith.mulf %19, %1062 : vector<2x128xf32>
    %1101 = arith.addf %1099, %1100 : vector<2x128xf32>
    %1102 = arith.mulf %20, %1064 : vector<2x128xf32>
    %1103 = arith.addf %1101, %1102 : vector<2x128xf32>
    %cst_243 = arith.constant 9.99999974E-5 : f32
    %1104 = vector.broadcast %cst_243 : f32 to vector<2x128xf32>
    %1105 = arith.maximumf %1103, %1104 : vector<2x128xf32>
    %1106 = arith.mulf %18, %1076 : vector<2x128xf32>
    %1107 = arith.mulf %19, %1077 : vector<2x128xf32>
    %1108 = arith.addf %1106, %1107 : vector<2x128xf32>
    %1109 = arith.mulf %20, %1078 : vector<2x128xf32>
    %1110 = arith.addf %1108, %1109 : vector<2x128xf32>
    %cst_244 = arith.constant 0.000000e+00 : f32
    %1111 = vector.broadcast %cst_244 : f32 to vector<2x128xf32>
    %1112 = arith.maximumf %1110, %1111 : vector<2x128xf32>
    %1113 = arith.mulf %1112, %1112 : vector<2x128xf32>
    %cst_245 = arith.constant 1.000000e+00 : f32
    %1114 = vector.broadcast %cst_245 : f32 to vector<2x128xf32>
    %1115 = arith.subf %34, %1114 : vector<2x128xf32>
    %1116 = arith.mulf %1113, %1115 : vector<2x128xf32>
    %cst_246 = arith.constant 1.000000e+00 : f32
    %1117 = vector.broadcast %cst_246 : f32 to vector<2x128xf32>
    %1118 = arith.addf %1116, %1117 : vector<2x128xf32>
    %1119 = arith.mulf %1118, %1118 : vector<2x128xf32>
    %cst_247 = arith.constant 12.566371 : f32
    %1120 = vector.broadcast %cst_247 : f32 to vector<2x128xf32>
    %1121 = arith.mulf %1120, %1119 : vector<2x128xf32>
    %1122 = arith.mulf %1098, %38 : vector<2x128xf32>
    %1123 = arith.addf %1122, %36 : vector<2x128xf32>
    %cst_248 = arith.constant 9.99999997E-7 : f32
    %1124 = vector.broadcast %cst_248 : f32 to vector<2x128xf32>
    %1125 = arith.addf %1123, %1124 : vector<2x128xf32>
    %1126 = arith.mulf %1121, %1125 : vector<2x128xf32>
    %1127 = arith.mulf %1105, %38 : vector<2x128xf32>
    %1128 = arith.addf %1127, %36 : vector<2x128xf32>
    %cst_249 = arith.constant 9.99999997E-7 : f32
    %1129 = vector.broadcast %cst_249 : f32 to vector<2x128xf32>
    %1130 = arith.addf %1128, %1129 : vector<2x128xf32>
    %1131 = arith.mulf %1126, %1130 : vector<2x128xf32>
    %1132 = tpu.reciprocal %1131 {approx = true} : vector<2x128xf32> -> vector<2x128xf32>
    %1133 = arith.mulf %34, %1132 : vector<2x128xf32>
    %1134 = arith.mulf %1098, %1047 : vector<2x128xf32>
    %1135 = arith.mulf %46, %1091 : vector<2x128xf32>
    %1136 = arith.addf %40, %1135 : vector<2x128xf32>
    %1137 = arith.mulf %1133, %1136 : vector<2x128xf32>
    %1138 = arith.addf %55, %1137 : vector<2x128xf32>
    %1139 = arith.mulf %1138, %1134 : vector<2x128xf32>
    %1140 = vector.broadcast %1027 : f32 to vector<2x128xf32>
    %1141 = arith.mulf %1139, %1140 : vector<2x128xf32>
    %1142 = arith.mulf %48, %1091 : vector<2x128xf32>
    %1143 = arith.addf %42, %1142 : vector<2x128xf32>
    %1144 = arith.mulf %1133, %1143 : vector<2x128xf32>
    %1145 = arith.addf %60, %1144 : vector<2x128xf32>
    %1146 = arith.mulf %1145, %1134 : vector<2x128xf32>
    %1147 = vector.broadcast %1028 : f32 to vector<2x128xf32>
    %1148 = arith.mulf %1146, %1147 : vector<2x128xf32>
    %1149 = arith.mulf %50, %1091 : vector<2x128xf32>
    %1150 = arith.addf %44, %1149 : vector<2x128xf32>
    %1151 = arith.mulf %1133, %1150 : vector<2x128xf32>
    %1152 = arith.addf %65, %1151 : vector<2x128xf32>
    %1153 = arith.mulf %1152, %1134 : vector<2x128xf32>
    %1154 = vector.broadcast %1029 : f32 to vector<2x128xf32>
    %1155 = arith.mulf %1153, %1154 : vector<2x128xf32>
    %1156 = arith.mulf %80, %1043 : vector<2x128xf32>
    %1157 = arith.mulf %81, %1044 : vector<2x128xf32>
    %1158 = arith.addf %1156, %1157 : vector<2x128xf32>
    %1159 = arith.mulf %82, %1046 : vector<2x128xf32>
    %1160 = arith.addf %1158, %1159 : vector<2x128xf32>
    %cst_250 = arith.constant 0.000000e+00 : f32
    %1161 = vector.broadcast %cst_250 : f32 to vector<2x128xf32>
    %1162 = arith.maximumf %1160, %1161 : vector<2x128xf32>
    %1163 = arith.mulf %80, %1061 : vector<2x128xf32>
    %1164 = arith.mulf %81, %1062 : vector<2x128xf32>
    %1165 = arith.addf %1163, %1164 : vector<2x128xf32>
    %1166 = arith.mulf %82, %1064 : vector<2x128xf32>
    %1167 = arith.addf %1165, %1166 : vector<2x128xf32>
    %cst_251 = arith.constant 9.99999974E-5 : f32
    %1168 = vector.broadcast %cst_251 : f32 to vector<2x128xf32>
    %1169 = arith.maximumf %1167, %1168 : vector<2x128xf32>
    %1170 = arith.mulf %80, %1076 : vector<2x128xf32>
    %1171 = arith.mulf %81, %1077 : vector<2x128xf32>
    %1172 = arith.addf %1170, %1171 : vector<2x128xf32>
    %1173 = arith.mulf %82, %1078 : vector<2x128xf32>
    %1174 = arith.addf %1172, %1173 : vector<2x128xf32>
    %cst_252 = arith.constant 0.000000e+00 : f32
    %1175 = vector.broadcast %cst_252 : f32 to vector<2x128xf32>
    %1176 = arith.maximumf %1174, %1175 : vector<2x128xf32>
    %1177 = arith.mulf %1176, %1176 : vector<2x128xf32>
    %cst_253 = arith.constant 1.000000e+00 : f32
    %1178 = vector.broadcast %cst_253 : f32 to vector<2x128xf32>
    %1179 = arith.subf %96, %1178 : vector<2x128xf32>
    %1180 = arith.mulf %1177, %1179 : vector<2x128xf32>
    %cst_254 = arith.constant 1.000000e+00 : f32
    %1181 = vector.broadcast %cst_254 : f32 to vector<2x128xf32>
    %1182 = arith.addf %1180, %1181 : vector<2x128xf32>
    %1183 = arith.mulf %1182, %1182 : vector<2x128xf32>
    %cst_255 = arith.constant 12.566371 : f32
    %1184 = vector.broadcast %cst_255 : f32 to vector<2x128xf32>
    %1185 = arith.mulf %1184, %1183 : vector<2x128xf32>
    %1186 = arith.mulf %1162, %100 : vector<2x128xf32>
    %1187 = arith.addf %1186, %98 : vector<2x128xf32>
    %cst_256 = arith.constant 9.99999997E-7 : f32
    %1188 = vector.broadcast %cst_256 : f32 to vector<2x128xf32>
    %1189 = arith.addf %1187, %1188 : vector<2x128xf32>
    %1190 = arith.mulf %1185, %1189 : vector<2x128xf32>
    %1191 = arith.mulf %1169, %100 : vector<2x128xf32>
    %1192 = arith.addf %1191, %98 : vector<2x128xf32>
    %cst_257 = arith.constant 9.99999997E-7 : f32
    %1193 = vector.broadcast %cst_257 : f32 to vector<2x128xf32>
    %1194 = arith.addf %1192, %1193 : vector<2x128xf32>
    %1195 = arith.mulf %1190, %1194 : vector<2x128xf32>
    %1196 = tpu.reciprocal %1195 {approx = true} : vector<2x128xf32> -> vector<2x128xf32>
    %1197 = arith.mulf %96, %1196 : vector<2x128xf32>
    %1198 = arith.mulf %1162, %1047 : vector<2x128xf32>
    %1199 = arith.mulf %108, %1091 : vector<2x128xf32>
    %1200 = arith.addf %102, %1199 : vector<2x128xf32>
    %1201 = arith.mulf %1197, %1200 : vector<2x128xf32>
    %1202 = arith.addf %117, %1201 : vector<2x128xf32>
    %1203 = arith.mulf %1202, %1198 : vector<2x128xf32>
    %1204 = vector.broadcast %1027 : f32 to vector<2x128xf32>
    %1205 = arith.mulf %1203, %1204 : vector<2x128xf32>
    %1206 = arith.mulf %110, %1091 : vector<2x128xf32>
    %1207 = arith.addf %104, %1206 : vector<2x128xf32>
    %1208 = arith.mulf %1197, %1207 : vector<2x128xf32>
    %1209 = arith.addf %122, %1208 : vector<2x128xf32>
    %1210 = arith.mulf %1209, %1198 : vector<2x128xf32>
    %1211 = vector.broadcast %1028 : f32 to vector<2x128xf32>
    %1212 = arith.mulf %1210, %1211 : vector<2x128xf32>
    %1213 = arith.mulf %112, %1091 : vector<2x128xf32>
    %1214 = arith.addf %106, %1213 : vector<2x128xf32>
    %1215 = arith.mulf %1197, %1214 : vector<2x128xf32>
    %1216 = arith.addf %127, %1215 : vector<2x128xf32>
    %1217 = arith.mulf %1216, %1198 : vector<2x128xf32>
    %1218 = vector.broadcast %1029 : f32 to vector<2x128xf32>
    %1219 = arith.mulf %1217, %1218 : vector<2x128xf32>
    %cst_258 = arith.constant 9.99999974E-6 : f32
    %1220 = vector.broadcast %cst_258 : f32 to vector<2x128xf32>
    %1221 = arith.addf %1141, %1220 : vector<2x128xf32>
    %cst_259 = arith.constant 9.99999974E-6 : f32
    %1222 = vector.broadcast %cst_259 : f32 to vector<2x128xf32>
    %1223 = arith.addf %1205, %1222 : vector<2x128xf32>
    %1224 = arith.divf %1221, %1223 : vector<2x128xf32>
    %1225 = math.log %1224 : vector<2x128xf32>
    %1226 = math.absf %1225 : vector<2x128xf32>
    %1227 = arith.addf %1020, %1226 : vector<2x128xf32>
    %cst_260 = arith.constant 9.99999974E-6 : f32
    %1228 = vector.broadcast %cst_260 : f32 to vector<2x128xf32>
    %1229 = arith.addf %1148, %1228 : vector<2x128xf32>
    %cst_261 = arith.constant 9.99999974E-6 : f32
    %1230 = vector.broadcast %cst_261 : f32 to vector<2x128xf32>
    %1231 = arith.addf %1212, %1230 : vector<2x128xf32>
    %1232 = arith.divf %1229, %1231 : vector<2x128xf32>
    %1233 = math.log %1232 : vector<2x128xf32>
    %1234 = math.absf %1233 : vector<2x128xf32>
    %1235 = arith.addf %1227, %1234 : vector<2x128xf32>
    %cst_262 = arith.constant 9.99999974E-6 : f32
    %1236 = vector.broadcast %cst_262 : f32 to vector<2x128xf32>
    %1237 = arith.addf %1155, %1236 : vector<2x128xf32>
    %cst_263 = arith.constant 9.99999974E-6 : f32
    %1238 = vector.broadcast %cst_263 : f32 to vector<2x128xf32>
    %1239 = arith.addf %1219, %1238 : vector<2x128xf32>
    %1240 = arith.divf %1237, %1239 : vector<2x128xf32>
    %1241 = math.log %1240 : vector<2x128xf32>
    %1242 = math.absf %1241 : vector<2x128xf32>
    %1243 = arith.addf %1235, %1242 : vector<2x128xf32>
    %c45 = arith.constant 45 : index
    %1244 = memref.load %arg2[%c45] : memref<81xf32, #tpu.memory_space<smem>>
    %c46 = arith.constant 46 : index
    %1245 = memref.load %arg2[%c46] : memref<81xf32, #tpu.memory_space<smem>>
    %c47 = arith.constant 47 : index
    %1246 = memref.load %arg2[%c47] : memref<81xf32, #tpu.memory_space<smem>>
    %c48 = arith.constant 48 : index
    %1247 = memref.load %arg2[%c48] : memref<81xf32, #tpu.memory_space<smem>>
    %c49 = arith.constant 49 : index
    %1248 = memref.load %arg2[%c49] : memref<81xf32, #tpu.memory_space<smem>>
    %c50 = arith.constant 50 : index
    %1249 = memref.load %arg2[%c50] : memref<81xf32, #tpu.memory_space<smem>>
    %c51 = arith.constant 51 : index
    %1250 = memref.load %arg2[%c51] : memref<81xf32, #tpu.memory_space<smem>>
    %c52 = arith.constant 52 : index
    %1251 = memref.load %arg2[%c52] : memref<81xf32, #tpu.memory_space<smem>>
    %c53 = arith.constant 53 : index
    %1252 = memref.load %arg2[%c53] : memref<81xf32, #tpu.memory_space<smem>>
    %1253 = vector.broadcast %1244 : f32 to vector<2x128xf32>
    %1254 = arith.subf %1253, %1 : vector<2x128xf32>
    %1255 = vector.broadcast %1245 : f32 to vector<2x128xf32>
    %1256 = arith.subf %1255, %3 : vector<2x128xf32>
    %1257 = arith.mulf %1254, %1254 : vector<2x128xf32>
    %1258 = arith.mulf %1256, %1256 : vector<2x128xf32>
    %1259 = arith.addf %1257, %1258 : vector<2x128xf32>
    %1260 = arith.mulf %1246, %1246 : f32
    %1261 = vector.broadcast %1260 : f32 to vector<2x128xf32>
    %1262 = arith.addf %1259, %1261 : vector<2x128xf32>
    %cst_264 = arith.constant 9.99999996E-13 : f32
    %1263 = vector.broadcast %cst_264 : f32 to vector<2x128xf32>
    %1264 = arith.addf %1262, %1263 : vector<2x128xf32>
    %1265 = math.rsqrt %1264 : vector<2x128xf32>
    %1266 = arith.mulf %1254, %1265 : vector<2x128xf32>
    %1267 = arith.mulf %1256, %1265 : vector<2x128xf32>
    %1268 = vector.broadcast %1246 : f32 to vector<2x128xf32>
    %1269 = arith.mulf %1268, %1265 : vector<2x128xf32>
    %1270 = arith.mulf %1265, %1265 : vector<2x128xf32>
    %1271 = vector.broadcast %1247 : f32 to vector<2x128xf32>
    %1272 = arith.subf %1271, %1 : vector<2x128xf32>
    %1273 = vector.broadcast %1248 : f32 to vector<2x128xf32>
    %1274 = arith.subf %1273, %3 : vector<2x128xf32>
    %1275 = arith.mulf %1272, %1272 : vector<2x128xf32>
    %1276 = arith.mulf %1274, %1274 : vector<2x128xf32>
    %1277 = arith.addf %1275, %1276 : vector<2x128xf32>
    %1278 = arith.mulf %1249, %1249 : f32
    %1279 = vector.broadcast %1278 : f32 to vector<2x128xf32>
    %1280 = arith.addf %1277, %1279 : vector<2x128xf32>
    %cst_265 = arith.constant 9.99999996E-13 : f32
    %1281 = vector.broadcast %cst_265 : f32 to vector<2x128xf32>
    %1282 = arith.addf %1280, %1281 : vector<2x128xf32>
    %1283 = math.rsqrt %1282 : vector<2x128xf32>
    %1284 = arith.mulf %1272, %1283 : vector<2x128xf32>
    %1285 = arith.mulf %1274, %1283 : vector<2x128xf32>
    %1286 = vector.broadcast %1249 : f32 to vector<2x128xf32>
    %1287 = arith.mulf %1286, %1283 : vector<2x128xf32>
    %1288 = arith.addf %1266, %1284 : vector<2x128xf32>
    %1289 = arith.addf %1267, %1285 : vector<2x128xf32>
    %1290 = arith.addf %1269, %1287 : vector<2x128xf32>
    %1291 = arith.mulf %1288, %1288 : vector<2x128xf32>
    %1292 = arith.mulf %1289, %1289 : vector<2x128xf32>
    %1293 = arith.addf %1291, %1292 : vector<2x128xf32>
    %1294 = arith.mulf %1290, %1290 : vector<2x128xf32>
    %1295 = arith.addf %1293, %1294 : vector<2x128xf32>
    %cst_266 = arith.constant 9.99999996E-13 : f32
    %1296 = vector.broadcast %cst_266 : f32 to vector<2x128xf32>
    %1297 = arith.addf %1295, %1296 : vector<2x128xf32>
    %1298 = math.rsqrt %1297 : vector<2x128xf32>
    %1299 = arith.mulf %1288, %1298 : vector<2x128xf32>
    %1300 = arith.mulf %1289, %1298 : vector<2x128xf32>
    %1301 = arith.mulf %1290, %1298 : vector<2x128xf32>
    %1302 = arith.mulf %1284, %1299 : vector<2x128xf32>
    %1303 = arith.mulf %1285, %1300 : vector<2x128xf32>
    %1304 = arith.addf %1302, %1303 : vector<2x128xf32>
    %1305 = arith.mulf %1287, %1301 : vector<2x128xf32>
    %1306 = arith.addf %1304, %1305 : vector<2x128xf32>
    %cst_267 = arith.constant 9.99999974E-5 : f32
    %1307 = vector.broadcast %cst_267 : f32 to vector<2x128xf32>
    %1308 = arith.maximumf %1306, %1307 : vector<2x128xf32>
    %cst_268 = arith.constant -5.554730e+00 : f32
    %1309 = vector.broadcast %cst_268 : f32 to vector<2x128xf32>
    %1310 = arith.mulf %1309, %1308 : vector<2x128xf32>
    %cst_269 = arith.constant 6.983160e+00 : f32
    %1311 = vector.broadcast %cst_269 : f32 to vector<2x128xf32>
    %1312 = arith.subf %1310, %1311 : vector<2x128xf32>
    %1313 = arith.mulf %1312, %1308 : vector<2x128xf32>
    %1314 = math.exp2 %1313 : vector<2x128xf32>
    %1315 = arith.mulf %18, %1266 : vector<2x128xf32>
    %1316 = arith.mulf %19, %1267 : vector<2x128xf32>
    %1317 = arith.addf %1315, %1316 : vector<2x128xf32>
    %1318 = arith.mulf %20, %1269 : vector<2x128xf32>
    %1319 = arith.addf %1317, %1318 : vector<2x128xf32>
    %cst_270 = arith.constant 0.000000e+00 : f32
    %1320 = vector.broadcast %cst_270 : f32 to vector<2x128xf32>
    %1321 = arith.maximumf %1319, %1320 : vector<2x128xf32>
    %1322 = arith.mulf %18, %1284 : vector<2x128xf32>
    %1323 = arith.mulf %19, %1285 : vector<2x128xf32>
    %1324 = arith.addf %1322, %1323 : vector<2x128xf32>
    %1325 = arith.mulf %20, %1287 : vector<2x128xf32>
    %1326 = arith.addf %1324, %1325 : vector<2x128xf32>
    %cst_271 = arith.constant 9.99999974E-5 : f32
    %1327 = vector.broadcast %cst_271 : f32 to vector<2x128xf32>
    %1328 = arith.maximumf %1326, %1327 : vector<2x128xf32>
    %1329 = arith.mulf %18, %1299 : vector<2x128xf32>
    %1330 = arith.mulf %19, %1300 : vector<2x128xf32>
    %1331 = arith.addf %1329, %1330 : vector<2x128xf32>
    %1332 = arith.mulf %20, %1301 : vector<2x128xf32>
    %1333 = arith.addf %1331, %1332 : vector<2x128xf32>
    %cst_272 = arith.constant 0.000000e+00 : f32
    %1334 = vector.broadcast %cst_272 : f32 to vector<2x128xf32>
    %1335 = arith.maximumf %1333, %1334 : vector<2x128xf32>
    %1336 = arith.mulf %1335, %1335 : vector<2x128xf32>
    %cst_273 = arith.constant 1.000000e+00 : f32
    %1337 = vector.broadcast %cst_273 : f32 to vector<2x128xf32>
    %1338 = arith.subf %34, %1337 : vector<2x128xf32>
    %1339 = arith.mulf %1336, %1338 : vector<2x128xf32>
    %cst_274 = arith.constant 1.000000e+00 : f32
    %1340 = vector.broadcast %cst_274 : f32 to vector<2x128xf32>
    %1341 = arith.addf %1339, %1340 : vector<2x128xf32>
    %1342 = arith.mulf %1341, %1341 : vector<2x128xf32>
    %cst_275 = arith.constant 12.566371 : f32
    %1343 = vector.broadcast %cst_275 : f32 to vector<2x128xf32>
    %1344 = arith.mulf %1343, %1342 : vector<2x128xf32>
    %1345 = arith.mulf %1321, %38 : vector<2x128xf32>
    %1346 = arith.addf %1345, %36 : vector<2x128xf32>
    %cst_276 = arith.constant 9.99999997E-7 : f32
    %1347 = vector.broadcast %cst_276 : f32 to vector<2x128xf32>
    %1348 = arith.addf %1346, %1347 : vector<2x128xf32>
    %1349 = arith.mulf %1344, %1348 : vector<2x128xf32>
    %1350 = arith.mulf %1328, %38 : vector<2x128xf32>
    %1351 = arith.addf %1350, %36 : vector<2x128xf32>
    %cst_277 = arith.constant 9.99999997E-7 : f32
    %1352 = vector.broadcast %cst_277 : f32 to vector<2x128xf32>
    %1353 = arith.addf %1351, %1352 : vector<2x128xf32>
    %1354 = arith.mulf %1349, %1353 : vector<2x128xf32>
    %1355 = tpu.reciprocal %1354 {approx = true} : vector<2x128xf32> -> vector<2x128xf32>
    %1356 = arith.mulf %34, %1355 : vector<2x128xf32>
    %1357 = arith.mulf %1321, %1270 : vector<2x128xf32>
    %1358 = arith.mulf %46, %1314 : vector<2x128xf32>
    %1359 = arith.addf %40, %1358 : vector<2x128xf32>
    %1360 = arith.mulf %1356, %1359 : vector<2x128xf32>
    %1361 = arith.addf %55, %1360 : vector<2x128xf32>
    %1362 = arith.mulf %1361, %1357 : vector<2x128xf32>
    %1363 = vector.broadcast %1250 : f32 to vector<2x128xf32>
    %1364 = arith.mulf %1362, %1363 : vector<2x128xf32>
    %1365 = arith.mulf %48, %1314 : vector<2x128xf32>
    %1366 = arith.addf %42, %1365 : vector<2x128xf32>
    %1367 = arith.mulf %1356, %1366 : vector<2x128xf32>
    %1368 = arith.addf %60, %1367 : vector<2x128xf32>
    %1369 = arith.mulf %1368, %1357 : vector<2x128xf32>
    %1370 = vector.broadcast %1251 : f32 to vector<2x128xf32>
    %1371 = arith.mulf %1369, %1370 : vector<2x128xf32>
    %1372 = arith.mulf %50, %1314 : vector<2x128xf32>
    %1373 = arith.addf %44, %1372 : vector<2x128xf32>
    %1374 = arith.mulf %1356, %1373 : vector<2x128xf32>
    %1375 = arith.addf %65, %1374 : vector<2x128xf32>
    %1376 = arith.mulf %1375, %1357 : vector<2x128xf32>
    %1377 = vector.broadcast %1252 : f32 to vector<2x128xf32>
    %1378 = arith.mulf %1376, %1377 : vector<2x128xf32>
    %1379 = arith.mulf %80, %1266 : vector<2x128xf32>
    %1380 = arith.mulf %81, %1267 : vector<2x128xf32>
    %1381 = arith.addf %1379, %1380 : vector<2x128xf32>
    %1382 = arith.mulf %82, %1269 : vector<2x128xf32>
    %1383 = arith.addf %1381, %1382 : vector<2x128xf32>
    %cst_278 = arith.constant 0.000000e+00 : f32
    %1384 = vector.broadcast %cst_278 : f32 to vector<2x128xf32>
    %1385 = arith.maximumf %1383, %1384 : vector<2x128xf32>
    %1386 = arith.mulf %80, %1284 : vector<2x128xf32>
    %1387 = arith.mulf %81, %1285 : vector<2x128xf32>
    %1388 = arith.addf %1386, %1387 : vector<2x128xf32>
    %1389 = arith.mulf %82, %1287 : vector<2x128xf32>
    %1390 = arith.addf %1388, %1389 : vector<2x128xf32>
    %cst_279 = arith.constant 9.99999974E-5 : f32
    %1391 = vector.broadcast %cst_279 : f32 to vector<2x128xf32>
    %1392 = arith.maximumf %1390, %1391 : vector<2x128xf32>
    %1393 = arith.mulf %80, %1299 : vector<2x128xf32>
    %1394 = arith.mulf %81, %1300 : vector<2x128xf32>
    %1395 = arith.addf %1393, %1394 : vector<2x128xf32>
    %1396 = arith.mulf %82, %1301 : vector<2x128xf32>
    %1397 = arith.addf %1395, %1396 : vector<2x128xf32>
    %cst_280 = arith.constant 0.000000e+00 : f32
    %1398 = vector.broadcast %cst_280 : f32 to vector<2x128xf32>
    %1399 = arith.maximumf %1397, %1398 : vector<2x128xf32>
    %1400 = arith.mulf %1399, %1399 : vector<2x128xf32>
    %cst_281 = arith.constant 1.000000e+00 : f32
    %1401 = vector.broadcast %cst_281 : f32 to vector<2x128xf32>
    %1402 = arith.subf %96, %1401 : vector<2x128xf32>
    %1403 = arith.mulf %1400, %1402 : vector<2x128xf32>
    %cst_282 = arith.constant 1.000000e+00 : f32
    %1404 = vector.broadcast %cst_282 : f32 to vector<2x128xf32>
    %1405 = arith.addf %1403, %1404 : vector<2x128xf32>
    %1406 = arith.mulf %1405, %1405 : vector<2x128xf32>
    %cst_283 = arith.constant 12.566371 : f32
    %1407 = vector.broadcast %cst_283 : f32 to vector<2x128xf32>
    %1408 = arith.mulf %1407, %1406 : vector<2x128xf32>
    %1409 = arith.mulf %1385, %100 : vector<2x128xf32>
    %1410 = arith.addf %1409, %98 : vector<2x128xf32>
    %cst_284 = arith.constant 9.99999997E-7 : f32
    %1411 = vector.broadcast %cst_284 : f32 to vector<2x128xf32>
    %1412 = arith.addf %1410, %1411 : vector<2x128xf32>
    %1413 = arith.mulf %1408, %1412 : vector<2x128xf32>
    %1414 = arith.mulf %1392, %100 : vector<2x128xf32>
    %1415 = arith.addf %1414, %98 : vector<2x128xf32>
    %cst_285 = arith.constant 9.99999997E-7 : f32
    %1416 = vector.broadcast %cst_285 : f32 to vector<2x128xf32>
    %1417 = arith.addf %1415, %1416 : vector<2x128xf32>
    %1418 = arith.mulf %1413, %1417 : vector<2x128xf32>
    %1419 = tpu.reciprocal %1418 {approx = true} : vector<2x128xf32> -> vector<2x128xf32>
    %1420 = arith.mulf %96, %1419 : vector<2x128xf32>
    %1421 = arith.mulf %1385, %1270 : vector<2x128xf32>
    %1422 = arith.mulf %108, %1314 : vector<2x128xf32>
    %1423 = arith.addf %102, %1422 : vector<2x128xf32>
    %1424 = arith.mulf %1420, %1423 : vector<2x128xf32>
    %1425 = arith.addf %117, %1424 : vector<2x128xf32>
    %1426 = arith.mulf %1425, %1421 : vector<2x128xf32>
    %1427 = vector.broadcast %1250 : f32 to vector<2x128xf32>
    %1428 = arith.mulf %1426, %1427 : vector<2x128xf32>
    %1429 = arith.mulf %110, %1314 : vector<2x128xf32>
    %1430 = arith.addf %104, %1429 : vector<2x128xf32>
    %1431 = arith.mulf %1420, %1430 : vector<2x128xf32>
    %1432 = arith.addf %122, %1431 : vector<2x128xf32>
    %1433 = arith.mulf %1432, %1421 : vector<2x128xf32>
    %1434 = vector.broadcast %1251 : f32 to vector<2x128xf32>
    %1435 = arith.mulf %1433, %1434 : vector<2x128xf32>
    %1436 = arith.mulf %112, %1314 : vector<2x128xf32>
    %1437 = arith.addf %106, %1436 : vector<2x128xf32>
    %1438 = arith.mulf %1420, %1437 : vector<2x128xf32>
    %1439 = arith.addf %127, %1438 : vector<2x128xf32>
    %1440 = arith.mulf %1439, %1421 : vector<2x128xf32>
    %1441 = vector.broadcast %1252 : f32 to vector<2x128xf32>
    %1442 = arith.mulf %1440, %1441 : vector<2x128xf32>
    %cst_286 = arith.constant 9.99999974E-6 : f32
    %1443 = vector.broadcast %cst_286 : f32 to vector<2x128xf32>
    %1444 = arith.addf %1364, %1443 : vector<2x128xf32>
    %cst_287 = arith.constant 9.99999974E-6 : f32
    %1445 = vector.broadcast %cst_287 : f32 to vector<2x128xf32>
    %1446 = arith.addf %1428, %1445 : vector<2x128xf32>
    %1447 = arith.divf %1444, %1446 : vector<2x128xf32>
    %1448 = math.log %1447 : vector<2x128xf32>
    %1449 = math.absf %1448 : vector<2x128xf32>
    %1450 = arith.addf %1243, %1449 : vector<2x128xf32>
    %cst_288 = arith.constant 9.99999974E-6 : f32
    %1451 = vector.broadcast %cst_288 : f32 to vector<2x128xf32>
    %1452 = arith.addf %1371, %1451 : vector<2x128xf32>
    %cst_289 = arith.constant 9.99999974E-6 : f32
    %1453 = vector.broadcast %cst_289 : f32 to vector<2x128xf32>
    %1454 = arith.addf %1435, %1453 : vector<2x128xf32>
    %1455 = arith.divf %1452, %1454 : vector<2x128xf32>
    %1456 = math.log %1455 : vector<2x128xf32>
    %1457 = math.absf %1456 : vector<2x128xf32>
    %1458 = arith.addf %1450, %1457 : vector<2x128xf32>
    %cst_290 = arith.constant 9.99999974E-6 : f32
    %1459 = vector.broadcast %cst_290 : f32 to vector<2x128xf32>
    %1460 = arith.addf %1378, %1459 : vector<2x128xf32>
    %cst_291 = arith.constant 9.99999974E-6 : f32
    %1461 = vector.broadcast %cst_291 : f32 to vector<2x128xf32>
    %1462 = arith.addf %1442, %1461 : vector<2x128xf32>
    %1463 = arith.divf %1460, %1462 : vector<2x128xf32>
    %1464 = math.log %1463 : vector<2x128xf32>
    %1465 = math.absf %1464 : vector<2x128xf32>
    %1466 = arith.addf %1458, %1465 : vector<2x128xf32>
    %c54 = arith.constant 54 : index
    %1467 = memref.load %arg2[%c54] : memref<81xf32, #tpu.memory_space<smem>>
    %c55 = arith.constant 55 : index
    %1468 = memref.load %arg2[%c55] : memref<81xf32, #tpu.memory_space<smem>>
    %c56 = arith.constant 56 : index
    %1469 = memref.load %arg2[%c56] : memref<81xf32, #tpu.memory_space<smem>>
    %c57 = arith.constant 57 : index
    %1470 = memref.load %arg2[%c57] : memref<81xf32, #tpu.memory_space<smem>>
    %c58 = arith.constant 58 : index
    %1471 = memref.load %arg2[%c58] : memref<81xf32, #tpu.memory_space<smem>>
    %c59 = arith.constant 59 : index
    %1472 = memref.load %arg2[%c59] : memref<81xf32, #tpu.memory_space<smem>>
    %c60 = arith.constant 60 : index
    %1473 = memref.load %arg2[%c60] : memref<81xf32, #tpu.memory_space<smem>>
    %c61 = arith.constant 61 : index
    %1474 = memref.load %arg2[%c61] : memref<81xf32, #tpu.memory_space<smem>>
    %c62 = arith.constant 62 : index
    %1475 = memref.load %arg2[%c62] : memref<81xf32, #tpu.memory_space<smem>>
    %1476 = vector.broadcast %1467 : f32 to vector<2x128xf32>
    %1477 = arith.subf %1476, %1 : vector<2x128xf32>
    %1478 = vector.broadcast %1468 : f32 to vector<2x128xf32>
    %1479 = arith.subf %1478, %3 : vector<2x128xf32>
    %1480 = arith.mulf %1477, %1477 : vector<2x128xf32>
    %1481 = arith.mulf %1479, %1479 : vector<2x128xf32>
    %1482 = arith.addf %1480, %1481 : vector<2x128xf32>
    %1483 = arith.mulf %1469, %1469 : f32
    %1484 = vector.broadcast %1483 : f32 to vector<2x128xf32>
    %1485 = arith.addf %1482, %1484 : vector<2x128xf32>
    %cst_292 = arith.constant 9.99999996E-13 : f32
    %1486 = vector.broadcast %cst_292 : f32 to vector<2x128xf32>
    %1487 = arith.addf %1485, %1486 : vector<2x128xf32>
    %1488 = math.rsqrt %1487 : vector<2x128xf32>
    %1489 = arith.mulf %1477, %1488 : vector<2x128xf32>
    %1490 = arith.mulf %1479, %1488 : vector<2x128xf32>
    %1491 = vector.broadcast %1469 : f32 to vector<2x128xf32>
    %1492 = arith.mulf %1491, %1488 : vector<2x128xf32>
    %1493 = arith.mulf %1488, %1488 : vector<2x128xf32>
    %1494 = vector.broadcast %1470 : f32 to vector<2x128xf32>
    %1495 = arith.subf %1494, %1 : vector<2x128xf32>
    %1496 = vector.broadcast %1471 : f32 to vector<2x128xf32>
    %1497 = arith.subf %1496, %3 : vector<2x128xf32>
    %1498 = arith.mulf %1495, %1495 : vector<2x128xf32>
    %1499 = arith.mulf %1497, %1497 : vector<2x128xf32>
    %1500 = arith.addf %1498, %1499 : vector<2x128xf32>
    %1501 = arith.mulf %1472, %1472 : f32
    %1502 = vector.broadcast %1501 : f32 to vector<2x128xf32>
    %1503 = arith.addf %1500, %1502 : vector<2x128xf32>
    %cst_293 = arith.constant 9.99999996E-13 : f32
    %1504 = vector.broadcast %cst_293 : f32 to vector<2x128xf32>
    %1505 = arith.addf %1503, %1504 : vector<2x128xf32>
    %1506 = math.rsqrt %1505 : vector<2x128xf32>
    %1507 = arith.mulf %1495, %1506 : vector<2x128xf32>
    %1508 = arith.mulf %1497, %1506 : vector<2x128xf32>
    %1509 = vector.broadcast %1472 : f32 to vector<2x128xf32>
    %1510 = arith.mulf %1509, %1506 : vector<2x128xf32>
    %1511 = arith.addf %1489, %1507 : vector<2x128xf32>
    %1512 = arith.addf %1490, %1508 : vector<2x128xf32>
    %1513 = arith.addf %1492, %1510 : vector<2x128xf32>
    %1514 = arith.mulf %1511, %1511 : vector<2x128xf32>
    %1515 = arith.mulf %1512, %1512 : vector<2x128xf32>
    %1516 = arith.addf %1514, %1515 : vector<2x128xf32>
    %1517 = arith.mulf %1513, %1513 : vector<2x128xf32>
    %1518 = arith.addf %1516, %1517 : vector<2x128xf32>
    %cst_294 = arith.constant 9.99999996E-13 : f32
    %1519 = vector.broadcast %cst_294 : f32 to vector<2x128xf32>
    %1520 = arith.addf %1518, %1519 : vector<2x128xf32>
    %1521 = math.rsqrt %1520 : vector<2x128xf32>
    %1522 = arith.mulf %1511, %1521 : vector<2x128xf32>
    %1523 = arith.mulf %1512, %1521 : vector<2x128xf32>
    %1524 = arith.mulf %1513, %1521 : vector<2x128xf32>
    %1525 = arith.mulf %1507, %1522 : vector<2x128xf32>
    %1526 = arith.mulf %1508, %1523 : vector<2x128xf32>
    %1527 = arith.addf %1525, %1526 : vector<2x128xf32>
    %1528 = arith.mulf %1510, %1524 : vector<2x128xf32>
    %1529 = arith.addf %1527, %1528 : vector<2x128xf32>
    %cst_295 = arith.constant 9.99999974E-5 : f32
    %1530 = vector.broadcast %cst_295 : f32 to vector<2x128xf32>
    %1531 = arith.maximumf %1529, %1530 : vector<2x128xf32>
    %cst_296 = arith.constant -5.554730e+00 : f32
    %1532 = vector.broadcast %cst_296 : f32 to vector<2x128xf32>
    %1533 = arith.mulf %1532, %1531 : vector<2x128xf32>
    %cst_297 = arith.constant 6.983160e+00 : f32
    %1534 = vector.broadcast %cst_297 : f32 to vector<2x128xf32>
    %1535 = arith.subf %1533, %1534 : vector<2x128xf32>
    %1536 = arith.mulf %1535, %1531 : vector<2x128xf32>
    %1537 = math.exp2 %1536 : vector<2x128xf32>
    %1538 = arith.mulf %18, %1489 : vector<2x128xf32>
    %1539 = arith.mulf %19, %1490 : vector<2x128xf32>
    %1540 = arith.addf %1538, %1539 : vector<2x128xf32>
    %1541 = arith.mulf %20, %1492 : vector<2x128xf32>
    %1542 = arith.addf %1540, %1541 : vector<2x128xf32>
    %cst_298 = arith.constant 0.000000e+00 : f32
    %1543 = vector.broadcast %cst_298 : f32 to vector<2x128xf32>
    %1544 = arith.maximumf %1542, %1543 : vector<2x128xf32>
    %1545 = arith.mulf %18, %1507 : vector<2x128xf32>
    %1546 = arith.mulf %19, %1508 : vector<2x128xf32>
    %1547 = arith.addf %1545, %1546 : vector<2x128xf32>
    %1548 = arith.mulf %20, %1510 : vector<2x128xf32>
    %1549 = arith.addf %1547, %1548 : vector<2x128xf32>
    %cst_299 = arith.constant 9.99999974E-5 : f32
    %1550 = vector.broadcast %cst_299 : f32 to vector<2x128xf32>
    %1551 = arith.maximumf %1549, %1550 : vector<2x128xf32>
    %1552 = arith.mulf %18, %1522 : vector<2x128xf32>
    %1553 = arith.mulf %19, %1523 : vector<2x128xf32>
    %1554 = arith.addf %1552, %1553 : vector<2x128xf32>
    %1555 = arith.mulf %20, %1524 : vector<2x128xf32>
    %1556 = arith.addf %1554, %1555 : vector<2x128xf32>
    %cst_300 = arith.constant 0.000000e+00 : f32
    %1557 = vector.broadcast %cst_300 : f32 to vector<2x128xf32>
    %1558 = arith.maximumf %1556, %1557 : vector<2x128xf32>
    %1559 = arith.mulf %1558, %1558 : vector<2x128xf32>
    %cst_301 = arith.constant 1.000000e+00 : f32
    %1560 = vector.broadcast %cst_301 : f32 to vector<2x128xf32>
    %1561 = arith.subf %34, %1560 : vector<2x128xf32>
    %1562 = arith.mulf %1559, %1561 : vector<2x128xf32>
    %cst_302 = arith.constant 1.000000e+00 : f32
    %1563 = vector.broadcast %cst_302 : f32 to vector<2x128xf32>
    %1564 = arith.addf %1562, %1563 : vector<2x128xf32>
    %1565 = arith.mulf %1564, %1564 : vector<2x128xf32>
    %cst_303 = arith.constant 12.566371 : f32
    %1566 = vector.broadcast %cst_303 : f32 to vector<2x128xf32>
    %1567 = arith.mulf %1566, %1565 : vector<2x128xf32>
    %1568 = arith.mulf %1544, %38 : vector<2x128xf32>
    %1569 = arith.addf %1568, %36 : vector<2x128xf32>
    %cst_304 = arith.constant 9.99999997E-7 : f32
    %1570 = vector.broadcast %cst_304 : f32 to vector<2x128xf32>
    %1571 = arith.addf %1569, %1570 : vector<2x128xf32>
    %1572 = arith.mulf %1567, %1571 : vector<2x128xf32>
    %1573 = arith.mulf %1551, %38 : vector<2x128xf32>
    %1574 = arith.addf %1573, %36 : vector<2x128xf32>
    %cst_305 = arith.constant 9.99999997E-7 : f32
    %1575 = vector.broadcast %cst_305 : f32 to vector<2x128xf32>
    %1576 = arith.addf %1574, %1575 : vector<2x128xf32>
    %1577 = arith.mulf %1572, %1576 : vector<2x128xf32>
    %1578 = tpu.reciprocal %1577 {approx = true} : vector<2x128xf32> -> vector<2x128xf32>
    %1579 = arith.mulf %34, %1578 : vector<2x128xf32>
    %1580 = arith.mulf %1544, %1493 : vector<2x128xf32>
    %1581 = arith.mulf %46, %1537 : vector<2x128xf32>
    %1582 = arith.addf %40, %1581 : vector<2x128xf32>
    %1583 = arith.mulf %1579, %1582 : vector<2x128xf32>
    %1584 = arith.addf %55, %1583 : vector<2x128xf32>
    %1585 = arith.mulf %1584, %1580 : vector<2x128xf32>
    %1586 = vector.broadcast %1473 : f32 to vector<2x128xf32>
    %1587 = arith.mulf %1585, %1586 : vector<2x128xf32>
    %1588 = arith.mulf %48, %1537 : vector<2x128xf32>
    %1589 = arith.addf %42, %1588 : vector<2x128xf32>
    %1590 = arith.mulf %1579, %1589 : vector<2x128xf32>
    %1591 = arith.addf %60, %1590 : vector<2x128xf32>
    %1592 = arith.mulf %1591, %1580 : vector<2x128xf32>
    %1593 = vector.broadcast %1474 : f32 to vector<2x128xf32>
    %1594 = arith.mulf %1592, %1593 : vector<2x128xf32>
    %1595 = arith.mulf %50, %1537 : vector<2x128xf32>
    %1596 = arith.addf %44, %1595 : vector<2x128xf32>
    %1597 = arith.mulf %1579, %1596 : vector<2x128xf32>
    %1598 = arith.addf %65, %1597 : vector<2x128xf32>
    %1599 = arith.mulf %1598, %1580 : vector<2x128xf32>
    %1600 = vector.broadcast %1475 : f32 to vector<2x128xf32>
    %1601 = arith.mulf %1599, %1600 : vector<2x128xf32>
    %1602 = arith.mulf %80, %1489 : vector<2x128xf32>
    %1603 = arith.mulf %81, %1490 : vector<2x128xf32>
    %1604 = arith.addf %1602, %1603 : vector<2x128xf32>
    %1605 = arith.mulf %82, %1492 : vector<2x128xf32>
    %1606 = arith.addf %1604, %1605 : vector<2x128xf32>
    %cst_306 = arith.constant 0.000000e+00 : f32
    %1607 = vector.broadcast %cst_306 : f32 to vector<2x128xf32>
    %1608 = arith.maximumf %1606, %1607 : vector<2x128xf32>
    %1609 = arith.mulf %80, %1507 : vector<2x128xf32>
    %1610 = arith.mulf %81, %1508 : vector<2x128xf32>
    %1611 = arith.addf %1609, %1610 : vector<2x128xf32>
    %1612 = arith.mulf %82, %1510 : vector<2x128xf32>
    %1613 = arith.addf %1611, %1612 : vector<2x128xf32>
    %cst_307 = arith.constant 9.99999974E-5 : f32
    %1614 = vector.broadcast %cst_307 : f32 to vector<2x128xf32>
    %1615 = arith.maximumf %1613, %1614 : vector<2x128xf32>
    %1616 = arith.mulf %80, %1522 : vector<2x128xf32>
    %1617 = arith.mulf %81, %1523 : vector<2x128xf32>
    %1618 = arith.addf %1616, %1617 : vector<2x128xf32>
    %1619 = arith.mulf %82, %1524 : vector<2x128xf32>
    %1620 = arith.addf %1618, %1619 : vector<2x128xf32>
    %cst_308 = arith.constant 0.000000e+00 : f32
    %1621 = vector.broadcast %cst_308 : f32 to vector<2x128xf32>
    %1622 = arith.maximumf %1620, %1621 : vector<2x128xf32>
    %1623 = arith.mulf %1622, %1622 : vector<2x128xf32>
    %cst_309 = arith.constant 1.000000e+00 : f32
    %1624 = vector.broadcast %cst_309 : f32 to vector<2x128xf32>
    %1625 = arith.subf %96, %1624 : vector<2x128xf32>
    %1626 = arith.mulf %1623, %1625 : vector<2x128xf32>
    %cst_310 = arith.constant 1.000000e+00 : f32
    %1627 = vector.broadcast %cst_310 : f32 to vector<2x128xf32>
    %1628 = arith.addf %1626, %1627 : vector<2x128xf32>
    %1629 = arith.mulf %1628, %1628 : vector<2x128xf32>
    %cst_311 = arith.constant 12.566371 : f32
    %1630 = vector.broadcast %cst_311 : f32 to vector<2x128xf32>
    %1631 = arith.mulf %1630, %1629 : vector<2x128xf32>
    %1632 = arith.mulf %1608, %100 : vector<2x128xf32>
    %1633 = arith.addf %1632, %98 : vector<2x128xf32>
    %cst_312 = arith.constant 9.99999997E-7 : f32
    %1634 = vector.broadcast %cst_312 : f32 to vector<2x128xf32>
    %1635 = arith.addf %1633, %1634 : vector<2x128xf32>
    %1636 = arith.mulf %1631, %1635 : vector<2x128xf32>
    %1637 = arith.mulf %1615, %100 : vector<2x128xf32>
    %1638 = arith.addf %1637, %98 : vector<2x128xf32>
    %cst_313 = arith.constant 9.99999997E-7 : f32
    %1639 = vector.broadcast %cst_313 : f32 to vector<2x128xf32>
    %1640 = arith.addf %1638, %1639 : vector<2x128xf32>
    %1641 = arith.mulf %1636, %1640 : vector<2x128xf32>
    %1642 = tpu.reciprocal %1641 {approx = true} : vector<2x128xf32> -> vector<2x128xf32>
    %1643 = arith.mulf %96, %1642 : vector<2x128xf32>
    %1644 = arith.mulf %1608, %1493 : vector<2x128xf32>
    %1645 = arith.mulf %108, %1537 : vector<2x128xf32>
    %1646 = arith.addf %102, %1645 : vector<2x128xf32>
    %1647 = arith.mulf %1643, %1646 : vector<2x128xf32>
    %1648 = arith.addf %117, %1647 : vector<2x128xf32>
    %1649 = arith.mulf %1648, %1644 : vector<2x128xf32>
    %1650 = vector.broadcast %1473 : f32 to vector<2x128xf32>
    %1651 = arith.mulf %1649, %1650 : vector<2x128xf32>
    %1652 = arith.mulf %110, %1537 : vector<2x128xf32>
    %1653 = arith.addf %104, %1652 : vector<2x128xf32>
    %1654 = arith.mulf %1643, %1653 : vector<2x128xf32>
    %1655 = arith.addf %122, %1654 : vector<2x128xf32>
    %1656 = arith.mulf %1655, %1644 : vector<2x128xf32>
    %1657 = vector.broadcast %1474 : f32 to vector<2x128xf32>
    %1658 = arith.mulf %1656, %1657 : vector<2x128xf32>
    %1659 = arith.mulf %112, %1537 : vector<2x128xf32>
    %1660 = arith.addf %106, %1659 : vector<2x128xf32>
    %1661 = arith.mulf %1643, %1660 : vector<2x128xf32>
    %1662 = arith.addf %127, %1661 : vector<2x128xf32>
    %1663 = arith.mulf %1662, %1644 : vector<2x128xf32>
    %1664 = vector.broadcast %1475 : f32 to vector<2x128xf32>
    %1665 = arith.mulf %1663, %1664 : vector<2x128xf32>
    %cst_314 = arith.constant 9.99999974E-6 : f32
    %1666 = vector.broadcast %cst_314 : f32 to vector<2x128xf32>
    %1667 = arith.addf %1587, %1666 : vector<2x128xf32>
    %cst_315 = arith.constant 9.99999974E-6 : f32
    %1668 = vector.broadcast %cst_315 : f32 to vector<2x128xf32>
    %1669 = arith.addf %1651, %1668 : vector<2x128xf32>
    %1670 = arith.divf %1667, %1669 : vector<2x128xf32>
    %1671 = math.log %1670 : vector<2x128xf32>
    %1672 = math.absf %1671 : vector<2x128xf32>
    %1673 = arith.addf %1466, %1672 : vector<2x128xf32>
    %cst_316 = arith.constant 9.99999974E-6 : f32
    %1674 = vector.broadcast %cst_316 : f32 to vector<2x128xf32>
    %1675 = arith.addf %1594, %1674 : vector<2x128xf32>
    %cst_317 = arith.constant 9.99999974E-6 : f32
    %1676 = vector.broadcast %cst_317 : f32 to vector<2x128xf32>
    %1677 = arith.addf %1658, %1676 : vector<2x128xf32>
    %1678 = arith.divf %1675, %1677 : vector<2x128xf32>
    %1679 = math.log %1678 : vector<2x128xf32>
    %1680 = math.absf %1679 : vector<2x128xf32>
    %1681 = arith.addf %1673, %1680 : vector<2x128xf32>
    %cst_318 = arith.constant 9.99999974E-6 : f32
    %1682 = vector.broadcast %cst_318 : f32 to vector<2x128xf32>
    %1683 = arith.addf %1601, %1682 : vector<2x128xf32>
    %cst_319 = arith.constant 9.99999974E-6 : f32
    %1684 = vector.broadcast %cst_319 : f32 to vector<2x128xf32>
    %1685 = arith.addf %1665, %1684 : vector<2x128xf32>
    %1686 = arith.divf %1683, %1685 : vector<2x128xf32>
    %1687 = math.log %1686 : vector<2x128xf32>
    %1688 = math.absf %1687 : vector<2x128xf32>
    %1689 = arith.addf %1681, %1688 : vector<2x128xf32>
    %c63 = arith.constant 63 : index
    %1690 = memref.load %arg2[%c63] : memref<81xf32, #tpu.memory_space<smem>>
    %c64 = arith.constant 64 : index
    %1691 = memref.load %arg2[%c64] : memref<81xf32, #tpu.memory_space<smem>>
    %c65 = arith.constant 65 : index
    %1692 = memref.load %arg2[%c65] : memref<81xf32, #tpu.memory_space<smem>>
    %c66 = arith.constant 66 : index
    %1693 = memref.load %arg2[%c66] : memref<81xf32, #tpu.memory_space<smem>>
    %c67 = arith.constant 67 : index
    %1694 = memref.load %arg2[%c67] : memref<81xf32, #tpu.memory_space<smem>>
    %c68 = arith.constant 68 : index
    %1695 = memref.load %arg2[%c68] : memref<81xf32, #tpu.memory_space<smem>>
    %c69 = arith.constant 69 : index
    %1696 = memref.load %arg2[%c69] : memref<81xf32, #tpu.memory_space<smem>>
    %c70 = arith.constant 70 : index
    %1697 = memref.load %arg2[%c70] : memref<81xf32, #tpu.memory_space<smem>>
    %c71 = arith.constant 71 : index
    %1698 = memref.load %arg2[%c71] : memref<81xf32, #tpu.memory_space<smem>>
    %1699 = vector.broadcast %1690 : f32 to vector<2x128xf32>
    %1700 = arith.subf %1699, %1 : vector<2x128xf32>
    %1701 = vector.broadcast %1691 : f32 to vector<2x128xf32>
    %1702 = arith.subf %1701, %3 : vector<2x128xf32>
    %1703 = arith.mulf %1700, %1700 : vector<2x128xf32>
    %1704 = arith.mulf %1702, %1702 : vector<2x128xf32>
    %1705 = arith.addf %1703, %1704 : vector<2x128xf32>
    %1706 = arith.mulf %1692, %1692 : f32
    %1707 = vector.broadcast %1706 : f32 to vector<2x128xf32>
    %1708 = arith.addf %1705, %1707 : vector<2x128xf32>
    %cst_320 = arith.constant 9.99999996E-13 : f32
    %1709 = vector.broadcast %cst_320 : f32 to vector<2x128xf32>
    %1710 = arith.addf %1708, %1709 : vector<2x128xf32>
    %1711 = math.rsqrt %1710 : vector<2x128xf32>
    %1712 = arith.mulf %1700, %1711 : vector<2x128xf32>
    %1713 = arith.mulf %1702, %1711 : vector<2x128xf32>
    %1714 = vector.broadcast %1692 : f32 to vector<2x128xf32>
    %1715 = arith.mulf %1714, %1711 : vector<2x128xf32>
    %1716 = arith.mulf %1711, %1711 : vector<2x128xf32>
    %1717 = vector.broadcast %1693 : f32 to vector<2x128xf32>
    %1718 = arith.subf %1717, %1 : vector<2x128xf32>
    %1719 = vector.broadcast %1694 : f32 to vector<2x128xf32>
    %1720 = arith.subf %1719, %3 : vector<2x128xf32>
    %1721 = arith.mulf %1718, %1718 : vector<2x128xf32>
    %1722 = arith.mulf %1720, %1720 : vector<2x128xf32>
    %1723 = arith.addf %1721, %1722 : vector<2x128xf32>
    %1724 = arith.mulf %1695, %1695 : f32
    %1725 = vector.broadcast %1724 : f32 to vector<2x128xf32>
    %1726 = arith.addf %1723, %1725 : vector<2x128xf32>
    %cst_321 = arith.constant 9.99999996E-13 : f32
    %1727 = vector.broadcast %cst_321 : f32 to vector<2x128xf32>
    %1728 = arith.addf %1726, %1727 : vector<2x128xf32>
    %1729 = math.rsqrt %1728 : vector<2x128xf32>
    %1730 = arith.mulf %1718, %1729 : vector<2x128xf32>
    %1731 = arith.mulf %1720, %1729 : vector<2x128xf32>
    %1732 = vector.broadcast %1695 : f32 to vector<2x128xf32>
    %1733 = arith.mulf %1732, %1729 : vector<2x128xf32>
    %1734 = arith.addf %1712, %1730 : vector<2x128xf32>
    %1735 = arith.addf %1713, %1731 : vector<2x128xf32>
    %1736 = arith.addf %1715, %1733 : vector<2x128xf32>
    %1737 = arith.mulf %1734, %1734 : vector<2x128xf32>
    %1738 = arith.mulf %1735, %1735 : vector<2x128xf32>
    %1739 = arith.addf %1737, %1738 : vector<2x128xf32>
    %1740 = arith.mulf %1736, %1736 : vector<2x128xf32>
    %1741 = arith.addf %1739, %1740 : vector<2x128xf32>
    %cst_322 = arith.constant 9.99999996E-13 : f32
    %1742 = vector.broadcast %cst_322 : f32 to vector<2x128xf32>
    %1743 = arith.addf %1741, %1742 : vector<2x128xf32>
    %1744 = math.rsqrt %1743 : vector<2x128xf32>
    %1745 = arith.mulf %1734, %1744 : vector<2x128xf32>
    %1746 = arith.mulf %1735, %1744 : vector<2x128xf32>
    %1747 = arith.mulf %1736, %1744 : vector<2x128xf32>
    %1748 = arith.mulf %1730, %1745 : vector<2x128xf32>
    %1749 = arith.mulf %1731, %1746 : vector<2x128xf32>
    %1750 = arith.addf %1748, %1749 : vector<2x128xf32>
    %1751 = arith.mulf %1733, %1747 : vector<2x128xf32>
    %1752 = arith.addf %1750, %1751 : vector<2x128xf32>
    %cst_323 = arith.constant 9.99999974E-5 : f32
    %1753 = vector.broadcast %cst_323 : f32 to vector<2x128xf32>
    %1754 = arith.maximumf %1752, %1753 : vector<2x128xf32>
    %cst_324 = arith.constant -5.554730e+00 : f32
    %1755 = vector.broadcast %cst_324 : f32 to vector<2x128xf32>
    %1756 = arith.mulf %1755, %1754 : vector<2x128xf32>
    %cst_325 = arith.constant 6.983160e+00 : f32
    %1757 = vector.broadcast %cst_325 : f32 to vector<2x128xf32>
    %1758 = arith.subf %1756, %1757 : vector<2x128xf32>
    %1759 = arith.mulf %1758, %1754 : vector<2x128xf32>
    %1760 = math.exp2 %1759 : vector<2x128xf32>
    %1761 = arith.mulf %18, %1712 : vector<2x128xf32>
    %1762 = arith.mulf %19, %1713 : vector<2x128xf32>
    %1763 = arith.addf %1761, %1762 : vector<2x128xf32>
    %1764 = arith.mulf %20, %1715 : vector<2x128xf32>
    %1765 = arith.addf %1763, %1764 : vector<2x128xf32>
    %cst_326 = arith.constant 0.000000e+00 : f32
    %1766 = vector.broadcast %cst_326 : f32 to vector<2x128xf32>
    %1767 = arith.maximumf %1765, %1766 : vector<2x128xf32>
    %1768 = arith.mulf %18, %1730 : vector<2x128xf32>
    %1769 = arith.mulf %19, %1731 : vector<2x128xf32>
    %1770 = arith.addf %1768, %1769 : vector<2x128xf32>
    %1771 = arith.mulf %20, %1733 : vector<2x128xf32>
    %1772 = arith.addf %1770, %1771 : vector<2x128xf32>
    %cst_327 = arith.constant 9.99999974E-5 : f32
    %1773 = vector.broadcast %cst_327 : f32 to vector<2x128xf32>
    %1774 = arith.maximumf %1772, %1773 : vector<2x128xf32>
    %1775 = arith.mulf %18, %1745 : vector<2x128xf32>
    %1776 = arith.mulf %19, %1746 : vector<2x128xf32>
    %1777 = arith.addf %1775, %1776 : vector<2x128xf32>
    %1778 = arith.mulf %20, %1747 : vector<2x128xf32>
    %1779 = arith.addf %1777, %1778 : vector<2x128xf32>
    %cst_328 = arith.constant 0.000000e+00 : f32
    %1780 = vector.broadcast %cst_328 : f32 to vector<2x128xf32>
    %1781 = arith.maximumf %1779, %1780 : vector<2x128xf32>
    %1782 = arith.mulf %1781, %1781 : vector<2x128xf32>
    %cst_329 = arith.constant 1.000000e+00 : f32
    %1783 = vector.broadcast %cst_329 : f32 to vector<2x128xf32>
    %1784 = arith.subf %34, %1783 : vector<2x128xf32>
    %1785 = arith.mulf %1782, %1784 : vector<2x128xf32>
    %cst_330 = arith.constant 1.000000e+00 : f32
    %1786 = vector.broadcast %cst_330 : f32 to vector<2x128xf32>
    %1787 = arith.addf %1785, %1786 : vector<2x128xf32>
    %1788 = arith.mulf %1787, %1787 : vector<2x128xf32>
    %cst_331 = arith.constant 12.566371 : f32
    %1789 = vector.broadcast %cst_331 : f32 to vector<2x128xf32>
    %1790 = arith.mulf %1789, %1788 : vector<2x128xf32>
    %1791 = arith.mulf %1767, %38 : vector<2x128xf32>
    %1792 = arith.addf %1791, %36 : vector<2x128xf32>
    %cst_332 = arith.constant 9.99999997E-7 : f32
    %1793 = vector.broadcast %cst_332 : f32 to vector<2x128xf32>
    %1794 = arith.addf %1792, %1793 : vector<2x128xf32>
    %1795 = arith.mulf %1790, %1794 : vector<2x128xf32>
    %1796 = arith.mulf %1774, %38 : vector<2x128xf32>
    %1797 = arith.addf %1796, %36 : vector<2x128xf32>
    %cst_333 = arith.constant 9.99999997E-7 : f32
    %1798 = vector.broadcast %cst_333 : f32 to vector<2x128xf32>
    %1799 = arith.addf %1797, %1798 : vector<2x128xf32>
    %1800 = arith.mulf %1795, %1799 : vector<2x128xf32>
    %1801 = tpu.reciprocal %1800 {approx = true} : vector<2x128xf32> -> vector<2x128xf32>
    %1802 = arith.mulf %34, %1801 : vector<2x128xf32>
    %1803 = arith.mulf %1767, %1716 : vector<2x128xf32>
    %1804 = arith.mulf %46, %1760 : vector<2x128xf32>
    %1805 = arith.addf %40, %1804 : vector<2x128xf32>
    %1806 = arith.mulf %1802, %1805 : vector<2x128xf32>
    %1807 = arith.addf %55, %1806 : vector<2x128xf32>
    %1808 = arith.mulf %1807, %1803 : vector<2x128xf32>
    %1809 = vector.broadcast %1696 : f32 to vector<2x128xf32>
    %1810 = arith.mulf %1808, %1809 : vector<2x128xf32>
    %1811 = arith.mulf %48, %1760 : vector<2x128xf32>
    %1812 = arith.addf %42, %1811 : vector<2x128xf32>
    %1813 = arith.mulf %1802, %1812 : vector<2x128xf32>
    %1814 = arith.addf %60, %1813 : vector<2x128xf32>
    %1815 = arith.mulf %1814, %1803 : vector<2x128xf32>
    %1816 = vector.broadcast %1697 : f32 to vector<2x128xf32>
    %1817 = arith.mulf %1815, %1816 : vector<2x128xf32>
    %1818 = arith.mulf %50, %1760 : vector<2x128xf32>
    %1819 = arith.addf %44, %1818 : vector<2x128xf32>
    %1820 = arith.mulf %1802, %1819 : vector<2x128xf32>
    %1821 = arith.addf %65, %1820 : vector<2x128xf32>
    %1822 = arith.mulf %1821, %1803 : vector<2x128xf32>
    %1823 = vector.broadcast %1698 : f32 to vector<2x128xf32>
    %1824 = arith.mulf %1822, %1823 : vector<2x128xf32>
    %1825 = arith.mulf %80, %1712 : vector<2x128xf32>
    %1826 = arith.mulf %81, %1713 : vector<2x128xf32>
    %1827 = arith.addf %1825, %1826 : vector<2x128xf32>
    %1828 = arith.mulf %82, %1715 : vector<2x128xf32>
    %1829 = arith.addf %1827, %1828 : vector<2x128xf32>
    %cst_334 = arith.constant 0.000000e+00 : f32
    %1830 = vector.broadcast %cst_334 : f32 to vector<2x128xf32>
    %1831 = arith.maximumf %1829, %1830 : vector<2x128xf32>
    %1832 = arith.mulf %80, %1730 : vector<2x128xf32>
    %1833 = arith.mulf %81, %1731 : vector<2x128xf32>
    %1834 = arith.addf %1832, %1833 : vector<2x128xf32>
    %1835 = arith.mulf %82, %1733 : vector<2x128xf32>
    %1836 = arith.addf %1834, %1835 : vector<2x128xf32>
    %cst_335 = arith.constant 9.99999974E-5 : f32
    %1837 = vector.broadcast %cst_335 : f32 to vector<2x128xf32>
    %1838 = arith.maximumf %1836, %1837 : vector<2x128xf32>
    %1839 = arith.mulf %80, %1745 : vector<2x128xf32>
    %1840 = arith.mulf %81, %1746 : vector<2x128xf32>
    %1841 = arith.addf %1839, %1840 : vector<2x128xf32>
    %1842 = arith.mulf %82, %1747 : vector<2x128xf32>
    %1843 = arith.addf %1841, %1842 : vector<2x128xf32>
    %cst_336 = arith.constant 0.000000e+00 : f32
    %1844 = vector.broadcast %cst_336 : f32 to vector<2x128xf32>
    %1845 = arith.maximumf %1843, %1844 : vector<2x128xf32>
    %1846 = arith.mulf %1845, %1845 : vector<2x128xf32>
    %cst_337 = arith.constant 1.000000e+00 : f32
    %1847 = vector.broadcast %cst_337 : f32 to vector<2x128xf32>
    %1848 = arith.subf %96, %1847 : vector<2x128xf32>
    %1849 = arith.mulf %1846, %1848 : vector<2x128xf32>
    %cst_338 = arith.constant 1.000000e+00 : f32
    %1850 = vector.broadcast %cst_338 : f32 to vector<2x128xf32>
    %1851 = arith.addf %1849, %1850 : vector<2x128xf32>
    %1852 = arith.mulf %1851, %1851 : vector<2x128xf32>
    %cst_339 = arith.constant 12.566371 : f32
    %1853 = vector.broadcast %cst_339 : f32 to vector<2x128xf32>
    %1854 = arith.mulf %1853, %1852 : vector<2x128xf32>
    %1855 = arith.mulf %1831, %100 : vector<2x128xf32>
    %1856 = arith.addf %1855, %98 : vector<2x128xf32>
    %cst_340 = arith.constant 9.99999997E-7 : f32
    %1857 = vector.broadcast %cst_340 : f32 to vector<2x128xf32>
    %1858 = arith.addf %1856, %1857 : vector<2x128xf32>
    %1859 = arith.mulf %1854, %1858 : vector<2x128xf32>
    %1860 = arith.mulf %1838, %100 : vector<2x128xf32>
    %1861 = arith.addf %1860, %98 : vector<2x128xf32>
    %cst_341 = arith.constant 9.99999997E-7 : f32
    %1862 = vector.broadcast %cst_341 : f32 to vector<2x128xf32>
    %1863 = arith.addf %1861, %1862 : vector<2x128xf32>
    %1864 = arith.mulf %1859, %1863 : vector<2x128xf32>
    %1865 = tpu.reciprocal %1864 {approx = true} : vector<2x128xf32> -> vector<2x128xf32>
    %1866 = arith.mulf %96, %1865 : vector<2x128xf32>
    %1867 = arith.mulf %1831, %1716 : vector<2x128xf32>
    %1868 = arith.mulf %108, %1760 : vector<2x128xf32>
    %1869 = arith.addf %102, %1868 : vector<2x128xf32>
    %1870 = arith.mulf %1866, %1869 : vector<2x128xf32>
    %1871 = arith.addf %117, %1870 : vector<2x128xf32>
    %1872 = arith.mulf %1871, %1867 : vector<2x128xf32>
    %1873 = vector.broadcast %1696 : f32 to vector<2x128xf32>
    %1874 = arith.mulf %1872, %1873 : vector<2x128xf32>
    %1875 = arith.mulf %110, %1760 : vector<2x128xf32>
    %1876 = arith.addf %104, %1875 : vector<2x128xf32>
    %1877 = arith.mulf %1866, %1876 : vector<2x128xf32>
    %1878 = arith.addf %122, %1877 : vector<2x128xf32>
    %1879 = arith.mulf %1878, %1867 : vector<2x128xf32>
    %1880 = vector.broadcast %1697 : f32 to vector<2x128xf32>
    %1881 = arith.mulf %1879, %1880 : vector<2x128xf32>
    %1882 = arith.mulf %112, %1760 : vector<2x128xf32>
    %1883 = arith.addf %106, %1882 : vector<2x128xf32>
    %1884 = arith.mulf %1866, %1883 : vector<2x128xf32>
    %1885 = arith.addf %127, %1884 : vector<2x128xf32>
    %1886 = arith.mulf %1885, %1867 : vector<2x128xf32>
    %1887 = vector.broadcast %1698 : f32 to vector<2x128xf32>
    %1888 = arith.mulf %1886, %1887 : vector<2x128xf32>
    %cst_342 = arith.constant 9.99999974E-6 : f32
    %1889 = vector.broadcast %cst_342 : f32 to vector<2x128xf32>
    %1890 = arith.addf %1810, %1889 : vector<2x128xf32>
    %cst_343 = arith.constant 9.99999974E-6 : f32
    %1891 = vector.broadcast %cst_343 : f32 to vector<2x128xf32>
    %1892 = arith.addf %1874, %1891 : vector<2x128xf32>
    %1893 = arith.divf %1890, %1892 : vector<2x128xf32>
    %1894 = math.log %1893 : vector<2x128xf32>
    %1895 = math.absf %1894 : vector<2x128xf32>
    %1896 = arith.addf %1689, %1895 : vector<2x128xf32>
    %cst_344 = arith.constant 9.99999974E-6 : f32
    %1897 = vector.broadcast %cst_344 : f32 to vector<2x128xf32>
    %1898 = arith.addf %1817, %1897 : vector<2x128xf32>
    %cst_345 = arith.constant 9.99999974E-6 : f32
    %1899 = vector.broadcast %cst_345 : f32 to vector<2x128xf32>
    %1900 = arith.addf %1881, %1899 : vector<2x128xf32>
    %1901 = arith.divf %1898, %1900 : vector<2x128xf32>
    %1902 = math.log %1901 : vector<2x128xf32>
    %1903 = math.absf %1902 : vector<2x128xf32>
    %1904 = arith.addf %1896, %1903 : vector<2x128xf32>
    %cst_346 = arith.constant 9.99999974E-6 : f32
    %1905 = vector.broadcast %cst_346 : f32 to vector<2x128xf32>
    %1906 = arith.addf %1824, %1905 : vector<2x128xf32>
    %cst_347 = arith.constant 9.99999974E-6 : f32
    %1907 = vector.broadcast %cst_347 : f32 to vector<2x128xf32>
    %1908 = arith.addf %1888, %1907 : vector<2x128xf32>
    %1909 = arith.divf %1906, %1908 : vector<2x128xf32>
    %1910 = math.log %1909 : vector<2x128xf32>
    %1911 = math.absf %1910 : vector<2x128xf32>
    %1912 = arith.addf %1904, %1911 : vector<2x128xf32>
    %c72 = arith.constant 72 : index
    %1913 = memref.load %arg2[%c72] : memref<81xf32, #tpu.memory_space<smem>>
    %c73 = arith.constant 73 : index
    %1914 = memref.load %arg2[%c73] : memref<81xf32, #tpu.memory_space<smem>>
    %c74 = arith.constant 74 : index
    %1915 = memref.load %arg2[%c74] : memref<81xf32, #tpu.memory_space<smem>>
    %c75 = arith.constant 75 : index
    %1916 = memref.load %arg2[%c75] : memref<81xf32, #tpu.memory_space<smem>>
    %c76 = arith.constant 76 : index
    %1917 = memref.load %arg2[%c76] : memref<81xf32, #tpu.memory_space<smem>>
    %c77 = arith.constant 77 : index
    %1918 = memref.load %arg2[%c77] : memref<81xf32, #tpu.memory_space<smem>>
    %c78 = arith.constant 78 : index
    %1919 = memref.load %arg2[%c78] : memref<81xf32, #tpu.memory_space<smem>>
    %c79 = arith.constant 79 : index
    %1920 = memref.load %arg2[%c79] : memref<81xf32, #tpu.memory_space<smem>>
    %c80 = arith.constant 80 : index
    %1921 = memref.load %arg2[%c80] : memref<81xf32, #tpu.memory_space<smem>>
    %1922 = vector.broadcast %1913 : f32 to vector<2x128xf32>
    %1923 = arith.subf %1922, %1 : vector<2x128xf32>
    %1924 = vector.broadcast %1914 : f32 to vector<2x128xf32>
    %1925 = arith.subf %1924, %3 : vector<2x128xf32>
    %1926 = arith.mulf %1923, %1923 : vector<2x128xf32>
    %1927 = arith.mulf %1925, %1925 : vector<2x128xf32>
    %1928 = arith.addf %1926, %1927 : vector<2x128xf32>
    %1929 = arith.mulf %1915, %1915 : f32
    %1930 = vector.broadcast %1929 : f32 to vector<2x128xf32>
    %1931 = arith.addf %1928, %1930 : vector<2x128xf32>
    %cst_348 = arith.constant 9.99999996E-13 : f32
    %1932 = vector.broadcast %cst_348 : f32 to vector<2x128xf32>
    %1933 = arith.addf %1931, %1932 : vector<2x128xf32>
    %1934 = math.rsqrt %1933 : vector<2x128xf32>
    %1935 = arith.mulf %1923, %1934 : vector<2x128xf32>
    %1936 = arith.mulf %1925, %1934 : vector<2x128xf32>
    %1937 = vector.broadcast %1915 : f32 to vector<2x128xf32>
    %1938 = arith.mulf %1937, %1934 : vector<2x128xf32>
    %1939 = arith.mulf %1934, %1934 : vector<2x128xf32>
    %1940 = vector.broadcast %1916 : f32 to vector<2x128xf32>
    %1941 = arith.subf %1940, %1 : vector<2x128xf32>
    %1942 = vector.broadcast %1917 : f32 to vector<2x128xf32>
    %1943 = arith.subf %1942, %3 : vector<2x128xf32>
    %1944 = arith.mulf %1941, %1941 : vector<2x128xf32>
    %1945 = arith.mulf %1943, %1943 : vector<2x128xf32>
    %1946 = arith.addf %1944, %1945 : vector<2x128xf32>
    %1947 = arith.mulf %1918, %1918 : f32
    %1948 = vector.broadcast %1947 : f32 to vector<2x128xf32>
    %1949 = arith.addf %1946, %1948 : vector<2x128xf32>
    %cst_349 = arith.constant 9.99999996E-13 : f32
    %1950 = vector.broadcast %cst_349 : f32 to vector<2x128xf32>
    %1951 = arith.addf %1949, %1950 : vector<2x128xf32>
    %1952 = math.rsqrt %1951 : vector<2x128xf32>
    %1953 = arith.mulf %1941, %1952 : vector<2x128xf32>
    %1954 = arith.mulf %1943, %1952 : vector<2x128xf32>
    %1955 = vector.broadcast %1918 : f32 to vector<2x128xf32>
    %1956 = arith.mulf %1955, %1952 : vector<2x128xf32>
    %1957 = arith.addf %1935, %1953 : vector<2x128xf32>
    %1958 = arith.addf %1936, %1954 : vector<2x128xf32>
    %1959 = arith.addf %1938, %1956 : vector<2x128xf32>
    %1960 = arith.mulf %1957, %1957 : vector<2x128xf32>
    %1961 = arith.mulf %1958, %1958 : vector<2x128xf32>
    %1962 = arith.addf %1960, %1961 : vector<2x128xf32>
    %1963 = arith.mulf %1959, %1959 : vector<2x128xf32>
    %1964 = arith.addf %1962, %1963 : vector<2x128xf32>
    %cst_350 = arith.constant 9.99999996E-13 : f32
    %1965 = vector.broadcast %cst_350 : f32 to vector<2x128xf32>
    %1966 = arith.addf %1964, %1965 : vector<2x128xf32>
    %1967 = math.rsqrt %1966 : vector<2x128xf32>
    %1968 = arith.mulf %1957, %1967 : vector<2x128xf32>
    %1969 = arith.mulf %1958, %1967 : vector<2x128xf32>
    %1970 = arith.mulf %1959, %1967 : vector<2x128xf32>
    %1971 = arith.mulf %1953, %1968 : vector<2x128xf32>
    %1972 = arith.mulf %1954, %1969 : vector<2x128xf32>
    %1973 = arith.addf %1971, %1972 : vector<2x128xf32>
    %1974 = arith.mulf %1956, %1970 : vector<2x128xf32>
    %1975 = arith.addf %1973, %1974 : vector<2x128xf32>
    %cst_351 = arith.constant 9.99999974E-5 : f32
    %1976 = vector.broadcast %cst_351 : f32 to vector<2x128xf32>
    %1977 = arith.maximumf %1975, %1976 : vector<2x128xf32>
    %cst_352 = arith.constant -5.554730e+00 : f32
    %1978 = vector.broadcast %cst_352 : f32 to vector<2x128xf32>
    %1979 = arith.mulf %1978, %1977 : vector<2x128xf32>
    %cst_353 = arith.constant 6.983160e+00 : f32
    %1980 = vector.broadcast %cst_353 : f32 to vector<2x128xf32>
    %1981 = arith.subf %1979, %1980 : vector<2x128xf32>
    %1982 = arith.mulf %1981, %1977 : vector<2x128xf32>
    %1983 = math.exp2 %1982 : vector<2x128xf32>
    %1984 = arith.mulf %18, %1935 : vector<2x128xf32>
    %1985 = arith.mulf %19, %1936 : vector<2x128xf32>
    %1986 = arith.addf %1984, %1985 : vector<2x128xf32>
    %1987 = arith.mulf %20, %1938 : vector<2x128xf32>
    %1988 = arith.addf %1986, %1987 : vector<2x128xf32>
    %cst_354 = arith.constant 0.000000e+00 : f32
    %1989 = vector.broadcast %cst_354 : f32 to vector<2x128xf32>
    %1990 = arith.maximumf %1988, %1989 : vector<2x128xf32>
    %1991 = arith.mulf %18, %1953 : vector<2x128xf32>
    %1992 = arith.mulf %19, %1954 : vector<2x128xf32>
    %1993 = arith.addf %1991, %1992 : vector<2x128xf32>
    %1994 = arith.mulf %20, %1956 : vector<2x128xf32>
    %1995 = arith.addf %1993, %1994 : vector<2x128xf32>
    %cst_355 = arith.constant 9.99999974E-5 : f32
    %1996 = vector.broadcast %cst_355 : f32 to vector<2x128xf32>
    %1997 = arith.maximumf %1995, %1996 : vector<2x128xf32>
    %1998 = arith.mulf %18, %1968 : vector<2x128xf32>
    %1999 = arith.mulf %19, %1969 : vector<2x128xf32>
    %2000 = arith.addf %1998, %1999 : vector<2x128xf32>
    %2001 = arith.mulf %20, %1970 : vector<2x128xf32>
    %2002 = arith.addf %2000, %2001 : vector<2x128xf32>
    %cst_356 = arith.constant 0.000000e+00 : f32
    %2003 = vector.broadcast %cst_356 : f32 to vector<2x128xf32>
    %2004 = arith.maximumf %2002, %2003 : vector<2x128xf32>
    %2005 = arith.mulf %2004, %2004 : vector<2x128xf32>
    %cst_357 = arith.constant 1.000000e+00 : f32
    %2006 = vector.broadcast %cst_357 : f32 to vector<2x128xf32>
    %2007 = arith.subf %34, %2006 : vector<2x128xf32>
    %2008 = arith.mulf %2005, %2007 : vector<2x128xf32>
    %cst_358 = arith.constant 1.000000e+00 : f32
    %2009 = vector.broadcast %cst_358 : f32 to vector<2x128xf32>
    %2010 = arith.addf %2008, %2009 : vector<2x128xf32>
    %2011 = arith.mulf %2010, %2010 : vector<2x128xf32>
    %cst_359 = arith.constant 12.566371 : f32
    %2012 = vector.broadcast %cst_359 : f32 to vector<2x128xf32>
    %2013 = arith.mulf %2012, %2011 : vector<2x128xf32>
    %2014 = arith.mulf %1990, %38 : vector<2x128xf32>
    %2015 = arith.addf %2014, %36 : vector<2x128xf32>
    %cst_360 = arith.constant 9.99999997E-7 : f32
    %2016 = vector.broadcast %cst_360 : f32 to vector<2x128xf32>
    %2017 = arith.addf %2015, %2016 : vector<2x128xf32>
    %2018 = arith.mulf %2013, %2017 : vector<2x128xf32>
    %2019 = arith.mulf %1997, %38 : vector<2x128xf32>
    %2020 = arith.addf %2019, %36 : vector<2x128xf32>
    %cst_361 = arith.constant 9.99999997E-7 : f32
    %2021 = vector.broadcast %cst_361 : f32 to vector<2x128xf32>
    %2022 = arith.addf %2020, %2021 : vector<2x128xf32>
    %2023 = arith.mulf %2018, %2022 : vector<2x128xf32>
    %2024 = tpu.reciprocal %2023 {approx = true} : vector<2x128xf32> -> vector<2x128xf32>
    %2025 = arith.mulf %34, %2024 : vector<2x128xf32>
    %2026 = arith.mulf %1990, %1939 : vector<2x128xf32>
    %2027 = arith.mulf %46, %1983 : vector<2x128xf32>
    %2028 = arith.addf %40, %2027 : vector<2x128xf32>
    %2029 = arith.mulf %2025, %2028 : vector<2x128xf32>
    %2030 = arith.addf %55, %2029 : vector<2x128xf32>
    %2031 = arith.mulf %2030, %2026 : vector<2x128xf32>
    %2032 = vector.broadcast %1919 : f32 to vector<2x128xf32>
    %2033 = arith.mulf %2031, %2032 : vector<2x128xf32>
    %2034 = arith.mulf %48, %1983 : vector<2x128xf32>
    %2035 = arith.addf %42, %2034 : vector<2x128xf32>
    %2036 = arith.mulf %2025, %2035 : vector<2x128xf32>
    %2037 = arith.addf %60, %2036 : vector<2x128xf32>
    %2038 = arith.mulf %2037, %2026 : vector<2x128xf32>
    %2039 = vector.broadcast %1920 : f32 to vector<2x128xf32>
    %2040 = arith.mulf %2038, %2039 : vector<2x128xf32>
    %2041 = arith.mulf %50, %1983 : vector<2x128xf32>
    %2042 = arith.addf %44, %2041 : vector<2x128xf32>
    %2043 = arith.mulf %2025, %2042 : vector<2x128xf32>
    %2044 = arith.addf %65, %2043 : vector<2x128xf32>
    %2045 = arith.mulf %2044, %2026 : vector<2x128xf32>
    %2046 = vector.broadcast %1921 : f32 to vector<2x128xf32>
    %2047 = arith.mulf %2045, %2046 : vector<2x128xf32>
    %2048 = arith.mulf %80, %1935 : vector<2x128xf32>
    %2049 = arith.mulf %81, %1936 : vector<2x128xf32>
    %2050 = arith.addf %2048, %2049 : vector<2x128xf32>
    %2051 = arith.mulf %82, %1938 : vector<2x128xf32>
    %2052 = arith.addf %2050, %2051 : vector<2x128xf32>
    %cst_362 = arith.constant 0.000000e+00 : f32
    %2053 = vector.broadcast %cst_362 : f32 to vector<2x128xf32>
    %2054 = arith.maximumf %2052, %2053 : vector<2x128xf32>
    %2055 = arith.mulf %80, %1953 : vector<2x128xf32>
    %2056 = arith.mulf %81, %1954 : vector<2x128xf32>
    %2057 = arith.addf %2055, %2056 : vector<2x128xf32>
    %2058 = arith.mulf %82, %1956 : vector<2x128xf32>
    %2059 = arith.addf %2057, %2058 : vector<2x128xf32>
    %cst_363 = arith.constant 9.99999974E-5 : f32
    %2060 = vector.broadcast %cst_363 : f32 to vector<2x128xf32>
    %2061 = arith.maximumf %2059, %2060 : vector<2x128xf32>
    %2062 = arith.mulf %80, %1968 : vector<2x128xf32>
    %2063 = arith.mulf %81, %1969 : vector<2x128xf32>
    %2064 = arith.addf %2062, %2063 : vector<2x128xf32>
    %2065 = arith.mulf %82, %1970 : vector<2x128xf32>
    %2066 = arith.addf %2064, %2065 : vector<2x128xf32>
    %cst_364 = arith.constant 0.000000e+00 : f32
    %2067 = vector.broadcast %cst_364 : f32 to vector<2x128xf32>
    %2068 = arith.maximumf %2066, %2067 : vector<2x128xf32>
    %2069 = arith.mulf %2068, %2068 : vector<2x128xf32>
    %cst_365 = arith.constant 1.000000e+00 : f32
    %2070 = vector.broadcast %cst_365 : f32 to vector<2x128xf32>
    %2071 = arith.subf %96, %2070 : vector<2x128xf32>
    %2072 = arith.mulf %2069, %2071 : vector<2x128xf32>
    %cst_366 = arith.constant 1.000000e+00 : f32
    %2073 = vector.broadcast %cst_366 : f32 to vector<2x128xf32>
    %2074 = arith.addf %2072, %2073 : vector<2x128xf32>
    %2075 = arith.mulf %2074, %2074 : vector<2x128xf32>
    %cst_367 = arith.constant 12.566371 : f32
    %2076 = vector.broadcast %cst_367 : f32 to vector<2x128xf32>
    %2077 = arith.mulf %2076, %2075 : vector<2x128xf32>
    %2078 = arith.mulf %2054, %100 : vector<2x128xf32>
    %2079 = arith.addf %2078, %98 : vector<2x128xf32>
    %cst_368 = arith.constant 9.99999997E-7 : f32
    %2080 = vector.broadcast %cst_368 : f32 to vector<2x128xf32>
    %2081 = arith.addf %2079, %2080 : vector<2x128xf32>
    %2082 = arith.mulf %2077, %2081 : vector<2x128xf32>
    %2083 = arith.mulf %2061, %100 : vector<2x128xf32>
    %2084 = arith.addf %2083, %98 : vector<2x128xf32>
    %cst_369 = arith.constant 9.99999997E-7 : f32
    %2085 = vector.broadcast %cst_369 : f32 to vector<2x128xf32>
    %2086 = arith.addf %2084, %2085 : vector<2x128xf32>
    %2087 = arith.mulf %2082, %2086 : vector<2x128xf32>
    %2088 = tpu.reciprocal %2087 {approx = true} : vector<2x128xf32> -> vector<2x128xf32>
    %2089 = arith.mulf %96, %2088 : vector<2x128xf32>
    %2090 = arith.mulf %2054, %1939 : vector<2x128xf32>
    %2091 = arith.mulf %108, %1983 : vector<2x128xf32>
    %2092 = arith.addf %102, %2091 : vector<2x128xf32>
    %2093 = arith.mulf %2089, %2092 : vector<2x128xf32>
    %2094 = arith.addf %117, %2093 : vector<2x128xf32>
    %2095 = arith.mulf %2094, %2090 : vector<2x128xf32>
    %2096 = vector.broadcast %1919 : f32 to vector<2x128xf32>
    %2097 = arith.mulf %2095, %2096 : vector<2x128xf32>
    %2098 = arith.mulf %110, %1983 : vector<2x128xf32>
    %2099 = arith.addf %104, %2098 : vector<2x128xf32>
    %2100 = arith.mulf %2089, %2099 : vector<2x128xf32>
    %2101 = arith.addf %122, %2100 : vector<2x128xf32>
    %2102 = arith.mulf %2101, %2090 : vector<2x128xf32>
    %2103 = vector.broadcast %1920 : f32 to vector<2x128xf32>
    %2104 = arith.mulf %2102, %2103 : vector<2x128xf32>
    %2105 = arith.mulf %112, %1983 : vector<2x128xf32>
    %2106 = arith.addf %106, %2105 : vector<2x128xf32>
    %2107 = arith.mulf %2089, %2106 : vector<2x128xf32>
    %2108 = arith.addf %127, %2107 : vector<2x128xf32>
    %2109 = arith.mulf %2108, %2090 : vector<2x128xf32>
    %2110 = vector.broadcast %1921 : f32 to vector<2x128xf32>
    %2111 = arith.mulf %2109, %2110 : vector<2x128xf32>
    %cst_370 = arith.constant 9.99999974E-6 : f32
    %2112 = vector.broadcast %cst_370 : f32 to vector<2x128xf32>
    %2113 = arith.addf %2033, %2112 : vector<2x128xf32>
    %cst_371 = arith.constant 9.99999974E-6 : f32
    %2114 = vector.broadcast %cst_371 : f32 to vector<2x128xf32>
    %2115 = arith.addf %2097, %2114 : vector<2x128xf32>
    %2116 = arith.divf %2113, %2115 : vector<2x128xf32>
    %2117 = math.log %2116 : vector<2x128xf32>
    %2118 = math.absf %2117 : vector<2x128xf32>
    %2119 = arith.addf %1912, %2118 : vector<2x128xf32>
    %cst_372 = arith.constant 9.99999974E-6 : f32
    %2120 = vector.broadcast %cst_372 : f32 to vector<2x128xf32>
    %2121 = arith.addf %2040, %2120 : vector<2x128xf32>
    %cst_373 = arith.constant 9.99999974E-6 : f32
    %2122 = vector.broadcast %cst_373 : f32 to vector<2x128xf32>
    %2123 = arith.addf %2104, %2122 : vector<2x128xf32>
    %2124 = arith.divf %2121, %2123 : vector<2x128xf32>
    %2125 = math.log %2124 : vector<2x128xf32>
    %2126 = math.absf %2125 : vector<2x128xf32>
    %2127 = arith.addf %2119, %2126 : vector<2x128xf32>
    %cst_374 = arith.constant 9.99999974E-6 : f32
    %2128 = vector.broadcast %cst_374 : f32 to vector<2x128xf32>
    %2129 = arith.addf %2047, %2128 : vector<2x128xf32>
    %cst_375 = arith.constant 9.99999974E-6 : f32
    %2130 = vector.broadcast %cst_375 : f32 to vector<2x128xf32>
    %2131 = arith.addf %2111, %2130 : vector<2x128xf32>
    %2132 = arith.divf %2129, %2131 : vector<2x128xf32>
    %2133 = math.log %2132 : vector<2x128xf32>
    %2134 = math.absf %2133 : vector<2x128xf32>
    %2135 = arith.addf %2127, %2134 : vector<2x128xf32>
    %2136 = vector.shape_cast %2135 : vector<2x128xf32> to vector<1x1x2x128xf32>
    %c0_376 = arith.constant 0 : index
    %c0_377 = arith.constant 0 : index
    %c0_378 = arith.constant 0 : index
    %c0_379 = arith.constant 0 : index
    %2137 = vector.load %arg5[%c0_376, %c0_377, %c0_378, %c0_379] : memref<1x1x2x128xf32, #tpu.memory_space<vmem>>, vector<1x1x2x128xf32>
    tpu.vector_store %arg5[%c0_376, %c0_377, %c0_378, %c0_379], %2136 {strides = array<i32>} : memref<1x1x2x128xf32, #tpu.memory_space<vmem>>, vector<1x1x2x128xf32>,
    return
  }
  func.func @transform_0(%arg0: i32, %arg1: i32) -> i32 {
    %c0_i32 = arith.constant 0 : i32
    %c0_i32_0 = arith.constant 0 : i32
    return %c0_i32 : i32
  }
  func.func @transform_1(%arg0: i32, %arg1: i32) -> (i32, i32, i32) {
    %c0_i32 = arith.constant 0 : i32
    %c0_i32_0 = arith.constant 0 : i32
    %c0_i32_1 = arith.constant 0 : i32
    return %c0_i32, %arg1, %c0_i32_0 : i32, i32, i32
  }
  func.func @transform_2(%arg0: i32, %arg1: i32) -> (i32, i32, i32, i32) {
    %c0_i32 = arith.constant 0 : i32
    %c0_i32_0 = arith.constant 0 : i32
    %c0_i32_1 = arith.constant 0 : i32
    return %arg0, %c0_i32, %arg1, %c0_i32_0 : i32, i32, i32, i32
  }
  func.func @transform_3(%arg0: i32, %arg1: i32) -> (i32, i32, i32, i32) {
    %c0_i32 = arith.constant 0 : i32
    %c0_i32_0 = arith.constant 0 : i32
    %c0_i32_1 = arith.constant 0 : i32
    return %arg0, %arg1, %c0_i32, %c0_i32_0 : i32, i32, i32, i32
  }
}

</mosaic_0001>

<llo_original>
// kernel: rendering_loss.1
$region0: #{rendering_loss.1}
  #allocation0 [shape = 'u32[]', space=smem, size = 0x4, offset = 0x4, fixed_abs, tag = 'smem constant byte address 0x4 - core index']
  #allocation1 [shape = 'u32[72,128]{1,0:T(1,128)}', space=vmem, size = 0x9000, scoped, tag = 'internal scratch']
  %s0 = inlined_call_operand.vmem [shape: f32[81], index: 0, kind: input, shape index: {}]
  %s1 = inlined_call_operand.vmem [shape: f32[2,2,128], index: 1, kind: input, shape index: {}]
  %s2 = inlined_call_operand.vmem [shape: f32[2,24,2,128], index: 2, kind: input, shape index: {}]
  %s3 = inlined_call_operand.vmem [shape: f32[2,1,2,128], index: 3, kind: output, shape index: {}]
  %s4 = sld [smem:[#allocation0]]
  $region49: #{rendering_loss.1} parent=0
    _
  %s6 = ssub.s32 1, %s4
  %s7 = scalar_select 0, %s6, %s4
  $region1: #{rendering_loss.1} parent=0
    #allocation2 [shape = 'u8[512]{0}', space=smem, size = 0x200, scoped, tag = 'input window, operand 0, single buffered']
    #allocation3 [shape = 's32[2]{0}', space=sflag, size = 0x8, scoped, tag = 'scoped memory for rendering_loss.1']
    %8 = vsyncpa [#allocation3], 0
    loop: start=0, step=1, limit=4
    $region2: #{rendering_loss.1} parent=1 // loop_pre_header
      _
    $region3: #{rendering_loss.1} parent=1 // loop_header
      %s10 = sphi 0, %s14
      %p11 = scmp.ge.s32.totalorder %s10, 4
      %s17 = sphi 0, %s29
      %s18 = sphi 0, %s25
      %s19 = sphi 0, %s17
      %s20 = sphi 0, %s18
      %s21 = sphi 0, %s19
      %s22 = sphi 0, %s20
      %s30 = sphi 0, %s30
      %s32 = sphi 0, %s30
      %s33 = sphi 0, %s32
      %s47 = sphi 0, %s33
      %s53 = sphi 0, %s55
      %s56 = sphi 0, %s53
      %s57 = sphi 0, %s56
      %s73 = sphi 0, %s57
      %s81 = sphi 0, %s83
      %s84 = sphi 0, %s81
      %s85 = sphi 0, %s84
      %s101 = sphi 0, %s85
      %s109 = sphi 0, %s111
      %s112 = sphi 0, %s109
      %s113 = sphi 0, %s112
      %s129 = sphi 0, %s113
    $region4: #{rendering_loss.1} parent=1 // loop_header_branch
      %13 = sbr.rel (%p11) target = $region8
    $region5: #{rendering_loss.1} parent=1 // loop_body
      %s15 = ssub.s32 %s10, 1
      %s16 = ssub.s32 %s10, 2
      %s23 = sadd.s32 1, %s18
      %p24 = scmp.ge.s32.totalorder %s23, 1
      %s25 = scalar_select %p24, 0, %s23
      %s26 = sadd.s32 1, %s17
      %s27 = scalar_select %p24, %s26, %s17
      %p28 = scmp.ge.s32.totalorder %s27, 2
      %s29 = scalar_select %p28, 0, %s27
      %s31 = sadd.s32 %s30, 1
      %p34 = scmp.eq.s32.totalorder %s10, 1
      %p35 = scmp.ne.s32.totalorder %s30, %s32
      %p36 = scmp.eq.s32.totalorder %s10, 0
      %p37 = por %p35, %p36
      %p38 = scmp.ne.s32.totalorder %s30, %s32
      %p39 = scmp.eq.s32.totalorder %s15, 1
      %p40 = por %p38, %p39
      %p41 = scmp.ne.s32.totalorder %s32, %s33
      %p42 = scmp.eq.s32.totalorder %s15, 0
      %p43 = por %p41, %p42
      %p44 = scmp.ne.s32.totalorder %s32, %s33
      %p45 = scmp.eq.s32.totalorder %s16, 1
      %p46 = por %p44, %p45
      %p48 = scmp.ne.s32.totalorder %s33, %s47
      %p49 = scmp.eq.s32.totalorder %s16, 0
      %p50 = por %p48, %p49
      %s51 = ssub.s32 %s18, %s25
      %p52 = scmp.eq.s32.totalorder %s51, 0
      %s54 = sadd.s32 %s53, 1
      %s55 = scalar_select %p52, %s53, %s54
      %p58 = pneg %p52
      %p59 = scmp.eq.s32.totalorder %s10, 1
      %p60 = por %p58, %p59
      %p61 = scmp.ne.s32.totalorder %s53, %s56
      %p62 = scmp.eq.s32.totalorder %s10, 0
      %p63 = por %p61, %p62
      %p64 = scmp.ne.s32.totalorder %s53, %s56
      %p65 = scmp.eq.s32.totalorder %s15, 1
      %p66 = por %p64, %p65
      %p67 = scmp.ne.s32.totalorder %s56, %s57
      %p68 = scmp.eq.s32.totalorder %s15, 0
      %p69 = por %p67, %p68
      %p70 = scmp.ne.s32.totalorder %s56, %s57
      %p71 = scmp.eq.s32.totalorder %s16, 1
      %p72 = por %p70, %p71
      %p74 = scmp.ne.s32.totalorder %s57, %s73
      %p75 = scmp.eq.s32.totalorder %s16, 0
      %p76 = por %p74, %p75
      %s77 = ssub.s32 %s17, %s29
      %s78 = ssub.s32 %s18, %s25
      %s79 = sor.u32 %s77, %s78
      %p80 = scmp.eq.s32.totalorder %s79, 0
      %s82 = sadd.s32 %s81, 1
      %s83 = scalar_select %p80, %s81, %s82
      %p86 = pneg %p80
      %p87 = scmp.eq.s32.totalorder %s10, 1
      %p88 = por %p86, %p87
      %p89 = scmp.ne.s32.totalorder %s81, %s84
      %p90 = scmp.eq.s32.totalorder %s10, 0
      %p91 = por %p89, %p90
      %p92 = scmp.ne.s32.totalorder %s81, %s84
      %p93 = scmp.eq.s32.totalorder %s15, 1
      %p94 = por %p92, %p93
      %p95 = scmp.ne.s32.totalorder %s84, %s85
      %p96 = scmp.eq.s32.totalorder %s15, 0
      %p97 = por %p95, %p96
      %p98 = scmp.ne.s32.totalorder %s84, %s85
      %p99 = scmp.eq.s32.totalorder %s16, 1
      %p100 = por %p98, %p99
      %p102 = scmp.ne.s32.totalorder %s85, %s101
      %p103 = scmp.eq.s32.totalorder %s16, 0
      %p104 = por %p102, %p103
      %s105 = ssub.s32 %s17, %s29
      %s106 = ssub.s32 %s18, %s25
      %s107 = sor.u32 %s105, %s106
      %p108 = scmp.eq.s32.totalorder %s107, 0
      %s110 = sadd.s32 %s109, 1
      %s111 = scalar_select %p108, %s109, %s110
      %p114 = pneg %p108
      %p115 = scmp.eq.s32.totalorder %s10, 1
      %p116 = por %p114, %p115
      %p117 = scmp.ne.s32.totalorder %s109, %s112
      %p118 = scmp.eq.s32.totalorder %s10, 0
      %p119 = por %p117, %p118
      %p120 = scmp.ne.s32.totalorder %s109, %s112
      %p121 = scmp.eq.s32.totalorder %s15, 1
      %p122 = por %p120, %p121
      %p123 = scmp.ne.s32.totalorder %s112, %s113
      %p124 = scmp.eq.s32.totalorder %s15, 0
      %p125 = por %p123, %p124
      %p126 = scmp.ne.s32.totalorder %s112, %s113
      %p127 = scmp.eq.s32.totalorder %s16, 1
      %p128 = por %p126, %p127
      %p130 = scmp.ne.s32.totalorder %s113, %s129
      %p131 = scmp.eq.s32.totalorder %s16, 0
      %p132 = por %p130, %p131
      %p133 = scmp.le.s32.totalorder 1, %s10
      %p134 = scmp.lt.s32.totalorder %s10, 3
      %p135 = pnand %p133, %p134
      %p136 = pneg %p135
      // Predicated region
      $region9: #{rendering_loss.1} parent=5 // pred_check
        _
      $region10: #{rendering_loss.1} parent=5 // pred_check_branch
        %138 = sbr.rel (%p135) target = $region12
      $region11: #{rendering_loss.1} parent=5 // pred_region
        %s139 = ssub.s32 %s10, 1
        // Predicated region
        $region13: #{rendering_loss.1} parent=11 // pred_check
          %p140 = pneg %p43
        $region14: #{rendering_loss.1} parent=11 // pred_check_branch
          %142 = sbr.rel (%p140) target = $region16
        $region15: #{rendering_loss.1} parent=11 // pred_region
          %144 = vsyncadd [#allocation3], 0
          %s146 = sshll.u32 %s0, 4
          %s147 = int_to_ptr.vmem [resolvable:$true] %s146
          %149 = dma.vmem_to_smem %s147, 16, [#allocation2], [#allocation3]
        $region16: #{rendering_loss.1} parent=11 // pred_fallthru
          _
        // Predicated region
        $region17: #{rendering_loss.1} parent=11 // pred_check
          %p150 = pneg %p69
        $region18: #{rendering_loss.1} parent=11 // pred_check_branch
          %152 = sbr.rel (%p150) target = $region20
        $region19: #{rendering_loss.1} parent=11 // pred_region
          %p153 = scmp.lt.s32.totalorder %s20, 0
          %s154 = scalar_select %p153, %s20, 0
          %s155 = smul.addr %s154, 2
          %s156 = scalar_lea.vmem %s1, %s155
        $region20: #{rendering_loss.1} parent=11 // pred_fallthru
          _
      $region12: #{rendering_loss.1} parent=5 // pred_fallthru
        _
      %p157 = scmp.lt.s32.totalorder %s10, 2
      // Predicated region
      $region21: #{rendering_loss.1} parent=5 // pred_check
        %p158 = pneg %p157
      $region22: #{rendering_loss.1} parent=5 // pred_check_branch
        %160 = sbr.rel (%p158) target = $region24
      $region23: #{rendering_loss.1} parent=5 // pred_region
        // Predicated region
        $region25: #{rendering_loss.1} parent=23 // pred_check
          %p161 = pneg %p91
        $region26: #{rendering_loss.1} parent=23 // pred_check_branch
          %163 = sbr.rel (%p161) target = $region28
        $region27: #{rendering_loss.1} parent=23 // pred_region
          %p164 = scmp.lt.s32.totalorder %s17, 1
          %s165 = scalar_select %p164, %s17, 1
          %p166 = scmp.lt.s32.totalorder %s18, 0
          %s167 = scalar_select %p166, %s18, 0
          %s168 = smul.addr %s165, 24
          %s169 = sadd.s32 %s167, %s168
          %s170 = smul.addr %s169, 2
          %s171 = scalar_lea.vmem %s2, %s170
        $region28: #{rendering_loss.1} parent=23 // pred_fallthru
          _
      $region24: #{rendering_loss.1} parent=5 // pred_fallthru
        _
      %p172 = scmp.le.s32.totalorder 1, %s10
      %p173 = scmp.lt.s32.totalorder %s10, 3
      %p174 = pnand %p172, %p173
      %p175 = pneg %p174
      // Predicated region
      $region29: #{rendering_loss.1} parent=5 // pred_check
        _
      $region30: #{rendering_loss.1} parent=5 // pred_check_branch
        %177 = sbr.rel (%p174) target = $region32
      $region31: #{rendering_loss.1} parent=5 // pred_region
        %s178 = ssub.s32 %s10, 1
        // Predicated region
        $region33: #{rendering_loss.1} parent=31 // pred_check
          %p179 = pneg %p43
        $region34: #{rendering_loss.1} parent=31 // pred_check_branch
          %181 = sbr.rel (%p179) target = $region36
        $region35: #{rendering_loss.1} parent=31 // pred_region
          %183 = dma.done [#allocation3], 16
        $region36: #{rendering_loss.1} parent=31 // pred_fallthru
          _
        %184 = sfence
        %p185 = pneg %p43
        %p186 = pneg %p40
        %p187 = scmp.lt.s32.totalorder %s20, 0
        %s188 = scalar_select %p187, %s20, 0
        %s189 = smul.addr %s188, 2
        %s190 = scalar_lea.vmem %s1, %s189
        %p191 = pneg %p69
        %p192 = pneg %p66
        %p193 = scmp.lt.s32.totalorder %s19, 1
        %s194 = scalar_select %p193, %s19, 1
        %p195 = scmp.lt.s32.totalorder %s20, 0
        %s196 = scalar_select %p195, %s20, 0
        %s197 = smul.addr %s194, 24
        %s198 = sadd.s32 %s196, %s197
        %s199 = smul.addr %s198, 2
        %s200 = scalar_lea.vmem %s2, %s199
        %p201 = pneg %p97
        %p202 = pneg %p94
        %p203 = pneg %p125
        %p204 = pneg %p122
        %p205 = scmp.lt.s32.totalorder %s19, 1
        %s206 = scalar_select %p205, %s19, 1
        %p207 = scmp.lt.s32.totalorder %s20, 0
        %s208 = scalar_select %p207, %s20, 0
        %s209 = sadd.s32 %s208, %s206
        %s210 = smul.addr %s209, 2
        %s211 = scalar_lea.vmem %s3, %s210
        %p212 = scmp.lt.s32.totalorder %s20, 0
        %s213 = scalar_select %p212, %s20, 0
        %s214 = smul.addr %s213, 2
        %s215 = scalar_lea.vmem %s1, %s214
        %p216 = scmp.lt.s32.totalorder %s19, 1
        %s217 = scalar_select %p216, %s19, 1
        %p218 = scmp.lt.s32.totalorder %s20, 0
        %s219 = scalar_select %p218, %s20, 0
        %s220 = smul.addr %s217, 24
        %s221 = sadd.s32 %s219, %s220
        %s222 = smul.addr %s221, 2
        %s223 = scalar_lea.vmem %s2, %s222
        %p224 = scmp.lt.s32.totalorder %s19, 1
        %s225 = scalar_select %p224, %s19, 1
        %p226 = scmp.lt.s32.totalorder %s20, 0
        %s227 = scalar_select %p226, %s20, 0
        %s228 = sadd.s32 %s227, %s225
        %s229 = smul.addr %s228, 2
        %s230 = scalar_lea.vmem %s3, %s229
        %v231 = vld [vmem:[%s215] sm:$0x3]
        %s232 = scalar_lea.vmem %s215, 2
        %v233 = vld [vmem:[%s232] sm:$0x3]
        %v234 = vld [vmem:[%s223] sm:$0x3]
        %s235 = scalar_lea.vmem %s223, 2
        %v236 = vld [vmem:[%s235] sm:$0x3]
        %s237 = scalar_lea.vmem %s223, 4
        %v238 = vld [vmem:[%s237] sm:$0x3]
        %v239 = vmul.f32 %v234, %v234
        %v240 = vmul.f32 %v236, %v236
        %v241 = vadd.f32 %v239, %v240
        %v242 = vmul.f32 %v238, %v238
        %v243 = vadd.f32 %v241, %v242
        %v244 = vadd.f32 %v243, 1e-12
        %v245 = vrsqrt.pop %v244
        %v246 = vmul.f32 %v245, %v244
        %v247 = vmul.f32 %v246, %v245
        %v248 = vmul.f32 0.5, %v247
        %v249 = vsub.f32 1.5, %v248
        %v250 = vmul.f32 %v245, %v249
        %vm251 = vweird.f32 %v244
        %vm252 = vweird.f32 %v245
        %vm253 = vmor %vm251, %vm252
        %v254 = vsel %vm253, %v245, %v250
        %v255 = vmul.f32 %v234, %v254
        %v256 = vmul.f32 %v236, %v254
        %v257 = vmul.f32 %v238, %v254
        %s258 = scalar_lea.vmem %s223, 12
        %v259 = vld [vmem:[%s258] sm:$0x3]
        %s260 = scalar_lea.vmem %s223, 14
        %v261 = vld [vmem:[%s260] sm:$0x3]
        %v262 = vadd.f32 %v259, %v261
        %s263 = scalar_lea.vmem %s223, 16
        %v264 = vld [vmem:[%s263] sm:$0x3]
        %v265 = vadd.f32 %v262, %v264
        %v266 = vmul.f32 %v265, 0.33333334
        %v267 = vmul.f32 %v266, %v266
        %v268 = vmax.f32 %v267, 0.001
        %v269 = vmul.f32 %v268, %v268
        %v270 = vmul.f32 %v268, 0.5
        %v271 = vsub.f32 1.0, %v270
        %s272 = scalar_lea.vmem %s223, 18
        %v273 = vld [vmem:[%s272] sm:$0x3]
        %s274 = scalar_lea.vmem %s223, 20
        %v275 = vld [vmem:[%s274] sm:$0x3]
        %s276 = scalar_lea.vmem %s223, 22
        %v277 = vld [vmem:[%s276] sm:$0x3]
        %v278 = vsub.f32 1.0, %v273
        %v279 = vsub.f32 1.0, %v275
        %v280 = vsub.f32 1.0, %v277
        %s281 = scalar_lea.vmem %s223, 6
        %v282 = vld [vmem:[%s281] sm:$0x3]
        %v283 = vmul.f32 %v282, %v278
        %v284 = vmul.f32 %v283, 0.31830987
        %s285 = scalar_lea.vmem %s223, 8
        %v286 = vld [vmem:[%s285] sm:$0x3]
        %v287 = vmul.f32 %v286, %v279
        %v288 = vmul.f32 %v287, 0.31830987
        %s289 = scalar_lea.vmem %s223, 10
        %v290 = vld [vmem:[%s289] sm:$0x3]
        %v291 = vmul.f32 %v290, %v280
        %v292 = vmul.f32 %v291, 0.31830987
        %s293 = scalar_lea.vmem %s223, 24
        %v294 = vld [vmem:[%s293] sm:$0x3]
        %s295 = scalar_lea.vmem %s223, 26
        %v296 = vld [vmem:[%s295] sm:$0x3]
        %s297 = scalar_lea.vmem %s223, 28
        %v298 = vld [vmem:[%s297] sm:$0x3]
        %v299 = vmul.f32 %v294, %v294
        %v300 = vmul.f32 %v296, %v296
        %v301 = vadd.f32 %v299, %v300
        %v302 = vmul.f32 %v298, %v298
        %v303 = vadd.f32 %v301, %v302
        %v304 = vadd.f32 %v303, 1e-12
        %v305 = vrsqrt.pop %v304
        %v306 = vmul.f32 %v305, %v304
        %v307 = vmul.f32 %v306, %v305
        %v308 = vmul.f32 0.5, %v307
        %v309 = vsub.f32 1.5, %v308
        %v310 = vmul.f32 %v305, %v309
        %vm311 = vweird.f32 %v304
        %vm312 = vweird.f32 %v305
        %vm313 = vmor %vm311, %vm312
        %v314 = vsel %vm313, %v305, %v310
        %v315 = vmul.f32 %v294, %v314
        %v316 = vmul.f32 %v296, %v314
        %v317 = vmul.f32 %v298, %v314
        %s318 = scalar_lea.vmem %s223, 36
        %v319 = vld [vmem:[%s318] sm:$0x3]
        %s320 = scalar_lea.vmem %s223, 38
        %v321 = vld [vmem:[%s320] sm:$0x3]
        %v322 = vadd.f32 %v319, %v321
        %s323 = scalar_lea.vmem %s223, 40
        %v324 = vld [vmem:[%s323] sm:$0x3]
        %v325 = vadd.f32 %v322, %v324
        %v326 = vmul.f32 %v325, 0.33333334
        %v327 = vmul.f32 %v326, %v326
        %v328 = vmax.f32 %v327, 0.001
        %v329 = vmul.f32 %v328, %v328
        %v330 = vmul.f32 %v328, 0.5
        %v331 = vsub.f32 1.0, %v330
        %s332 = scalar_lea.vmem %s223, 42
        %v333 = vld [vmem:[%s332] sm:$0x3]
        %s334 = scalar_lea.vmem %s223, 44
        %v335 = vld [vmem:[%s334] sm:$0x3]
        %s336 = scalar_lea.vmem %s223, 46
        %v337 = vld [vmem:[%s336] sm:$0x3]
        %v338 = vsub.f32 1.0, %v333
        %v339 = vsub.f32 1.0, %v335
        %v340 = vsub.f32 1.0, %v337
        %s341 = scalar_lea.vmem %s223, 30
        %v342 = vld [vmem:[%s341] sm:$0x3]
        %v343 = vmul.f32 %v342, %v338
        %v344 = vmul.f32 %v343, 0.31830987
        %s345 = scalar_lea.vmem %s223, 32
        %v346 = vld [vmem:[%s345] sm:$0x3]
        %v347 = vmul.f32 %v346, %v339
        %v348 = vmul.f32 %v347, 0.31830987
        %s349 = scalar_lea.vmem %s223, 34
        %v350 = vld [vmem:[%s349] sm:$0x3]
        %v351 = vmul.f32 %v350, %v340
        %v352 = vmul.f32 %v351, 0.31830987
        %s353 = sld [smem:[#allocation2]]
        %s354 = sld [smem:[#allocation2 + $0x1]]
        %s355 = sld [smem:[#allocation2 + $0x2]]
        %s356 = sld [smem:[#allocation2 + $0x3]]
        %s357 = sld [smem:[#allocation2 + $0x4]]
        %s358 = sld [smem:[#allocation2 + $0x5]]
        %s359 = sld [smem:[#allocation2 + $0x6]]
        %s360 = sld [smem:[#allocation2 + $0x7]]
        %s361 = sld [smem:[#allocation2 + $0x8]]
        %v362 = vstv %s353
        %v363 = vsub.f32 %v362, %v231
        %v364 = vstv %s354
        %v365 = vsub.f32 %v364, %v233
        %v366 = vmul.f32 %v363, %v363
        %v367 = vmul.f32 %v365, %v365
        %v368 = vadd.f32 %v366, %v367
        %s369 = smul.f32 %s355, %s355
        %v370 = vstv %s369
        %v371 = vadd.f32 %v368, %v370
        %v372 = vadd.f32 %v371, 1e-12
        %v373 = vrsqrt.pop %v372
        %v374 = vmul.f32 %v373, %v372
        %v375 = vmul.f32 %v374, %v373
        %v376 = vmul.f32 0.5, %v375
        %v377 = vsub.f32 1.5, %v376
        %v378 = vmul.f32 %v373, %v377
        %vm379 = vweird.f32 %v372
        %vm380 = vweird.f32 %v373
        %vm381 = vmor %vm379, %vm380
        %v382 = vsel %vm381, %v373, %v378
        %v383 = vmul.f32 %v363, %v382
        %v384 = vmul.f32 %v365, %v382
        %v385 = vstv %s355
        %v386 = vmul.f32 %v385, %v382
        %v387 = vmul.f32 %v382, %v382
        %v388 = vstv %s356
        %v389 = vsub.f32 %v388, %v231
        %v390 = vstv %s357
        %v391 = vsub.f32 %v390, %v233
        %v392 = vmul.f32 %v389, %v389
        %v393 = vmul.f32 %v391, %v391
        %v394 = vadd.f32 %v392, %v393
        %s395 = smul.f32 %s358, %s358
        %v396 = vstv %s395
        %v397 = vadd.f32 %v394, %v396
        %v398 = vadd.f32 %v397, 1e-12
        %v399 = vrsqrt.pop %v398
        %v400 = vmul.f32 %v399, %v398
        %v401 = vmul.f32 %v400, %v399
        %v402 = vmul.f32 0.5, %v401
        %v403 = vsub.f32 1.5, %v402
        %v404 = vmul.f32 %v399, %v403
        %vm405 = vweird.f32 %v398
        %vm406 = vweird.f32 %v399
        %vm407 = vmor %vm405, %vm406
        %v408 = vsel %vm407, %v399, %v404
        %v409 = vmul.f32 %v389, %v408
        %v410 = vmul.f32 %v391, %v408
        %v411 = vstv %s358
        %v412 = vmul.f32 %v411, %v408
        %v413 = vadd.f32 %v383, %v409
        %v414 = vadd.f32 %v384, %v410
        %v415 = vadd.f32 %v386, %v412
        %v416 = vmul.f32 %v413, %v413
        %v417 = vmul.f32 %v414, %v414
        %v418 = vadd.f32 %v416, %v417
        %v419 = vmul.f32 %v415, %v415
        %v420 = vadd.f32 %v418, %v419
        %v421 = vadd.f32 %v420, 1e-12
        %v422 = vrsqrt.pop %v421
        %v423 = vmul.f32 %v422, %v421
        %v424 = vmul.f32 %v423, %v422
        %v425 = vmul.f32 0.5, %v424
        %v426 = vsub.f32 1.5, %v425
        %v427 = vmul.f32 %v422, %v426
        %vm428 = vweird.f32 %v421
        %vm429 = vweird.f32 %v422
        %vm430 = vmor %vm428, %vm429
        %v431 = vsel %vm430, %v422, %v427
        %v432 = vmul.f32 %v413, %v431
        %v433 = vmul.f32 %v414, %v431
        %v434 = vmul.f32 %v415, %v431
        %v435 = vmul.f32 %v409, %v432
        %v436 = vmul.f32 %v410, %v433
        %v437 = vadd.f32 %v435, %v436
        %v438 = vmul.f32 %v412, %v434
        %v439 = vadd.f32 %v437, %v438
        %v440 = vmax.f32 %v439, 0.0001
        %v441 = vmul.f32 %v440, -5.55473
        %v442 = vsub.f32 %v441, 6.98316
        %v443 = vmul.f32 %v442, %v440
        %v444 = vpow.pop %v443
        %v445 = vmul.f32 %v255, %v383
        %v446 = vmul.f32 %v256, %v384
        %v447 = vadd.f32 %v445, %v446
        %v448 = vmul.f32 %v257, %v386
        %v449 = vadd.f32 %v447, %v448
        %v450 = vmax.f32 %v449, 0.0
        %v451 = vmul.f32 %v255, %v409
        %v452 = vmul.f32 %v256, %v410
        %v453 = vadd.f32 %v451, %v452
        %v454 = vmul.f32 %v257, %v412
        %v455 = vadd.f32 %v453, %v454
        %v456 = vmax.f32 %v455, 0.0001
        %v457 = vmul.f32 %v255, %v432
        %v458 = vmul.f32 %v256, %v433
        %v459 = vadd.f32 %v457, %v458
        %v460 = vmul.f32 %v257, %v434
        %v461 = vadd.f32 %v459, %v460
        %v462 = vmax.f32 %v461, 0.0
        %v463 = vmul.f32 %v462, %v462
        %v464 = vsub.f32 %v269, 1.0
        %v465 = vmul.f32 %v463, %v464
        %v466 = vadd.f32 %v465, 1.0
        %v467 = vmul.f32 %v466, %v466
        %v468 = vmul.f32 %v467, 12.566371
        %v469 = vmul.f32 %v450, %v271
        %v470 = vadd.f32 %v469, %v270
        %v471 = vadd.f32 %v470, 1e-06
        %v472 = vmul.f32 %v468, %v471
        %v473 = vmul.f32 %v456, %v271
        %v474 = vadd.f32 %v473, %v270
        %v475 = vadd.f32 %v474, 1e-06
        %v476 = vmul.f32 %v472, %v475
        %v477 = vrcp.pop %v476
        %v478 = vmul.f32 %v269, %v477
        %v479 = vmul.f32 %v450, %v387
        %v480 = vmul.f32 %v278, %v444
        %v481 = vadd.f32 %v273, %v480
        %v482 = vmul.f32 %v478, %v481
        %v483 = vadd.f32 %v284, %v482
        %v484 = vmul.f32 %v483, %v479
        %v485 = vstv %s359
        %v486 = vmul.f32 %v484, %v485
        %v487 = vmul.f32 %v279, %v444
        %v488 = vadd.f32 %v275, %v487
        %v489 = vmul.f32 %v478, %v488
        %v490 = vadd.f32 %v288, %v489
        %v491 = vmul.f32 %v490, %v479
        %v492 = vstv %s360
        %v493 = vmul.f32 %v491, %v492
        %v494 = vmul.f32 %v280, %v444
        %v495 = vadd.f32 %v277, %v494
        %v496 = vmul.f32 %v478, %v495
        %v497 = vadd.f32 %v292, %v496
        %v498 = vmul.f32 %v497, %v479
        %v499 = vstv %s361
        %v500 = vmul.f32 %v498, %v499
        %v501 = vmul.f32 %v315, %v383
        %v502 = vmul.f32 %v316, %v384
        %v503 = vadd.f32 %v501, %v502
        %v504 = vmul.f32 %v317, %v386
        %v505 = vadd.f32 %v503, %v504
        %v506 = vmax.f32 %v505, 0.0
        %v507 = vmul.f32 %v315, %v409
        %v508 = vmul.f32 %v316, %v410
        %v509 = vadd.f32 %v507, %v508
        %v510 = vmul.f32 %v317, %v412
        %v511 = vadd.f32 %v509, %v510
        %v512 = vmax.f32 %v511, 0.0001
        %v513 = vmul.f32 %v315, %v432
        %v514 = vmul.f32 %v316, %v433
        %v515 = vadd.f32 %v513, %v514
        %v516 = vmul.f32 %v317, %v434
        %v517 = vadd.f32 %v515, %v516
        %v518 = vmax.f32 %v517, 0.0
        %v519 = vmul.f32 %v518, %v518
        %v520 = vsub.f32 %v329, 1.0
        %v521 = vmul.f32 %v519, %v520
        %v522 = vadd.f32 %v521, 1.0
        %v523 = vmul.f32 %v522, %v522
        %v524 = vmul.f32 %v523, 12.566371
        %v525 = vmul.f32 %v506, %v331
        %v526 = vadd.f32 %v525, %v330
        %v527 = vadd.f32 %v526, 1e-06
        %v528 = vmul.f32 %v524, %v527
        %v529 = vmul.f32 %v512, %v331
        %v530 = vadd.f32 %v529, %v330
        %v531 = vadd.f32 %v530, 1e-06
        %v532 = vmul.f32 %v528, %v531
        %v533 = vrcp.pop %v532
        %v534 = vmul.f32 %v329, %v533
        %v535 = vmul.f32 %v506, %v387
        %v536 = vmul.f32 %v338, %v444
        %v537 = vadd.f32 %v333, %v536
        %v538 = vmul.f32 %v534, %v537
        %v539 = vadd.f32 %v344, %v538
        %v540 = vmul.f32 %v539, %v535
        %v541 = vmul.f32 %v540, %v485
        %v542 = vmul.f32 %v339, %v444
        %v543 = vadd.f32 %v335, %v542
        %v544 = vmul.f32 %v534, %v543
        %v545 = vadd.f32 %v348, %v544
        %v546 = vmul.f32 %v545, %v535
        %v547 = vmul.f32 %v546, %v492
        %v548 = vmul.f32 %v340, %v444
        %v549 = vadd.f32 %v337, %v548
        %v550 = vmul.f32 %v534, %v549
        %v551 = vadd.f32 %v352, %v550
        %v552 = vmul.f32 %v551, %v535
        %v553 = vmul.f32 %v552, %v499
        %v554 = vadd.f32 %v486, 1e-05
        %v555 = vadd.f32 %v541, 1e-05
        %v556 = vrcp.pop %v555
        %v557 = vmul.f32 %v555, %v556
        %v558 = vsub.f32 1.0, %v557
        %v559 = vmul.f32 %v556, %v558
        %v560 = vadd.f32 %v556, %v559
        %vm561 = vweird.f32 %v555
        %vm562 = vweird.f32 %v556
        %vm563 = vmor %vm561, %vm562
        %v564 = vsel %vm563, %v556, %v560
        %v565 = vand.u32 2147483647, %v555
        %vm566 = vcmp.eq.f32.partialorder %v565, 8.507059e+37
        %v567 = vand.u32 %v555, 2147483648
        %v568 = vor.u32 1.1754944e-38, %v567
        %v569 = vsel %vm566, %v568, %v564
        %v570 = vmul.f32 %v554, %v569
        %v571 = vlog2.pop %v570
        %v572 = vmul.f32 %v571, 0.6931472
        %v573 = vand.u32 2147483647, %v572
        %v574 = vadd.f32 %v573, 0.0
        %v575 = vadd.f32 %v493, 1e-05
        %v576 = vadd.f32 %v547, 1e-05
        %v577 = vrcp.pop %v576
        %v578 = vmul.f32 %v576, %v577
        %v579 = vsub.f32 1.0, %v578
        %v580 = vmul.f32 %v577, %v579
        %v581 = vadd.f32 %v577, %v580
        %vm582 = vweird.f32 %v576
        %vm583 = vweird.f32 %v577
        %vm584 = vmor %vm582, %vm583
        %v585 = vsel %vm584, %v577, %v581
        %v586 = vand.u32 2147483647, %v576
        %vm587 = vcmp.eq.f32.partialorder %v586, 8.507059e+37
        %v588 = vand.u32 %v576, 2147483648
        %v589 = vor.u32 1.1754944e-38, %v588
        %v590 = vsel %vm587, %v589, %v585
        %v591 = vmul.f32 %v575, %v590
        %v592 = vlog2.pop %v591
        %v593 = vmul.f32 %v592, 0.6931472
        %v594 = vand.u32 2147483647, %v593
        %v595 = vadd.f32 %v574, %v594
        %v596 = vadd.f32 %v500, 1e-05
        %v597 = vadd.f32 %v553, 1e-05
        %v598 = vrcp.pop %v597
        %v599 = vmul.f32 %v597, %v598
        %v600 = vsub.f32 1.0, %v599
        %v601 = vmul.f32 %v598, %v600
        %v602 = vadd.f32 %v598, %v601
        %vm603 = vweird.f32 %v597
        %vm604 = vweird.f32 %v598
        %vm605 = vmor %vm603, %vm604
        %v606 = vsel %vm605, %v598, %v602
        %v607 = vand.u32 2147483647, %v597
        %vm608 = vcmp.eq.f32.partialorder %v607, 8.507059e+37
        %v609 = vand.u32 %v597, 2147483648
        %v610 = vor.u32 1.1754944e-38, %v609
        %v611 = vsel %vm608, %v610, %v606
        %v612 = vmul.f32 %v596, %v611
        %v613 = vlog2.pop %v612
        %v614 = vmul.f32 %v613, 0.6931472
        %v615 = vand.u32 2147483647, %v614
        %v616 = vadd.f32 %v595, %v615
        %s617 = sld [smem:[#allocation2 + $0x9]]
        %s618 = sld [smem:[#allocation2 + $0xa]]
        %s619 = sld [smem:[#allocation2 + $0xb]]
        %s620 = sld [smem:[#allocation2 + $0xc]]
        %s621 = sld [smem:[#allocation2 + $0xd]]
        %s622 = sld [smem:[#allocation2 + $0xe]]
        %s623 = sld [smem:[#allocation2 + $0xf]]
        %s624 = sld [smem:[#allocation2 + $0x10]]
        %s625 = sld [smem:[#allocation2 + $0x11]]
        %v626 = vstv %s617
        %v627 = vsub.f32 %v626, %v231
        %v628 = vstv %s618
        %v629 = vsub.f32 %v628, %v233
        %v630 = vmul.f32 %v627, %v627
        %v631 = vmul.f32 %v629, %v629
        %v632 = vadd.f32 %v630, %v631
        %s633 = smul.f32 %s619, %s619
        %v634 = vstv %s633
        %v635 = vadd.f32 %v632, %v634
        %v636 = vadd.f32 %v635, 1e-12
        %v637 = vrsqrt.pop %v636
        %v638 = vmul.f32 %v637, %v636
        %v639 = vmul.f32 %v638, %v637
        %v640 = vmul.f32 0.5, %v639
        %v641 = vsub.f32 1.5, %v640
        %v642 = vmul.f32 %v637, %v641
        %vm643 = vweird.f32 %v636
        %vm644 = vweird.f32 %v637
        %vm645 = vmor %vm643, %vm644
        %v646 = vsel %vm645, %v637, %v642
        %v647 = vmul.f32 %v627, %v646
        %v648 = vmul.f32 %v629, %v646
        %v649 = vstv %s619
        %v650 = vmul.f32 %v649, %v646
        %v651 = vmul.f32 %v646, %v646
        %v652 = vstv %s620
        %v653 = vsub.f32 %v652, %v231
        %v654 = vstv %s621
        %v655 = vsub.f32 %v654, %v233
        %v656 = vmul.f32 %v653, %v653
        %v657 = vmul.f32 %v655, %v655
        %v658 = vadd.f32 %v656, %v657
        %s659 = smul.f32 %s622, %s622
        %v660 = vstv %s659
        %v661 = vadd.f32 %v658, %v660
        %v662 = vadd.f32 %v661, 1e-12
        %v663 = vrsqrt.pop %v662
        %v664 = vmul.f32 %v663, %v662
        %v665 = vmul.f32 %v664, %v663
        %v666 = vmul.f32 0.5, %v665
        %v667 = vsub.f32 1.5, %v666
        %v668 = vmul.f32 %v663, %v667
        %vm669 = vweird.f32 %v662
        %vm670 = vweird.f32 %v663
        %vm671 = vmor %vm669, %vm670
        %v672 = vsel %vm671, %v663, %v668
        %v673 = vmul.f32 %v653, %v672
        %v674 = vmul.f32 %v655, %v672
        %v675 = vstv %s622
        %v676 = vmul.f32 %v675, %v672
        %v677 = vadd.f32 %v647, %v673
        %v678 = vadd.f32 %v648, %v674
        %v679 = vadd.f32 %v650, %v676
        %v680 = vmul.f32 %v677, %v677
        %v681 = vmul.f32 %v678, %v678
        %v682 = vadd.f32 %v680, %v681
        %v683 = vmul.f32 %v679, %v679
        %v684 = vadd.f32 %v682, %v683
        %v685 = vadd.f32 %v684, 1e-12
        %v686 = vrsqrt.pop %v685
        %v687 = vmul.f32 %v686, %v685
        %v688 = vmul.f32 %v687, %v686
        %v689 = vmul.f32 0.5, %v688
        %v690 = vsub.f32 1.5, %v689
        %v691 = vmul.f32 %v686, %v690
        %vm692 = vweird.f32 %v685
        %vm693 = vweird.f32 %v686
        %vm694 = vmor %vm692, %vm693
        %v695 = vsel %vm694, %v686, %v691
        %v696 = vmul.f32 %v677, %v695
        %v697 = vmul.f32 %v678, %v695
        %v698 = vmul.f32 %v679, %v695
        %v699 = vmul.f32 %v673, %v696
        %v700 = vmul.f32 %v674, %v697
        %v701 = vadd.f32 %v699, %v700
        %v702 = vmul.f32 %v676, %v698
        %v703 = vadd.f32 %v701, %v702
        %v704 = vmax.f32 %v703, 0.0001
        %v705 = vmul.f32 %v704, -5.55473
        %v706 = vsub.f32 %v705, 6.98316
        %v707 = vmul.f32 %v706, %v704
        %v708 = vpow.pop %v707
        %v709 = vmul.f32 %v255, %v647
        %v710 = vmul.f32 %v256, %v648
        %v711 = vadd.f32 %v709, %v710
        %v712 = vmul.f32 %v257, %v650
        %v713 = vadd.f32 %v711, %v712
        %v714 = vmax.f32 %v713, 0.0
        %v715 = vmul.f32 %v255, %v673
        %v716 = vmul.f32 %v256, %v674
        %v717 = vadd.f32 %v715, %v716
        %v718 = vmul.f32 %v257, %v676
        %v719 = vadd.f32 %v717, %v718
        %v720 = vmax.f32 %v719, 0.0001
        %v721 = vmul.f32 %v255, %v696
        %v722 = vmul.f32 %v256, %v697
        %v723 = vadd.f32 %v721, %v722
        %v724 = vmul.f32 %v257, %v698
        %v725 = vadd.f32 %v723, %v724
        %v726 = vmax.f32 %v725, 0.0
        %v727 = vmul.f32 %v726, %v726
        %v728 = vmul.f32 %v727, %v464
        %v729 = vadd.f32 %v728, 1.0
        %v730 = vmul.f32 %v729, %v729
        %v731 = vmul.f32 %v730, 12.566371
        %v732 = vmul.f32 %v714, %v271
        %v733 = vadd.f32 %v732, %v270
        %v734 = vadd.f32 %v733, 1e-06
        %v735 = vmul.f32 %v731, %v734
        %v736 = vmul.f32 %v720, %v271
        %v737 = vadd.f32 %v736, %v270
        %v738 = vadd.f32 %v737, 1e-06
        %v739 = vmul.f32 %v735, %v738
        %v740 = vrcp.pop %v739
        %v741 = vmul.f32 %v269, %v740
        %v742 = vmul.f32 %v714, %v651
        %v743 = vmul.f32 %v278, %v708
        %v744 = vadd.f32 %v273, %v743
        %v745 = vmul.f32 %v741, %v744
        %v746 = vadd.f32 %v284, %v745
        %v747 = vmul.f32 %v746, %v742
        %v748 = vstv %s623
        %v749 = vmul.f32 %v747, %v748
        %v750 = vmul.f32 %v279, %v708
        %v751 = vadd.f32 %v275, %v750
        %v752 = vmul.f32 %v741, %v751
        %v753 = vadd.f32 %v288, %v752
        %v754 = vmul.f32 %v753, %v742
        %v755 = vstv %s624
        %v756 = vmul.f32 %v754, %v755
        %v757 = vmul.f32 %v280, %v708
        %v758 = vadd.f32 %v277, %v757
        %v759 = vmul.f32 %v741, %v758
        %v760 = vadd.f32 %v292, %v759
        %v761 = vmul.f32 %v760, %v742
        %v762 = vstv %s625
        %v763 = vmul.f32 %v761, %v762
        %v764 = vmul.f32 %v315, %v647
        %v765 = vmul.f32 %v316, %v648
        %v766 = vadd.f32 %v764, %v765
        %v767 = vmul.f32 %v317, %v650
        %v768 = vadd.f32 %v766, %v767
        %v769 = vmax.f32 %v768, 0.0
        %v770 = vmul.f32 %v315, %v673
        %v771 = vmul.f32 %v316, %v674
        %v772 = vadd.f32 %v770, %v771
        %v773 = vmul.f32 %v317, %v676
        %v774 = vadd.f32 %v772, %v773
        %v775 = vmax.f32 %v774, 0.0001
        %v776 = vmul.f32 %v315, %v696
        %v777 = vmul.f32 %v316, %v697
        %v778 = vadd.f32 %v776, %v777
        %v779 = vmul.f32 %v317, %v698
        %v780 = vadd.f32 %v778, %v779
        %v781 = vmax.f32 %v780, 0.0
        %v782 = vmul.f32 %v781, %v781
        %v783 = vmul.f32 %v782, %v520
        %v784 = vadd.f32 %v783, 1.0
        %v785 = vmul.f32 %v784, %v784
        %v786 = vmul.f32 %v785, 12.566371
        %v787 = vmul.f32 %v769, %v331
        %v788 = vadd.f32 %v787, %v330
        %v789 = vadd.f32 %v788, 1e-06
        %v790 = vmul.f32 %v786, %v789
        %v791 = vmul.f32 %v775, %v331
        %v792 = vadd.f32 %v791, %v330
        %v793 = vadd.f32 %v792, 1e-06
        %v794 = vmul.f32 %v790, %v793
        %v795 = vrcp.pop %v794
        %v796 = vmul.f32 %v329, %v795
        %v797 = vmul.f32 %v769, %v651
        %v798 = vmul.f32 %v338, %v708
        %v799 = vadd.f32 %v333, %v798
        %v800 = vmul.f32 %v796, %v799
        %v801 = vadd.f32 %v344, %v800
        %v802 = vmul.f32 %v801, %v797
        %v803 = vmul.f32 %v802, %v748
        %v804 = vmul.f32 %v339, %v708
        %v805 = vadd.f32 %v335, %v804
        %v806 = vmul.f32 %v796, %v805
        %v807 = vadd.f32 %v348, %v806
        %v808 = vmul.f32 %v807, %v797
        %v809 = vmul.f32 %v808, %v755
        %v810 = vmul.f32 %v340, %v708
        %v811 = vadd.f32 %v337, %v810
        %v812 = vmul.f32 %v796, %v811
        %v813 = vadd.f32 %v352, %v812
        %v814 = vmul.f32 %v813, %v797
        %v815 = vmul.f32 %v814, %v762
        %v816 = vadd.f32 %v749, 1e-05
        %v817 = vadd.f32 %v803, 1e-05
        %v818 = vrcp.pop %v817
        %v819 = vmul.f32 %v817, %v818
        %v820 = vsub.f32 1.0, %v819
        %v821 = vmul.f32 %v818, %v820
        %v822 = vadd.f32 %v818, %v821
        %vm823 = vweird.f32 %v817
        %vm824 = vweird.f32 %v818
        %vm825 = vmor %vm823, %vm824
        %v826 = vsel %vm825, %v818, %v822
        %v827 = vand.u32 2147483647, %v817
        %vm828 = vcmp.eq.f32.partialorder %v827, 8.507059e+37
        %v829 = vand.u32 %v817, 2147483648
        %v830 = vor.u32 1.1754944e-38, %v829
        %v831 = vsel %vm828, %v830, %v826
        %v832 = vmul.f32 %v816, %v831
        %v833 = vlog2.pop %v832
        %v834 = vmul.f32 %v833, 0.6931472
        %v835 = vand.u32 2147483647, %v834
        %v836 = vadd.f32 %v616, %v835
        %v837 = vadd.f32 %v756, 1e-05
        %v838 = vadd.f32 %v809, 1e-05
        %v839 = vrcp.pop %v838
        %v840 = vmul.f32 %v838, %v839
        %v841 = vsub.f32 1.0, %v840
        %v842 = vmul.f32 %v839, %v841
        %v843 = vadd.f32 %v839, %v842
        %vm844 = vweird.f32 %v838
        %vm845 = vweird.f32 %v839
        %vm846 = vmor %vm844, %vm845
        %v847 = vsel %vm846, %v839, %v843
        %v848 = vand.u32 2147483647, %v838
        %vm849 = vcmp.eq.f32.partialorder %v848, 8.507059e+37
        %v850 = vand.u32 %v838, 2147483648
        %v851 = vor.u32 1.1754944e-38, %v850
        %v852 = vsel %vm849, %v851, %v847
        %v853 = vmul.f32 %v837, %v852
        %v854 = vlog2.pop %v853
        %v855 = vmul.f32 %v854, 0.6931472
        %v856 = vand.u32 2147483647, %v855
        %v857 = vadd.f32 %v836, %v856
        %v858 = vadd.f32 %v763, 1e-05
        %v859 = vadd.f32 %v815, 1e-05
        %v860 = vrcp.pop %v859
        %v861 = vmul.f32 %v859, %v860
        %v862 = vsub.f32 1.0, %v861
        %v863 = vmul.f32 %v860, %v862
        %v864 = vadd.f32 %v860, %v863
        %vm865 = vweird.f32 %v859
        %vm866 = vweird.f32 %v860
        %vm867 = vmor %vm865, %vm866
        %v868 = vsel %vm867, %v860, %v864
        %v869 = vand.u32 2147483647, %v859
        %vm870 = vcmp.eq.f32.partialorder %v869, 8.507059e+37
        %v871 = vand.u32 %v859, 2147483648
        %v872 = vor.u32 1.1754944e-38, %v871
        %v873 = vsel %vm870, %v872, %v868
        %v874 = vmul.f32 %v858, %v873
        %v875 = vlog2.pop %v874
        %v876 = vmul.f32 %v875, 0.6931472
        %v877 = vand.u32 2147483647, %v876
        %v878 = vadd.f32 %v857, %v877
        %s879 = sld [smem:[#allocation2 + $0x12]]
        %s880 = sld [smem:[#allocation2 + $0x13]]
        %s881 = sld [smem:[#allocation2 + $0x14]]
        %s882 = sld [smem:[#allocation2 + $0x15]]
        %s883 = sld [smem:[#allocation2 + $0x16]]
        %s884 = sld [smem:[#allocation2 + $0x17]]
        %s885 = sld [smem:[#allocation2 + $0x18]]
        %s886 = sld [smem:[#allocation2 + $0x19]]
        %s887 = sld [smem:[#allocation2 + $0x1a]]
        %v888 = vstv %s879
        %v889 = vsub.f32 %v888, %v231
        %v890 = vstv %s880
        %v891 = vsub.f32 %v890, %v233
        %v892 = vmul.f32 %v889, %v889
        %v893 = vmul.f32 %v891, %v891
        %v894 = vadd.f32 %v892, %v893
        %s895 = smul.f32 %s881, %s881
        %v896 = vstv %s895
        %v897 = vadd.f32 %v894, %v896
        %v898 = vadd.f32 %v897, 1e-12
        %v899 = vrsqrt.pop %v898
        %v900 = vmul.f32 %v899, %v898
        %v901 = vmul.f32 %v900, %v899
        %v902 = vmul.f32 0.5, %v901
        %v903 = vsub.f32 1.5, %v902
        %v904 = vmul.f32 %v899, %v903
        %vm905 = vweird.f32 %v898
        %vm906 = vweird.f32 %v899
        %vm907 = vmor %vm905, %vm906
        %v908 = vsel %vm907, %v899, %v904
        %v909 = vmul.f32 %v889, %v908
        %v910 = vmul.f32 %v891, %v908
        %v911 = vstv %s881
        %v912 = vmul.f32 %v911, %v908
        %v913 = vmul.f32 %v908, %v908
        %v914 = vstv %s882
        %v915 = vsub.f32 %v914, %v231
        %v916 = vstv %s883
        %v917 = vsub.f32 %v916, %v233
        %v918 = vmul.f32 %v915, %v915
        %v919 = vmul.f32 %v917, %v917
        %v920 = vadd.f32 %v918, %v919
        %s921 = smul.f32 %s884, %s884
        %v922 = vstv %s921
        %v923 = vadd.f32 %v920, %v922
        %v924 = vadd.f32 %v923, 1e-12
        %v925 = vrsqrt.pop %v924
        %v926 = vmul.f32 %v925, %v924
        %v927 = vmul.f32 %v926, %v925
        %v928 = vmul.f32 0.5, %v927
        %v929 = vsub.f32 1.5, %v928
        %v930 = vmul.f32 %v925, %v929
        %vm931 = vweird.f32 %v924
        %vm932 = vweird.f32 %v925
        %vm933 = vmor %vm931, %vm932
        %v934 = vsel %vm933, %v925, %v930
        %v935 = vmul.f32 %v915, %v934
        %v936 = vmul.f32 %v917, %v934
        %v937 = vstv %s884
        %v938 = vmul.f32 %v937, %v934
        %v939 = vadd.f32 %v909, %v935
        %v940 = vadd.f32 %v910, %v936
        %v941 = vadd.f32 %v912, %v938
        %v942 = vmul.f32 %v939, %v939
        %v943 = vmul.f32 %v940, %v940
        %v944 = vadd.f32 %v942, %v943
        %v945 = vmul.f32 %v941, %v941
        %v946 = vadd.f32 %v944, %v945
        %v947 = vadd.f32 %v946, 1e-12
        %v948 = vrsqrt.pop %v947
        %v949 = vmul.f32 %v948, %v947
        %v950 = vmul.f32 %v949, %v948
        %v951 = vmul.f32 0.5, %v950
        %v952 = vsub.f32 1.5, %v951
        %v953 = vmul.f32 %v948, %v952
        %vm954 = vweird.f32 %v947
        %vm955 = vweird.f32 %v948
        %vm956 = vmor %vm954, %vm955
        %v957 = vsel %vm956, %v948, %v953
        %v958 = vmul.f32 %v939, %v957
        %v959 = vmul.f32 %v940, %v957
        %v960 = vmul.f32 %v941, %v957
        %v961 = vmul.f32 %v935, %v958
        %v962 = vmul.f32 %v936, %v959
        %v963 = vadd.f32 %v961, %v962
        %v964 = vmul.f32 %v938, %v960
        %v965 = vadd.f32 %v963, %v964
        %v966 = vmax.f32 %v965, 0.0001
        %v967 = vmul.f32 %v966, -5.55473
        %v968 = vsub.f32 %v967, 6.98316
        %v969 = vmul.f32 %v968, %v966
        %v970 = vpow.pop %v969
        %v971 = vmul.f32 %v255, %v909
        %v972 = vmul.f32 %v256, %v910
        %v973 = vadd.f32 %v971, %v972
        %v974 = vmul.f32 %v257, %v912
        %v975 = vadd.f32 %v973, %v974
        %v976 = vmax.f32 %v975, 0.0
        %v977 = vmul.f32 %v255, %v935
        %v978 = vmul.f32 %v256, %v936
        %v979 = vadd.f32 %v977, %v978
        %v980 = vmul.f32 %v257, %v938
        %v981 = vadd.f32 %v979, %v980
        %v982 = vmax.f32 %v981, 0.0001
        %v983 = vmul.f32 %v255, %v958
        %v984 = vmul.f32 %v256, %v959
        %v985 = vadd.f32 %v983, %v984
        %v986 = vmul.f32 %v257, %v960
        %v987 = vadd.f32 %v985, %v986
        %v988 = vmax.f32 %v987, 0.0
        %v989 = vmul.f32 %v988, %v988
        %v990 = vmul.f32 %v989, %v464
        %v991 = vadd.f32 %v990, 1.0
        %v992 = vmul.f32 %v991, %v991
        %v993 = vmul.f32 %v992, 12.566371
        %v994 = vmul.f32 %v976, %v271
        %v995 = vadd.f32 %v994, %v270
        %v996 = vadd.f32 %v995, 1e-06
        %v997 = vmul.f32 %v993, %v996
        %v998 = vmul.f32 %v982, %v271
        %v999 = vadd.f32 %v998, %v270
        %v1000 = vadd.f32 %v999, 1e-06
        %v1001 = vmul.f32 %v997, %v1000
        %v1002 = vrcp.pop %v1001
        %v1003 = vmul.f32 %v269, %v1002
        %v1004 = vmul.f32 %v976, %v913
        %v1005 = vmul.f32 %v278, %v970
        %v1006 = vadd.f32 %v273, %v1005
        %v1007 = vmul.f32 %v1003, %v1006
        %v1008 = vadd.f32 %v284, %v1007
        %v1009 = vmul.f32 %v1008, %v1004
        %v1010 = vstv %s885
        %v1011 = vmul.f32 %v1009, %v1010
        %v1012 = vmul.f32 %v279, %v970
        %v1013 = vadd.f32 %v275, %v1012
        %v1014 = vmul.f32 %v1003, %v1013
        %v1015 = vadd.f32 %v288, %v1014
        %v1016 = vmul.f32 %v1015, %v1004
        %v1017 = vstv %s886
        %v1018 = vmul.f32 %v1016, %v1017
        %v1019 = vmul.f32 %v280, %v970
        %v1020 = vadd.f32 %v277, %v1019
        %v1021 = vmul.f32 %v1003, %v1020
        %v1022 = vadd.f32 %v292, %v1021
        %v1023 = vmul.f32 %v1022, %v1004
        %v1024 = vstv %s887
        %v1025 = vmul.f32 %v1023, %v1024
        %v1026 = vmul.f32 %v315, %v909
        %v1027 = vmul.f32 %v316, %v910
        %v1028 = vadd.f32 %v1026, %v1027
        %v1029 = vmul.f32 %v317, %v912
        %v1030 = vadd.f32 %v1028, %v1029
        %v1031 = vmax.f32 %v1030, 0.0
        %v1032 = vmul.f32 %v315, %v935
        %v1033 = vmul.f32 %v316, %v936
        %v1034 = vadd.f32 %v1032, %v1033
        %v1035 = vmul.f32 %v317, %v938
        %v1036 = vadd.f32 %v1034, %v1035
        %v1037 = vmax.f32 %v1036, 0.0001
        %v1038 = vmul.f32 %v315, %v958
        %v1039 = vmul.f32 %v316, %v959
        %v1040 = vadd.f32 %v1038, %v1039
        %v1041 = vmul.f32 %v317, %v960
        %v1042 = vadd.f32 %v1040, %v1041
        %v1043 = vmax.f32 %v1042, 0.0
        %v1044 = vmul.f32 %v1043, %v1043
        %v1045 = vmul.f32 %v1044, %v520
        %v1046 = vadd.f32 %v1045, 1.0
        %v1047 = vmul.f32 %v1046, %v1046
        %v1048 = vmul.f32 %v1047, 12.566371
        %v1049 = vmul.f32 %v1031, %v331
        %v1050 = vadd.f32 %v1049, %v330
        %v1051 = vadd.f32 %v1050, 1e-06
        %v1052 = vmul.f32 %v1048, %v1051
        %v1053 = vmul.f32 %v1037, %v331
        %v1054 = vadd.f32 %v1053, %v330
        %v1055 = vadd.f32 %v1054, 1e-06
        %v1056 = vmul.f32 %v1052, %v1055
        %v1057 = vrcp.pop %v1056
        %v1058 = vmul.f32 %v329, %v1057
        %v1059 = vmul.f32 %v1031, %v913
        %v1060 = vmul.f32 %v338, %v970
        %v1061 = vadd.f32 %v333, %v1060
        %v1062 = vmul.f32 %v1058, %v1061
        %v1063 = vadd.f32 %v344, %v1062
        %v1064 = vmul.f32 %v1063, %v1059
        %v1065 = vmul.f32 %v1064, %v1010
        %v1066 = vmul.f32 %v339, %v970
        %v1067 = vadd.f32 %v335, %v1066
        %v1068 = vmul.f32 %v1058, %v1067
        %v1069 = vadd.f32 %v348, %v1068
        %v1070 = vmul.f32 %v1069, %v1059
        %v1071 = vmul.f32 %v1070, %v1017
        %v1072 = vmul.f32 %v340, %v970
        %v1073 = vadd.f32 %v337, %v1072
        %v1074 = vmul.f32 %v1058, %v1073
        %v1075 = vadd.f32 %v352, %v1074
        %v1076 = vmul.f32 %v1075, %v1059
        %v1077 = vmul.f32 %v1076, %v1024
        %v1078 = vadd.f32 %v1011, 1e-05
        %v1079 = vadd.f32 %v1065, 1e-05
        %v1080 = vrcp.pop %v1079
        %v1081 = vmul.f32 %v1079, %v1080
        %v1082 = vsub.f32 1.0, %v1081
        %v1083 = vmul.f32 %v1080, %v1082
        %v1084 = vadd.f32 %v1080, %v1083
        %vm1085 = vweird.f32 %v1079
        %vm1086 = vweird.f32 %v1080
        %vm1087 = vmor %vm1085, %vm1086
        %v1088 = vsel %vm1087, %v1080, %v1084
        %v1089 = vand.u32 2147483647, %v1079
        %vm1090 = vcmp.eq.f32.partialorder %v1089, 8.507059e+37
        %v1091 = vand.u32 %v1079, 2147483648
        %v1092 = vor.u32 1.1754944e-38, %v1091
        %v1093 = vsel %vm1090, %v1092, %v1088
        %v1094 = vmul.f32 %v1078, %v1093
        %v1095 = vlog2.pop %v1094
        %v1096 = vmul.f32 %v1095, 0.6931472
        %v1097 = vand.u32 2147483647, %v1096
        %v1098 = vadd.f32 %v878, %v1097
        %v1099 = vadd.f32 %v1018, 1e-05
        %v1100 = vadd.f32 %v1071, 1e-05
        %v1101 = vrcp.pop %v1100
        %v1102 = vmul.f32 %v1100, %v1101
        %v1103 = vsub.f32 1.0, %v1102
        %v1104 = vmul.f32 %v1101, %v1103
        %v1105 = vadd.f32 %v1101, %v1104
        %vm1106 = vweird.f32 %v1100
        %vm1107 = vweird.f32 %v1101
        %vm1108 = vmor %vm1106, %vm1107
        %v1109 = vsel %vm1108, %v1101, %v1105
        %v1110 = vand.u32 2147483647, %v1100
        %vm1111 = vcmp.eq.f32.partialorder %v1110, 8.507059e+37
        %v1112 = vand.u32 %v1100, 2147483648
        %v1113 = vor.u32 1.1754944e-38, %v1112
        %v1114 = vsel %vm1111, %v1113, %v1109
        %v1115 = vmul.f32 %v1099, %v1114
        %v1116 = vlog2.pop %v1115
        %v1117 = vmul.f32 %v1116, 0.6931472
        %v1118 = vand.u32 2147483647, %v1117
        %v1119 = vadd.f32 %v1098, %v1118
        %v1120 = vadd.f32 %v1025, 1e-05
        %v1121 = vadd.f32 %v1077, 1e-05
        %v1122 = vrcp.pop %v1121
        %v1123 = vmul.f32 %v1121, %v1122
        %v1124 = vsub.f32 1.0, %v1123
        %v1125 = vmul.f32 %v1122, %v1124
        %v1126 = vadd.f32 %v1122, %v1125
        %vm1127 = vweird.f32 %v1121
        %vm1128 = vweird.f32 %v1122
        %vm1129 = vmor %vm1127, %vm1128
        %v1130 = vsel %vm1129, %v1122, %v1126
        %v1131 = vand.u32 2147483647, %v1121
        %vm1132 = vcmp.eq.f32.partialorder %v1131, 8.507059e+37
        %v1133 = vand.u32 %v1121, 2147483648
        %v1134 = vor.u32 1.1754944e-38, %v1133
        %v1135 = vsel %vm1132, %v1134, %v1130
        %v1136 = vmul.f32 %v1120, %v1135
        %v1137 = vlog2.pop %v1136
        %v1138 = vmul.f32 %v1137, 0.6931472
        %v1139 = vand.u32 2147483647, %v1138
        %v1140 = vadd.f32 %v1119, %v1139
        %s1141 = sld [smem:[#allocation2 + $0x1b]]
        %s1142 = sld [smem:[#allocation2 + $0x1c]]
        %s1143 = sld [smem:[#allocation2 + $0x1d]]
        %s1144 = sld [smem:[#allocation2 + $0x1e]]
        %s1145 = sld [smem:[#allocation2 + $0x1f]]
        %s1146 = sld [smem:[#allocation2 + $0x20]]
        %s1147 = sld [smem:[#allocation2 + $0x21]]
        %s1148 = sld [smem:[#allocation2 + $0x22]]
        %s1149 = sld [smem:[#allocation2 + $0x23]]
        %v1150 = vstv %s1141
        %v1151 = vsub.f32 %v1150, %v231
        %v1152 = vstv %s1142
        %v1153 = vsub.f32 %v1152, %v233
        %v1154 = vmul.f32 %v1151, %v1151
        %v1155 = vmul.f32 %v1153, %v1153
        %v1156 = vadd.f32 %v1154, %v1155
        %s1157 = smul.f32 %s1143, %s1143
        %v1158 = vstv %s1157
        %v1159 = vadd.f32 %v1156, %v1158
        %v1160 = vadd.f32 %v1159, 1e-12
        %v1161 = vrsqrt.pop %v1160
        %v1162 = vmul.f32 %v1161, %v1160
        %v1163 = vmul.f32 %v1162, %v1161
        %v1164 = vmul.f32 0.5, %v1163
        %v1165 = vsub.f32 1.5, %v1164
        %v1166 = vmul.f32 %v1161, %v1165
        %vm1167 = vweird.f32 %v1160
        %vm1168 = vweird.f32 %v1161
        %vm1169 = vmor %vm1167, %vm1168
        %v1170 = vsel %vm1169, %v1161, %v1166
        %v1171 = vmul.f32 %v1151, %v1170
        %v1172 = vmul.f32 %v1153, %v1170
        %v1173 = vstv %s1143
        %v1174 = vmul.f32 %v1173, %v1170
        %v1175 = vmul.f32 %v1170, %v1170
        %v1176 = vstv %s1144
        %v1177 = vsub.f32 %v1176, %v231
        %v1178 = vstv %s1145
        %v1179 = vsub.f32 %v1178, %v233
        %v1180 = vmul.f32 %v1177, %v1177
        %v1181 = vmul.f32 %v1179, %v1179
        %v1182 = vadd.f32 %v1180, %v1181
        %s1183 = smul.f32 %s1146, %s1146
        %v1184 = vstv %s1183
        %v1185 = vadd.f32 %v1182, %v1184
        %v1186 = vadd.f32 %v1185, 1e-12
        %v1187 = vrsqrt.pop %v1186
        %v1188 = vmul.f32 %v1187, %v1186
        %v1189 = vmul.f32 %v1188, %v1187
        %v1190 = vmul.f32 0.5, %v1189
        %v1191 = vsub.f32 1.5, %v1190
        %v1192 = vmul.f32 %v1187, %v1191
        %vm1193 = vweird.f32 %v1186
        %vm1194 = vweird.f32 %v1187
        %vm1195 = vmor %vm1193, %vm1194
        %v1196 = vsel %vm1195, %v1187, %v1192
        %v1197 = vmul.f32 %v1177, %v1196
        %v1198 = vmul.f32 %v1179, %v1196
        %v1199 = vstv %s1146
        %v1200 = vmul.f32 %v1199, %v1196
        %v1201 = vadd.f32 %v1171, %v1197
        %v1202 = vadd.f32 %v1172, %v1198
        %v1203 = vadd.f32 %v1174, %v1200
        %v1204 = vmul.f32 %v1201, %v1201
        %v1205 = vmul.f32 %v1202, %v1202
        %v1206 = vadd.f32 %v1204, %v1205
        %v1207 = vmul.f32 %v1203, %v1203
        %v1208 = vadd.f32 %v1206, %v1207
        %v1209 = vadd.f32 %v1208, 1e-12
        %v1210 = vrsqrt.pop %v1209
        %v1211 = vmul.f32 %v1210, %v1209
        %v1212 = vmul.f32 %v1211, %v1210
        %v1213 = vmul.f32 0.5, %v1212
        %v1214 = vsub.f32 1.5, %v1213
        %v1215 = vmul.f32 %v1210, %v1214
        %vm1216 = vweird.f32 %v1209
        %vm1217 = vweird.f32 %v1210
        %vm1218 = vmor %vm1216, %vm1217
        %v1219 = vsel %vm1218, %v1210, %v1215
        %v1220 = vmul.f32 %v1201, %v1219
        %v1221 = vmul.f32 %v1202, %v1219
        %v1222 = vmul.f32 %v1203, %v1219
        %v1223 = vmul.f32 %v1197, %v1220
        %v1224 = vmul.f32 %v1198, %v1221
        %v1225 = vadd.f32 %v1223, %v1224
        %v1226 = vmul.f32 %v1200, %v1222
        %v1227 = vadd.f32 %v1225, %v1226
        %v1228 = vmax.f32 %v1227, 0.0001
        %v1229 = vmul.f32 %v1228, -5.55473
        %v1230 = vsub.f32 %v1229, 6.98316
        %v1231 = vmul.f32 %v1230, %v1228
        %v1232 = vpow.pop %v1231
        %v1233 = vmul.f32 %v255, %v1171
        %v1234 = vmul.f32 %v256, %v1172
        %v1235 = vadd.f32 %v1233, %v1234
        %v1236 = vmul.f32 %v257, %v1174
        %v1237 = vadd.f32 %v1235, %v1236
        %v1238 = vmax.f32 %v1237, 0.0
        %v1239 = vmul.f32 %v255, %v1197
        %v1240 = vmul.f32 %v256, %v1198
        %v1241 = vadd.f32 %v1239, %v1240
        %v1242 = vmul.f32 %v257, %v1200
        %v1243 = vadd.f32 %v1241, %v1242
        %v1244 = vmax.f32 %v1243, 0.0001
        %v1245 = vmul.f32 %v255, %v1220
        %v1246 = vmul.f32 %v256, %v1221
        %v1247 = vadd.f32 %v1245, %v1246
        %v1248 = vmul.f32 %v257, %v1222
        %v1249 = vadd.f32 %v1247, %v1248
        %v1250 = vmax.f32 %v1249, 0.0
        %v1251 = vmul.f32 %v1250, %v1250
        %v1252 = vmul.f32 %v1251, %v464
        %v1253 = vadd.f32 %v1252, 1.0
        %v1254 = vmul.f32 %v1253, %v1253
        %v1255 = vmul.f32 %v1254, 12.566371
        %v1256 = vmul.f32 %v1238, %v271
        %v1257 = vadd.f32 %v1256, %v270
        %v1258 = vadd.f32 %v1257, 1e-06
        %v1259 = vmul.f32 %v1255, %v1258
        %v1260 = vmul.f32 %v1244, %v271
        %v1261 = vadd.f32 %v1260, %v270
        %v1262 = vadd.f32 %v1261, 1e-06
        %v1263 = vmul.f32 %v1259, %v1262
        %v1264 = vrcp.pop %v1263
        %v1265 = vmul.f32 %v269, %v1264
        %v1266 = vmul.f32 %v1238, %v1175
        %v1267 = vmul.f32 %v278, %v1232
        %v1268 = vadd.f32 %v273, %v1267
        %v1269 = vmul.f32 %v1265, %v1268
        %v1270 = vadd.f32 %v284, %v1269
        %v1271 = vmul.f32 %v1270, %v1266
        %v1272 = vstv %s1147
        %v1273 = vmul.f32 %v1271, %v1272
        %v1274 = vmul.f32 %v279, %v1232
        %v1275 = vadd.f32 %v275, %v1274
        %v1276 = vmul.f32 %v1265, %v1275
        %v1277 = vadd.f32 %v288, %v1276
        %v1278 = vmul.f32 %v1277, %v1266
        %v1279 = vstv %s1148
        %v1280 = vmul.f32 %v1278, %v1279
        %v1281 = vmul.f32 %v280, %v1232
        %v1282 = vadd.f32 %v277, %v1281
        %v1283 = vmul.f32 %v1265, %v1282
        %v1284 = vadd.f32 %v292, %v1283
        %v1285 = vmul.f32 %v1284, %v1266
        %v1286 = vstv %s1149
        %v1287 = vmul.f32 %v1285, %v1286
        %v1288 = vmul.f32 %v315, %v1171
        %v1289 = vmul.f32 %v316, %v1172
        %v1290 = vadd.f32 %v1288, %v1289
        %v1291 = vmul.f32 %v317, %v1174
        %v1292 = vadd.f32 %v1290, %v1291
        %v1293 = vmax.f32 %v1292, 0.0
        %v1294 = vmul.f32 %v315, %v1197
        %v1295 = vmul.f32 %v316, %v1198
        %v1296 = vadd.f32 %v1294, %v1295
        %v1297 = vmul.f32 %v317, %v1200
        %v1298 = vadd.f32 %v1296, %v1297
        %v1299 = vmax.f32 %v1298, 0.0001
        %v1300 = vmul.f32 %v315, %v1220
        %v1301 = vmul.f32 %v316, %v1221
        %v1302 = vadd.f32 %v1300, %v1301
        %v1303 = vmul.f32 %v317, %v1222
        %v1304 = vadd.f32 %v1302, %v1303
        %v1305 = vmax.f32 %v1304, 0.0
        %v1306 = vmul.f32 %v1305, %v1305
        %v1307 = vmul.f32 %v1306, %v520
        %v1308 = vadd.f32 %v1307, 1.0
        %v1309 = vmul.f32 %v1308, %v1308
        %v1310 = vmul.f32 %v1309, 12.566371
        %v1311 = vmul.f32 %v1293, %v331
        %v1312 = vadd.f32 %v1311, %v330
        %v1313 = vadd.f32 %v1312, 1e-06
        %v1314 = vmul.f32 %v1310, %v1313
        %v1315 = vmul.f32 %v1299, %v331
        %v1316 = vadd.f32 %v1315, %v330
        %v1317 = vadd.f32 %v1316, 1e-06
        %v1318 = vmul.f32 %v1314, %v1317
        %v1319 = vrcp.pop %v1318
        %v1320 = vmul.f32 %v329, %v1319
        %v1321 = vmul.f32 %v1293, %v1175
        %v1322 = vmul.f32 %v338, %v1232
        %v1323 = vadd.f32 %v333, %v1322
        %v1324 = vmul.f32 %v1320, %v1323
        %v1325 = vadd.f32 %v344, %v1324
        %v1326 = vmul.f32 %v1325, %v1321
        %v1327 = vmul.f32 %v1326, %v1272
        %v1328 = vmul.f32 %v339, %v1232
        %v1329 = vadd.f32 %v335, %v1328
        %v1330 = vmul.f32 %v1320, %v1329
        %v1331 = vadd.f32 %v348, %v1330
        %v1332 = vmul.f32 %v1331, %v1321
        %v1333 = vmul.f32 %v1332, %v1279
        %v1334 = vmul.f32 %v340, %v1232
        %v1335 = vadd.f32 %v337, %v1334
        %v1336 = vmul.f32 %v1320, %v1335
        %v1337 = vadd.f32 %v352, %v1336
        %v1338 = vmul.f32 %v1337, %v1321
        %v1339 = vmul.f32 %v1338, %v1286
        %v1340 = vadd.f32 %v1273, 1e-05
        %v1341 = vadd.f32 %v1327, 1e-05
        %v1342 = vrcp.pop %v1341
        %v1343 = vmul.f32 %v1341, %v1342
        %v1344 = vsub.f32 1.0, %v1343
        %v1345 = vmul.f32 %v1342, %v1344
        %v1346 = vadd.f32 %v1342, %v1345
        %vm1347 = vweird.f32 %v1341
        %vm1348 = vweird.f32 %v1342
        %vm1349 = vmor %vm1347, %vm1348
        %v1350 = vsel %vm1349, %v1342, %v1346
        %v1351 = vand.u32 2147483647, %v1341
        %vm1352 = vcmp.eq.f32.partialorder %v1351, 8.507059e+37
        %v1353 = vand.u32 %v1341, 2147483648
        %v1354 = vor.u32 1.1754944e-38, %v1353
        %v1355 = vsel %vm1352, %v1354, %v1350
        %v1356 = vmul.f32 %v1340, %v1355
        %v1357 = vlog2.pop %v1356
        %v1358 = vmul.f32 %v1357, 0.6931472
        %v1359 = vand.u32 2147483647, %v1358
        %v1360 = vadd.f32 %v1140, %v1359
        %v1361 = vadd.f32 %v1280, 1e-05
        %v1362 = vadd.f32 %v1333, 1e-05
        %v1363 = vrcp.pop %v1362
        %v1364 = vmul.f32 %v1362, %v1363
        %v1365 = vsub.f32 1.0, %v1364
        %v1366 = vmul.f32 %v1363, %v1365
        %v1367 = vadd.f32 %v1363, %v1366
        %vm1368 = vweird.f32 %v1362
        %vm1369 = vweird.f32 %v1363
        %vm1370 = vmor %vm1368, %vm1369
        %v1371 = vsel %vm1370, %v1363, %v1367
        %v1372 = vand.u32 2147483647, %v1362
        %vm1373 = vcmp.eq.f32.partialorder %v1372, 8.507059e+37
        %v1374 = vand.u32 %v1362, 2147483648
        %v1375 = vor.u32 1.1754944e-38, %v1374
        %v1376 = vsel %vm1373, %v1375, %v1371
        %v1377 = vmul.f32 %v1361, %v1376
        %v1378 = vlog2.pop %v1377
        %v1379 = vmul.f32 %v1378, 0.6931472
        %v1380 = vand.u32 2147483647, %v1379
        %v1381 = vadd.f32 %v1360, %v1380
        %v1382 = vadd.f32 %v1287, 1e-05
        %v1383 = vadd.f32 %v1339, 1e-05
        %v1384 = vrcp.pop %v1383
        %v1385 = vmul.f32 %v1383, %v1384
        %v1386 = vsub.f32 1.0, %v1385
        %v1387 = vmul.f32 %v1384, %v1386
        %v1388 = vadd.f32 %v1384, %v1387
        %vm1389 = vweird.f32 %v1383
        %vm1390 = vweird.f32 %v1384
        %vm1391 = vmor %vm1389, %vm1390
        %v1392 = vsel %vm1391, %v1384, %v1388
        %v1393 = vand.u32 2147483647, %v1383
        %vm1394 = vcmp.eq.f32.partialorder %v1393, 8.507059e+37
        %v1395 = vand.u32 %v1383, 2147483648
        %v1396 = vor.u32 1.1754944e-38, %v1395
        %v1397 = vsel %vm1394, %v1396, %v1392
        %v1398 = vmul.f32 %v1382, %v1397
        %v1399 = vlog2.pop %v1398
        %v1400 = vmul.f32 %v1399, 0.6931472
        %v1401 = vand.u32 2147483647, %v1400
        %v1402 = vadd.f32 %v1381, %v1401
        %s1403 = sld [smem:[#allocation2 + $0x24]]
        %s1404 = sld [smem:[#allocation2 + $0x25]]
        %s1405 = sld [smem:[#allocation2 + $0x26]]
        %s1406 = sld [smem:[#allocation2 + $0x27]]
        %s1407 = sld [smem:[#allocation2 + $0x28]]
        %s1408 = sld [smem:[#allocation2 + $0x29]]
        %s1409 = sld [smem:[#allocation2 + $0x2a]]
        %s1410 = sld [smem:[#allocation2 + $0x2b]]
        %s1411 = sld [smem:[#allocation2 + $0x2c]]
        %v1412 = vstv %s1403
        %v1413 = vsub.f32 %v1412, %v231
        %v1414 = vstv %s1404
        %v1415 = vsub.f32 %v1414, %v233
        %v1416 = vmul.f32 %v1413, %v1413
        %v1417 = vmul.f32 %v1415, %v1415
        %v1418 = vadd.f32 %v1416, %v1417
        %s1419 = smul.f32 %s1405, %s1405
        %v1420 = vstv %s1419
        %v1421 = vadd.f32 %v1418, %v1420
        %v1422 = vadd.f32 %v1421, 1e-12
        %v1423 = vrsqrt.pop %v1422
        %v1424 = vmul.f32 %v1423, %v1422
        %v1425 = vmul.f32 %v1424, %v1423
        %v1426 = vmul.f32 0.5, %v1425
        %v1427 = vsub.f32 1.5, %v1426
        %v1428 = vmul.f32 %v1423, %v1427
        %vm1429 = vweird.f32 %v1422
        %vm1430 = vweird.f32 %v1423
        %vm1431 = vmor %vm1429, %vm1430
        %v1432 = vsel %vm1431, %v1423, %v1428
        %v1433 = vmul.f32 %v1413, %v1432
        %v1434 = vmul.f32 %v1415, %v1432
        %v1435 = vstv %s1405
        %v1436 = vmul.f32 %v1435, %v1432
        %v1437 = vmul.f32 %v1432, %v1432
        %v1438 = vstv %s1406
        %v1439 = vsub.f32 %v1438, %v231
        %v1440 = vstv %s1407
        %v1441 = vsub.f32 %v1440, %v233
        %v1442 = vmul.f32 %v1439, %v1439
        %v1443 = vmul.f32 %v1441, %v1441
        %v1444 = vadd.f32 %v1442, %v1443
        %s1445 = smul.f32 %s1408, %s1408
        %v1446 = vstv %s1445
        %v1447 = vadd.f32 %v1444, %v1446
        %v1448 = vadd.f32 %v1447, 1e-12
        %v1449 = vrsqrt.pop %v1448
        %v1450 = vmul.f32 %v1449, %v1448
        %v1451 = vmul.f32 %v1450, %v1449
        %v1452 = vmul.f32 0.5, %v1451
        %v1453 = vsub.f32 1.5, %v1452
        %v1454 = vmul.f32 %v1449, %v1453
        %vm1455 = vweird.f32 %v1448
        %vm1456 = vweird.f32 %v1449
        %vm1457 = vmor %vm1455, %vm1456
        %v1458 = vsel %vm1457, %v1449, %v1454
        %v1459 = vmul.f32 %v1439, %v1458
        %v1460 = vmul.f32 %v1441, %v1458
        %v1461 = vstv %s1408
        %v1462 = vmul.f32 %v1461, %v1458
        %v1463 = vadd.f32 %v1433, %v1459
        %v1464 = vadd.f32 %v1434, %v1460
        %v1465 = vadd.f32 %v1436, %v1462
        %v1466 = vmul.f32 %v1463, %v1463
        %v1467 = vmul.f32 %v1464, %v1464
        %v1468 = vadd.f32 %v1466, %v1467
        %v1469 = vmul.f32 %v1465, %v1465
        %v1470 = vadd.f32 %v1468, %v1469
        %v1471 = vadd.f32 %v1470, 1e-12
        %v1472 = vrsqrt.pop %v1471
        %v1473 = vmul.f32 %v1472, %v1471
        %v1474 = vmul.f32 %v1473, %v1472
        %v1475 = vmul.f32 0.5, %v1474
        %v1476 = vsub.f32 1.5, %v1475
        %v1477 = vmul.f32 %v1472, %v1476
        %vm1478 = vweird.f32 %v1471
        %vm1479 = vweird.f32 %v1472
        %vm1480 = vmor %vm1478, %vm1479
        %v1481 = vsel %vm1480, %v1472, %v1477
        %v1482 = vmul.f32 %v1463, %v1481
        %v1483 = vmul.f32 %v1464, %v1481
        %v1484 = vmul.f32 %v1465, %v1481
        %v1485 = vmul.f32 %v1459, %v1482
        %v1486 = vmul.f32 %v1460, %v1483
        %v1487 = vadd.f32 %v1485, %v1486
        %v1488 = vmul.f32 %v1462, %v1484
        %v1489 = vadd.f32 %v1487, %v1488
        %v1490 = vmax.f32 %v1489, 0.0001
        %v1491 = vmul.f32 %v1490, -5.55473
        %v1492 = vsub.f32 %v1491, 6.98316
        %v1493 = vmul.f32 %v1492, %v1490
        %v1494 = vpow.pop %v1493
        %v1495 = vmul.f32 %v255, %v1433
        %v1496 = vmul.f32 %v256, %v1434
        %v1497 = vadd.f32 %v1495, %v1496
        %v1498 = vmul.f32 %v257, %v1436
        %v1499 = vadd.f32 %v1497, %v1498
        %v1500 = vmax.f32 %v1499, 0.0
        %v1501 = vmul.f32 %v255, %v1459
        %v1502 = vmul.f32 %v256, %v1460
        %v1503 = vadd.f32 %v1501, %v1502
        %v1504 = vmul.f32 %v257, %v1462
        %v1505 = vadd.f32 %v1503, %v1504
        %v1506 = vmax.f32 %v1505, 0.0001
        %v1507 = vmul.f32 %v255, %v1482
        %v1508 = vmul.f32 %v256, %v1483
        %v1509 = vadd.f32 %v1507, %v1508
        %v1510 = vmul.f32 %v257, %v1484
        %v1511 = vadd.f32 %v1509, %v1510
        %v1512 = vmax.f32 %v1511, 0.0
        %v1513 = vmul.f32 %v1512, %v1512
        %v1514 = vmul.f32 %v1513, %v464
        %v1515 = vadd.f32 %v1514, 1.0
        %v1516 = vmul.f32 %v1515, %v1515
        %v1517 = vmul.f32 %v1516, 12.566371
        %v1518 = vmul.f32 %v1500, %v271
        %v1519 = vadd.f32 %v1518, %v270
        %v1520 = vadd.f32 %v1519, 1e-06
        %v1521 = vmul.f32 %v1517, %v1520
        %v1522 = vmul.f32 %v1506, %v271
        %v1523 = vadd.f32 %v1522, %v270
        %v1524 = vadd.f32 %v1523, 1e-06
        %v1525 = vmul.f32 %v1521, %v1524
        %v1526 = vrcp.pop %v1525
        %v1527 = vmul.f32 %v269, %v1526
        %v1528 = vmul.f32 %v1500, %v1437
        %v1529 = vmul.f32 %v278, %v1494
        %v1530 = vadd.f32 %v273, %v1529
        %v1531 = vmul.f32 %v1527, %v1530
        %v1532 = vadd.f32 %v284, %v1531
        %v1533 = vmul.f32 %v1532, %v1528
        %v1534 = vstv %s1409
        %v1535 = vmul.f32 %v1533, %v1534
        %v1536 = vmul.f32 %v279, %v1494
        %v1537 = vadd.f32 %v275, %v1536
        %v1538 = vmul.f32 %v1527, %v1537
        %v1539 = vadd.f32 %v288, %v1538
        %v1540 = vmul.f32 %v1539, %v1528
        %v1541 = vstv %s1410
        %v1542 = vmul.f32 %v1540, %v1541
        %v1543 = vmul.f32 %v280, %v1494
        %v1544 = vadd.f32 %v277, %v1543
        %v1545 = vmul.f32 %v1527, %v1544
        %v1546 = vadd.f32 %v292, %v1545
        %v1547 = vmul.f32 %v1546, %v1528
        %v1548 = vstv %s1411
        %v1549 = vmul.f32 %v1547, %v1548
        %v1550 = vmul.f32 %v315, %v1433
        %v1551 = vmul.f32 %v316, %v1434
        %v1552 = vadd.f32 %v1550, %v1551
        %v1553 = vmul.f32 %v317, %v1436
        %v1554 = vadd.f32 %v1552, %v1553
        %v1555 = vmax.f32 %v1554, 0.0
        %v1556 = vmul.f32 %v315, %v1459
        %v1557 = vmul.f32 %v316, %v1460
        %v1558 = vadd.f32 %v1556, %v1557
        %v1559 = vmul.f32 %v317, %v1462
        %v1560 = vadd.f32 %v1558, %v1559
        %v1561 = vmax.f32 %v1560, 0.0001
        %v1562 = vmul.f32 %v315, %v1482
        %v1563 = vmul.f32 %v316, %v1483
        %v1564 = vadd.f32 %v1562, %v1563
        %v1565 = vmul.f32 %v317, %v1484
        %v1566 = vadd.f32 %v1564, %v1565
        %v1567 = vmax.f32 %v1566, 0.0
        %v1568 = vmul.f32 %v1567, %v1567
        %v1569 = vmul.f32 %v1568, %v520
        %v1570 = vadd.f32 %v1569, 1.0
        %v1571 = vmul.f32 %v1570, %v1570
        %v1572 = vmul.f32 %v1571, 12.566371
        %v1573 = vmul.f32 %v1555, %v331
        %v1574 = vadd.f32 %v1573, %v330
        %v1575 = vadd.f32 %v1574, 1e-06
        %v1576 = vmul.f32 %v1572, %v1575
        %v1577 = vmul.f32 %v1561, %v331
        %v1578 = vadd.f32 %v1577, %v330
        %v1579 = vadd.f32 %v1578, 1e-06
        %v1580 = vmul.f32 %v1576, %v1579
        %v1581 = vrcp.pop %v1580
        %v1582 = vmul.f32 %v329, %v1581
        %v1583 = vmul.f32 %v1555, %v1437
        %v1584 = vmul.f32 %v338, %v1494
        %v1585 = vadd.f32 %v333, %v1584
        %v1586 = vmul.f32 %v1582, %v1585
        %v1587 = vadd.f32 %v344, %v1586
        %v1588 = vmul.f32 %v1587, %v1583
        %v1589 = vmul.f32 %v1588, %v1534
        %v1590 = vmul.f32 %v339, %v1494
        %v1591 = vadd.f32 %v335, %v1590
        %v1592 = vmul.f32 %v1582, %v1591
        %v1593 = vadd.f32 %v348, %v1592
        %v1594 = vmul.f32 %v1593, %v1583
        %v1595 = vmul.f32 %v1594, %v1541
        %v1596 = vmul.f32 %v340, %v1494
        %v1597 = vadd.f32 %v337, %v1596
        %v1598 = vmul.f32 %v1582, %v1597
        %v1599 = vadd.f32 %v352, %v1598
        %v1600 = vmul.f32 %v1599, %v1583
        %v1601 = vmul.f32 %v1600, %v1548
        %v1602 = vadd.f32 %v1535, 1e-05
        %v1603 = vadd.f32 %v1589, 1e-05
        %v1604 = vrcp.pop %v1603
        %v1605 = vmul.f32 %v1603, %v1604
        %v1606 = vsub.f32 1.0, %v1605
        %v1607 = vmul.f32 %v1604, %v1606
        %v1608 = vadd.f32 %v1604, %v1607
        %vm1609 = vweird.f32 %v1603
        %vm1610 = vweird.f32 %v1604
        %vm1611 = vmor %vm1609, %vm1610
        %v1612 = vsel %vm1611, %v1604, %v1608
        %v1613 = vand.u32 2147483647, %v1603
        %vm1614 = vcmp.eq.f32.partialorder %v1613, 8.507059e+37
        %v1615 = vand.u32 %v1603, 2147483648
        %v1616 = vor.u32 1.1754944e-38, %v1615
        %v1617 = vsel %vm1614, %v1616, %v1612
        %v1618 = vmul.f32 %v1602, %v1617
        %v1619 = vlog2.pop %v1618
        %v1620 = vmul.f32 %v1619, 0.6931472
        %v1621 = vand.u32 2147483647, %v1620
        %v1622 = vadd.f32 %v1402, %v1621
        %v1623 = vadd.f32 %v1542, 1e-05
        %v1624 = vadd.f32 %v1595, 1e-05
        %v1625 = vrcp.pop %v1624
        %v1626 = vmul.f32 %v1624, %v1625
        %v1627 = vsub.f32 1.0, %v1626
        %v1628 = vmul.f32 %v1625, %v1627
        %v1629 = vadd.f32 %v1625, %v1628
        %vm1630 = vweird.f32 %v1624
        %vm1631 = vweird.f32 %v1625
        %vm1632 = vmor %vm1630, %vm1631
        %v1633 = vsel %vm1632, %v1625, %v1629
        %v1634 = vand.u32 2147483647, %v1624
        %vm1635 = vcmp.eq.f32.partialorder %v1634, 8.507059e+37
        %v1636 = vand.u32 %v1624, 2147483648
        %v1637 = vor.u32 1.1754944e-38, %v1636
        %v1638 = vsel %vm1635, %v1637, %v1633
        %v1639 = vmul.f32 %v1623, %v1638
        %v1640 = vlog2.pop %v1639
        %v1641 = vmul.f32 %v1640, 0.6931472
        %v1642 = vand.u32 2147483647, %v1641
        %v1643 = vadd.f32 %v1622, %v1642
        %v1644 = vadd.f32 %v1549, 1e-05
        %v1645 = vadd.f32 %v1601, 1e-05
        %v1646 = vrcp.pop %v1645
        %v1647 = vmul.f32 %v1645, %v1646
        %v1648 = vsub.f32 1.0, %v1647
        %v1649 = vmul.f32 %v1646, %v1648
        %v1650 = vadd.f32 %v1646, %v1649
        %vm1651 = vweird.f32 %v1645
        %vm1652 = vweird.f32 %v1646
        %vm1653 = vmor %vm1651, %vm1652
        %v1654 = vsel %vm1653, %v1646, %v1650
        %v1655 = vand.u32 2147483647, %v1645
        %vm1656 = vcmp.eq.f32.partialorder %v1655, 8.507059e+37
        %v1657 = vand.u32 %v1645, 2147483648
        %v1658 = vor.u32 1.1754944e-38, %v1657
        %v1659 = vsel %vm1656, %v1658, %v1654
        %v1660 = vmul.f32 %v1644, %v1659
        %v1661 = vlog2.pop %v1660
        %v1662 = vmul.f32 %v1661, 0.6931472
        %v1663 = vand.u32 2147483647, %v1662
        %v1664 = vadd.f32 %v1643, %v1663
        %s1665 = sld [smem:[#allocation2 + $0x2d]]
        %s1666 = sld [smem:[#allocation2 + $0x2e]]
        %s1667 = sld [smem:[#allocation2 + $0x2f]]
        %s1668 = sld [smem:[#allocation2 + $0x30]]
        %s1669 = sld [smem:[#allocation2 + $0x31]]
        %s1670 = sld [smem:[#allocation2 + $0x32]]
        %s1671 = sld [smem:[#allocation2 + $0x33]]
        %s1672 = sld [smem:[#allocation2 + $0x34]]
        %s1673 = sld [smem:[#allocation2 + $0x35]]
        %v1674 = vstv %s1665
        %v1675 = vsub.f32 %v1674, %v231
        %v1676 = vstv %s1666
        %v1677 = vsub.f32 %v1676, %v233
        %v1678 = vmul.f32 %v1675, %v1675
        %v1679 = vmul.f32 %v1677, %v1677
        %v1680 = vadd.f32 %v1678, %v1679
        %s1681 = smul.f32 %s1667, %s1667
        %v1682 = vstv %s1681
        %v1683 = vadd.f32 %v1680, %v1682
        %v1684 = vadd.f32 %v1683, 1e-12
        %v1685 = vrsqrt.pop %v1684
        %v1686 = vmul.f32 %v1685, %v1684
        %v1687 = vmul.f32 %v1686, %v1685
        %v1688 = vmul.f32 0.5, %v1687
        %v1689 = vsub.f32 1.5, %v1688
        %v1690 = vmul.f32 %v1685, %v1689
        %vm1691 = vweird.f32 %v1684
        %vm1692 = vweird.f32 %v1685
        %vm1693 = vmor %vm1691, %vm1692
        %v1694 = vsel %vm1693, %v1685, %v1690
        %v1695 = vmul.f32 %v1675, %v1694
        %v1696 = vmul.f32 %v1677, %v1694
        %v1697 = vstv %s1667
        %v1698 = vmul.f32 %v1697, %v1694
        %v1699 = vmul.f32 %v1694, %v1694
        %v1700 = vstv %s1668
        %v1701 = vsub.f32 %v1700, %v231
        %v1702 = vstv %s1669
        %v1703 = vsub.f32 %v1702, %v233
        %v1704 = vmul.f32 %v1701, %v1701
        %v1705 = vmul.f32 %v1703, %v1703
        %v1706 = vadd.f32 %v1704, %v1705
        %s1707 = smul.f32 %s1670, %s1670
        %v1708 = vstv %s1707
        %v1709 = vadd.f32 %v1706, %v1708
        %v1710 = vadd.f32 %v1709, 1e-12
        %v1711 = vrsqrt.pop %v1710
        %v1712 = vmul.f32 %v1711, %v1710
        %v1713 = vmul.f32 %v1712, %v1711
        %v1714 = vmul.f32 0.5, %v1713
        %v1715 = vsub.f32 1.5, %v1714
        %v1716 = vmul.f32 %v1711, %v1715
        %vm1717 = vweird.f32 %v1710
        %vm1718 = vweird.f32 %v1711
        %vm1719 = vmor %vm1717, %vm1718
        %v1720 = vsel %vm1719, %v1711, %v1716
        %v1721 = vmul.f32 %v1701, %v1720
        %v1722 = vmul.f32 %v1703, %v1720
        %v1723 = vstv %s1670
        %v1724 = vmul.f32 %v1723, %v1720
        %v1725 = vadd.f32 %v1695, %v1721
        %v1726 = vadd.f32 %v1696, %v1722
        %v1727 = vadd.f32 %v1698, %v1724
        %v1728 = vmul.f32 %v1725, %v1725
        %v1729 = vmul.f32 %v1726, %v1726
        %v1730 = vadd.f32 %v1728, %v1729
        %v1731 = vmul.f32 %v1727, %v1727
        %v1732 = vadd.f32 %v1730, %v1731
        %v1733 = vadd.f32 %v1732, 1e-12
        %v1734 = vrsqrt.pop %v1733
        %v1735 = vmul.f32 %v1734, %v1733
        %v1736 = vmul.f32 %v1735, %v1734
        %v1737 = vmul.f32 0.5, %v1736
        %v1738 = vsub.f32 1.5, %v1737
        %v1739 = vmul.f32 %v1734, %v1738
        %vm1740 = vweird.f32 %v1733
        %vm1741 = vweird.f32 %v1734
        %vm1742 = vmor %vm1740, %vm1741
        %v1743 = vsel %vm1742, %v1734, %v1739
        %v1744 = vmul.f32 %v1725, %v1743
        %v1745 = vmul.f32 %v1726, %v1743
        %v1746 = vmul.f32 %v1727, %v1743
        %v1747 = vmul.f32 %v1721, %v1744
        %v1748 = vmul.f32 %v1722, %v1745
        %v1749 = vadd.f32 %v1747, %v1748
        %v1750 = vmul.f32 %v1724, %v1746
        %v1751 = vadd.f32 %v1749, %v1750
        %v1752 = vmax.f32 %v1751, 0.0001
        %v1753 = vmul.f32 %v1752, -5.55473
        %v1754 = vsub.f32 %v1753, 6.98316
        %v1755 = vmul.f32 %v1754, %v1752
        %v1756 = vpow.pop %v1755
        %v1757 = vmul.f32 %v255, %v1695
        %v1758 = vmul.f32 %v256, %v1696
        %v1759 = vadd.f32 %v1757, %v1758
        %v1760 = vmul.f32 %v257, %v1698
        %v1761 = vadd.f32 %v1759, %v1760
        %v1762 = vmax.f32 %v1761, 0.0
        %v1763 = vmul.f32 %v255, %v1721
        %v1764 = vmul.f32 %v256, %v1722
        %v1765 = vadd.f32 %v1763, %v1764
        %v1766 = vmul.f32 %v257, %v1724
        %v1767 = vadd.f32 %v1765, %v1766
        %v1768 = vmax.f32 %v1767, 0.0001
        %v1769 = vmul.f32 %v255, %v1744
        %v1770 = vmul.f32 %v256, %v1745
        %v1771 = vadd.f32 %v1769, %v1770
        %v1772 = vmul.f32 %v257, %v1746
        %v1773 = vadd.f32 %v1771, %v1772
        %v1774 = vmax.f32 %v1773, 0.0
        %v1775 = vmul.f32 %v1774, %v1774
        %v1776 = vmul.f32 %v1775, %v464
        %v1777 = vadd.f32 %v1776, 1.0
        %v1778 = vmul.f32 %v1777, %v1777
        %v1779 = vmul.f32 %v1778, 12.566371
        %v1780 = vmul.f32 %v1762, %v271
        %v1781 = vadd.f32 %v1780, %v270
        %v1782 = vadd.f32 %v1781, 1e-06
        %v1783 = vmul.f32 %v1779, %v1782
        %v1784 = vmul.f32 %v1768, %v271
        %v1785 = vadd.f32 %v1784, %v270
        %v1786 = vadd.f32 %v1785, 1e-06
        %v1787 = vmul.f32 %v1783, %v1786
        %v1788 = vrcp.pop %v1787
        %v1789 = vmul.f32 %v269, %v1788
        %v1790 = vmul.f32 %v1762, %v1699
        %v1791 = vmul.f32 %v278, %v1756
        %v1792 = vadd.f32 %v273, %v1791
        %v1793 = vmul.f32 %v1789, %v1792
        %v1794 = vadd.f32 %v284, %v1793
        %v1795 = vmul.f32 %v1794, %v1790
        %v1796 = vstv %s1671
        %v1797 = vmul.f32 %v1795, %v1796
        %v1798 = vmul.f32 %v279, %v1756
        %v1799 = vadd.f32 %v275, %v1798
        %v1800 = vmul.f32 %v1789, %v1799
        %v1801 = vadd.f32 %v288, %v1800
        %v1802 = vmul.f32 %v1801, %v1790
        %v1803 = vstv %s1672
        %v1804 = vmul.f32 %v1802, %v1803
        %v1805 = vmul.f32 %v280, %v1756
        %v1806 = vadd.f32 %v277, %v1805
        %v1807 = vmul.f32 %v1789, %v1806
        %v1808 = vadd.f32 %v292, %v1807
        %v1809 = vmul.f32 %v1808, %v1790
        %v1810 = vstv %s1673
        %v1811 = vmul.f32 %v1809, %v1810
        %v1812 = vmul.f32 %v315, %v1695
        %v1813 = vmul.f32 %v316, %v1696
        %v1814 = vadd.f32 %v1812, %v1813
        %v1815 = vmul.f32 %v317, %v1698
        %v1816 = vadd.f32 %v1814, %v1815
        %v1817 = vmax.f32 %v1816, 0.0
        %v1818 = vmul.f32 %v315, %v1721
        %v1819 = vmul.f32 %v316, %v1722
        %v1820 = vadd.f32 %v1818, %v1819
        %v1821 = vmul.f32 %v317, %v1724
        %v1822 = vadd.f32 %v1820, %v1821
        %v1823 = vmax.f32 %v1822, 0.0001
        %v1824 = vmul.f32 %v315, %v1744
        %v1825 = vmul.f32 %v316, %v1745
        %v1826 = vadd.f32 %v1824, %v1825
        %v1827 = vmul.f32 %v317, %v1746
        %v1828 = vadd.f32 %v1826, %v1827
        %v1829 = vmax.f32 %v1828, 0.0
        %v1830 = vmul.f32 %v1829, %v1829
        %v1831 = vmul.f32 %v1830, %v520
        %v1832 = vadd.f32 %v1831, 1.0
        %v1833 = vmul.f32 %v1832, %v1832
        %v1834 = vmul.f32 %v1833, 12.566371
        %v1835 = vmul.f32 %v1817, %v331
        %v1836 = vadd.f32 %v1835, %v330
        %v1837 = vadd.f32 %v1836, 1e-06
        %v1838 = vmul.f32 %v1834, %v1837
        %v1839 = vmul.f32 %v1823, %v331
        %v1840 = vadd.f32 %v1839, %v330
        %v1841 = vadd.f32 %v1840, 1e-06
        %v1842 = vmul.f32 %v1838, %v1841
        %v1843 = vrcp.pop %v1842
        %v1844 = vmul.f32 %v329, %v1843
        %v1845 = vmul.f32 %v1817, %v1699
        %v1846 = vmul.f32 %v338, %v1756
        %v1847 = vadd.f32 %v333, %v1846
        %v1848 = vmul.f32 %v1844, %v1847
        %v1849 = vadd.f32 %v344, %v1848
        %v1850 = vmul.f32 %v1849, %v1845
        %v1851 = vmul.f32 %v1850, %v1796
        %v1852 = vmul.f32 %v339, %v1756
        %v1853 = vadd.f32 %v335, %v1852
        %v1854 = vmul.f32 %v1844, %v1853
        %v1855 = vadd.f32 %v348, %v1854
        %v1856 = vmul.f32 %v1855, %v1845
        %v1857 = vmul.f32 %v1856, %v1803
        %v1858 = vmul.f32 %v340, %v1756
        %v1859 = vadd.f32 %v337, %v1858
        %v1860 = vmul.f32 %v1844, %v1859
        %v1861 = vadd.f32 %v352, %v1860
        %v1862 = vmul.f32 %v1861, %v1845
        %v1863 = vmul.f32 %v1862, %v1810
        %v1864 = vadd.f32 %v1797, 1e-05
        %v1865 = vadd.f32 %v1851, 1e-05
        %v1866 = vrcp.pop %v1865
        %v1867 = vmul.f32 %v1865, %v1866
        %v1868 = vsub.f32 1.0, %v1867
        %v1869 = vmul.f32 %v1866, %v1868
        %v1870 = vadd.f32 %v1866, %v1869
        %vm1871 = vweird.f32 %v1865
        %vm1872 = vweird.f32 %v1866
        %vm1873 = vmor %vm1871, %vm1872
        %v1874 = vsel %vm1873, %v1866, %v1870
        %v1875 = vand.u32 2147483647, %v1865
        %vm1876 = vcmp.eq.f32.partialorder %v1875, 8.507059e+37
        %v1877 = vand.u32 %v1865, 2147483648
        %v1878 = vor.u32 1.1754944e-38, %v1877
        %v1879 = vsel %vm1876, %v1878, %v1874
        %v1880 = vmul.f32 %v1864, %v1879
        %v1881 = vlog2.pop %v1880
        %v1882 = vmul.f32 %v1881, 0.6931472
        %v1883 = vand.u32 2147483647, %v1882
        %v1884 = vadd.f32 %v1664, %v1883
        %v1885 = vadd.f32 %v1804, 1e-05
        %v1886 = vadd.f32 %v1857, 1e-05
        %v1887 = vrcp.pop %v1886
        %v1888 = vmul.f32 %v1886, %v1887
        %v1889 = vsub.f32 1.0, %v1888
        %v1890 = vmul.f32 %v1887, %v1889
        %v1891 = vadd.f32 %v1887, %v1890
        %vm1892 = vweird.f32 %v1886
        %vm1893 = vweird.f32 %v1887
        %vm1894 = vmor %vm1892, %vm1893
        %v1895 = vsel %vm1894, %v1887, %v1891
        %v1896 = vand.u32 2147483647, %v1886
        %vm1897 = vcmp.eq.f32.partialorder %v1896, 8.507059e+37
        %v1898 = vand.u32 %v1886, 2147483648
        %v1899 = vor.u32 1.1754944e-38, %v1898
        %v1900 = vsel %vm1897, %v1899, %v1895
        %v1901 = vmul.f32 %v1885, %v1900
        %v1902 = vlog2.pop %v1901
        %v1903 = vmul.f32 %v1902, 0.6931472
        %v1904 = vand.u32 2147483647, %v1903
        %v1905 = vadd.f32 %v1884, %v1904
        %v1906 = vadd.f32 %v1811, 1e-05
        %v1907 = vadd.f32 %v1863, 1e-05
        %v1908 = vrcp.pop %v1907
        %v1909 = vmul.f32 %v1907, %v1908
        %v1910 = vsub.f32 1.0, %v1909
        %v1911 = vmul.f32 %v1908, %v1910
        %v1912 = vadd.f32 %v1908, %v1911
        %vm1913 = vweird.f32 %v1907
        %vm1914 = vweird.f32 %v1908
        %vm1915 = vmor %vm1913, %vm1914
        %v1916 = vsel %vm1915, %v1908, %v1912
        %v1917 = vand.u32 2147483647, %v1907
        %vm1918 = vcmp.eq.f32.partialorder %v1917, 8.507059e+37
        %v1919 = vand.u32 %v1907, 2147483648
        %v1920 = vor.u32 1.1754944e-38, %v1919
        %v1921 = vsel %vm1918, %v1920, %v1916
        %v1922 = vmul.f32 %v1906, %v1921
        %v1923 = vlog2.pop %v1922
        %v1924 = vmul.f32 %v1923, 0.6931472
        %v1925 = vand.u32 2147483647, %v1924
        %v1926 = vadd.f32 %v1905, %v1925
        %s1927 = sld [smem:[#allocation2 + $0x36]]
        %s1928 = sld [smem:[#allocation2 + $0x37]]
        %s1929 = sld [smem:[#allocation2 + $0x38]]
        %s1930 = sld [smem:[#allocation2 + $0x39]]
        %s1931 = sld [smem:[#allocation2 + $0x3a]]
        %s1932 = sld [smem:[#allocation2 + $0x3b]]
        %s1933 = sld [smem:[#allocation2 + $0x3c]]
        %s1934 = sld [smem:[#allocation2 + $0x3d]]
        %s1935 = sld [smem:[#allocation2 + $0x3e]]
        %v1936 = vstv %s1927
        %v1937 = vsub.f32 %v1936, %v231
        %v1938 = vstv %s1928
        %v1939 = vsub.f32 %v1938, %v233
        %v1940 = vmul.f32 %v1937, %v1937
        %v1941 = vmul.f32 %v1939, %v1939
        %v1942 = vadd.f32 %v1940, %v1941
        %s1943 = smul.f32 %s1929, %s1929
        %v1944 = vstv %s1943
        %v1945 = vadd.f32 %v1942, %v1944
        %v1946 = vadd.f32 %v1945, 1e-12
        %v1947 = vrsqrt.pop %v1946
        %v1948 = vmul.f32 %v1947, %v1946
        %v1949 = vmul.f32 %v1948, %v1947
        %v1950 = vmul.f32 0.5, %v1949
        %v1951 = vsub.f32 1.5, %v1950
        %v1952 = vmul.f32 %v1947, %v1951
        %vm1953 = vweird.f32 %v1946
        %vm1954 = vweird.f32 %v1947
        %vm1955 = vmor %vm1953, %vm1954
        %v1956 = vsel %vm1955, %v1947, %v1952
        %v1957 = vmul.f32 %v1937, %v1956
        %v1958 = vmul.f32 %v1939, %v1956
        %v1959 = vstv %s1929
        %v1960 = vmul.f32 %v1959, %v1956
        %v1961 = vmul.f32 %v1956, %v1956
        %v1962 = vstv %s1930
        %v1963 = vsub.f32 %v1962, %v231
        %v1964 = vstv %s1931
        %v1965 = vsub.f32 %v1964, %v233
        %v1966 = vmul.f32 %v1963, %v1963
        %v1967 = vmul.f32 %v1965, %v1965
        %v1968 = vadd.f32 %v1966, %v1967
        %s1969 = smul.f32 %s1932, %s1932
        %v1970 = vstv %s1969
        %v1971 = vadd.f32 %v1968, %v1970
        %v1972 = vadd.f32 %v1971, 1e-12
        %v1973 = vrsqrt.pop %v1972
        %v1974 = vmul.f32 %v1973, %v1972
        %v1975 = vmul.f32 %v1974, %v1973
        %v1976 = vmul.f32 0.5, %v1975
        %v1977 = vsub.f32 1.5, %v1976
        %v1978 = vmul.f32 %v1973, %v1977
        %vm1979 = vweird.f32 %v1972
        %vm1980 = vweird.f32 %v1973
        %vm1981 = vmor %vm1979, %vm1980
        %v1982 = vsel %vm1981, %v1973, %v1978
        %v1983 = vmul.f32 %v1963, %v1982
        %v1984 = vmul.f32 %v1965, %v1982
        %v1985 = vstv %s1932
        %v1986 = vmul.f32 %v1985, %v1982
        %v1987 = vadd.f32 %v1957, %v1983
        %v1988 = vadd.f32 %v1958, %v1984
        %v1989 = vadd.f32 %v1960, %v1986
        %v1990 = vmul.f32 %v1987, %v1987
        %v1991 = vmul.f32 %v1988, %v1988
        %v1992 = vadd.f32 %v1990, %v1991
        %v1993 = vmul.f32 %v1989, %v1989
        %v1994 = vadd.f32 %v1992, %v1993
        %v1995 = vadd.f32 %v1994, 1e-12
        %v1996 = vrsqrt.pop %v1995
        %v1997 = vmul.f32 %v1996, %v1995
        %v1998 = vmul.f32 %v1997, %v1996
        %v1999 = vmul.f32 0.5, %v1998
        %v2000 = vsub.f32 1.5, %v1999
        %v2001 = vmul.f32 %v1996, %v2000
        %vm2002 = vweird.f32 %v1995
        %vm2003 = vweird.f32 %v1996
        %vm2004 = vmor %vm2002, %vm2003
        %v2005 = vsel %vm2004, %v1996, %v2001
        %v2006 = vmul.f32 %v1987, %v2005
        %v2007 = vmul.f32 %v1988, %v2005
        %v2008 = vmul.f32 %v1989, %v2005
        %v2009 = vmul.f32 %v1983, %v2006
        %v2010 = vmul.f32 %v1984, %v2007
        %v2011 = vadd.f32 %v2009, %v2010
        %v2012 = vmul.f32 %v1986, %v2008
        %v2013 = vadd.f32 %v2011, %v2012
        %v2014 = vmax.f32 %v2013, 0.0001
        %v2015 = vmul.f32 %v2014, -5.55473
        %v2016 = vsub.f32 %v2015, 6.98316
        %v2017 = vmul.f32 %v2016, %v2014
        %v2018 = vpow.pop %v2017
        %v2019 = vmul.f32 %v255, %v1957
        %v2020 = vmul.f32 %v256, %v1958
        %v2021 = vadd.f32 %v2019, %v2020
        %v2022 = vmul.f32 %v257, %v1960
        %v2023 = vadd.f32 %v2021, %v2022
        %v2024 = vmax.f32 %v2023, 0.0
        %v2025 = vmul.f32 %v255, %v1983
        %v2026 = vmul.f32 %v256, %v1984
        %v2027 = vadd.f32 %v2025, %v2026
        %v2028 = vmul.f32 %v257, %v1986
        %v2029 = vadd.f32 %v2027, %v2028
        %v2030 = vmax.f32 %v2029, 0.0001
        %v2031 = vmul.f32 %v255, %v2006
        %v2032 = vmul.f32 %v256, %v2007
        %v2033 = vadd.f32 %v2031, %v2032
        %v2034 = vmul.f32 %v257, %v2008
        %v2035 = vadd.f32 %v2033, %v2034
        %v2036 = vmax.f32 %v2035, 0.0
        %v2037 = vmul.f32 %v2036, %v2036
        %v2038 = vmul.f32 %v2037, %v464
        %v2039 = vadd.f32 %v2038, 1.0
        %v2040 = vmul.f32 %v2039, %v2039
        %v2041 = vmul.f32 %v2040, 12.566371
        %v2042 = vmul.f32 %v2024, %v271
        %v2043 = vadd.f32 %v2042, %v270
        %v2044 = vadd.f32 %v2043, 1e-06
        %v2045 = vmul.f32 %v2041, %v2044
        %v2046 = vmul.f32 %v2030, %v271
        %v2047 = vadd.f32 %v2046, %v270
        %v2048 = vadd.f32 %v2047, 1e-06
        %v2049 = vmul.f32 %v2045, %v2048
        %v2050 = vrcp.pop %v2049
        %v2051 = vmul.f32 %v269, %v2050
        %v2052 = vmul.f32 %v2024, %v1961
        %v2053 = vmul.f32 %v278, %v2018
        %v2054 = vadd.f32 %v273, %v2053
        %v2055 = vmul.f32 %v2051, %v2054
        %v2056 = vadd.f32 %v284, %v2055
        %v2057 = vmul.f32 %v2056, %v2052
        %v2058 = vstv %s1933
        %v2059 = vmul.f32 %v2057, %v2058
        %v2060 = vmul.f32 %v279, %v2018
        %v2061 = vadd.f32 %v275, %v2060
        %v2062 = vmul.f32 %v2051, %v2061
        %v2063 = vadd.f32 %v288, %v2062
        %v2064 = vmul.f32 %v2063, %v2052
        %v2065 = vstv %s1934
        %v2066 = vmul.f32 %v2064, %v2065
        %v2067 = vmul.f32 %v280, %v2018
        %v2068 = vadd.f32 %v277, %v2067
        %v2069 = vmul.f32 %v2051, %v2068
        %v2070 = vadd.f32 %v292, %v2069
        %v2071 = vmul.f32 %v2070, %v2052
        %v2072 = vstv %s1935
        %v2073 = vmul.f32 %v2071, %v2072
        %v2074 = vmul.f32 %v315, %v1957
        %v2075 = vmul.f32 %v316, %v1958
        %v2076 = vadd.f32 %v2074, %v2075
        %v2077 = vmul.f32 %v317, %v1960
        %v2078 = vadd.f32 %v2076, %v2077
        %v2079 = vmax.f32 %v2078, 0.0
        %v2080 = vmul.f32 %v315, %v1983
        %v2081 = vmul.f32 %v316, %v1984
        %v2082 = vadd.f32 %v2080, %v2081
        %v2083 = vmul.f32 %v317, %v1986
        %v2084 = vadd.f32 %v2082, %v2083
        %v2085 = vmax.f32 %v2084, 0.0001
        %v2086 = vmul.f32 %v315, %v2006
        %v2087 = vmul.f32 %v316, %v2007
        %v2088 = vadd.f32 %v2086, %v2087
        %v2089 = vmul.f32 %v317, %v2008
        %v2090 = vadd.f32 %v2088, %v2089
        %v2091 = vmax.f32 %v2090, 0.0
        %v2092 = vmul.f32 %v2091, %v2091
        %v2093 = vmul.f32 %v2092, %v520
        %v2094 = vadd.f32 %v2093, 1.0
        %v2095 = vmul.f32 %v2094, %v2094
        %v2096 = vmul.f32 %v2095, 12.566371
        %v2097 = vmul.f32 %v2079, %v331
        %v2098 = vadd.f32 %v2097, %v330
        %v2099 = vadd.f32 %v2098, 1e-06
        %v2100 = vmul.f32 %v2096, %v2099
        %v2101 = vmul.f32 %v2085, %v331
        %v2102 = vadd.f32 %v2101, %v330
        %v2103 = vadd.f32 %v2102, 1e-06
        %v2104 = vmul.f32 %v2100, %v2103
        %v2105 = vrcp.pop %v2104
        %v2106 = vmul.f32 %v329, %v2105
        %v2107 = vmul.f32 %v2079, %v1961
        %v2108 = vmul.f32 %v338, %v2018
        %v2109 = vadd.f32 %v333, %v2108
        %v2110 = vmul.f32 %v2106, %v2109
        %v2111 = vadd.f32 %v344, %v2110
        %v2112 = vmul.f32 %v2111, %v2107
        %v2113 = vmul.f32 %v2112, %v2058
        %v2114 = vmul.f32 %v339, %v2018
        %v2115 = vadd.f32 %v335, %v2114
        %v2116 = vmul.f32 %v2106, %v2115
        %v2117 = vadd.f32 %v348, %v2116
        %v2118 = vmul.f32 %v2117, %v2107
        %v2119 = vmul.f32 %v2118, %v2065
        %v2120 = vmul.f32 %v340, %v2018
        %v2121 = vadd.f32 %v337, %v2120
        %v2122 = vmul.f32 %v2106, %v2121
        %v2123 = vadd.f32 %v352, %v2122
        %v2124 = vmul.f32 %v2123, %v2107
        %v2125 = vmul.f32 %v2124, %v2072
        %v2126 = vadd.f32 %v2059, 1e-05
        %v2127 = vadd.f32 %v2113, 1e-05
        %v2128 = vrcp.pop %v2127
        %v2129 = vmul.f32 %v2127, %v2128
        %v2130 = vsub.f32 1.0, %v2129
        %v2131 = vmul.f32 %v2128, %v2130
        %v2132 = vadd.f32 %v2128, %v2131
        %vm2133 = vweird.f32 %v2127
        %vm2134 = vweird.f32 %v2128
        %vm2135 = vmor %vm2133, %vm2134
        %v2136 = vsel %vm2135, %v2128, %v2132
        %v2137 = vand.u32 2147483647, %v2127
        %vm2138 = vcmp.eq.f32.partialorder %v2137, 8.507059e+37
        %v2139 = vand.u32 %v2127, 2147483648
        %v2140 = vor.u32 1.1754944e-38, %v2139
        %v2141 = vsel %vm2138, %v2140, %v2136
        %v2142 = vmul.f32 %v2126, %v2141
        %v2143 = vlog2.pop %v2142
        %v2144 = vmul.f32 %v2143, 0.6931472
        %v2145 = vand.u32 2147483647, %v2144
        %v2146 = vadd.f32 %v1926, %v2145
        %v2147 = vadd.f32 %v2066, 1e-05
        %v2148 = vadd.f32 %v2119, 1e-05
        %v2149 = vrcp.pop %v2148
        %v2150 = vmul.f32 %v2148, %v2149
        %v2151 = vsub.f32 1.0, %v2150
        %v2152 = vmul.f32 %v2149, %v2151
        %v2153 = vadd.f32 %v2149, %v2152
        %vm2154 = vweird.f32 %v2148
        %vm2155 = vweird.f32 %v2149
        %vm2156 = vmor %vm2154, %vm2155
        %v2157 = vsel %vm2156, %v2149, %v2153
        %v2158 = vand.u32 2147483647, %v2148
        %vm2159 = vcmp.eq.f32.partialorder %v2158, 8.507059e+37
        %v2160 = vand.u32 %v2148, 2147483648
        %v2161 = vor.u32 1.1754944e-38, %v2160
        %v2162 = vsel %vm2159, %v2161, %v2157
        %v2163 = vmul.f32 %v2147, %v2162
        %v2164 = vlog2.pop %v2163
        %v2165 = vmul.f32 %v2164, 0.6931472
        %v2166 = vand.u32 2147483647, %v2165
        %v2167 = vadd.f32 %v2146, %v2166
        %v2168 = vadd.f32 %v2073, 1e-05
        %v2169 = vadd.f32 %v2125, 1e-05
        %v2170 = vrcp.pop %v2169
        %v2171 = vmul.f32 %v2169, %v2170
        %v2172 = vsub.f32 1.0, %v2171
        %v2173 = vmul.f32 %v2170, %v2172
        %v2174 = vadd.f32 %v2170, %v2173
        %vm2175 = vweird.f32 %v2169
        %vm2176 = vweird.f32 %v2170
        %vm2177 = vmor %vm2175, %vm2176
        %v2178 = vsel %vm2177, %v2170, %v2174
        %v2179 = vand.u32 2147483647, %v2169
        %vm2180 = vcmp.eq.f32.partialorder %v2179, 8.507059e+37
        %v2181 = vand.u32 %v2169, 2147483648
        %v2182 = vor.u32 1.1754944e-38, %v2181
        %v2183 = vsel %vm2180, %v2182, %v2178
        %v2184 = vmul.f32 %v2168, %v2183
        %v2185 = vlog2.pop %v2184
        %v2186 = vmul.f32 %v2185, 0.6931472
        %v2187 = vand.u32 2147483647, %v2186
        %v2188 = vadd.f32 %v2167, %v2187
        %s2189 = sld [smem:[#allocation2 + $0x3f]]
        %s2190 = sld [smem:[#allocation2 + $0x40]]
        %s2191 = sld [smem:[#allocation2 + $0x41]]
        %s2192 = sld [smem:[#allocation2 + $0x42]]
        %s2193 = sld [smem:[#allocation2 + $0x43]]
        %s2194 = sld [smem:[#allocation2 + $0x44]]
        %s2195 = sld [smem:[#allocation2 + $0x45]]
        %s2196 = sld [smem:[#allocation2 + $0x46]]
        %s2197 = sld [smem:[#allocation2 + $0x47]]
        %v2198 = vstv %s2189
        %v2199 = vsub.f32 %v2198, %v231
        %v2200 = vstv %s2190
        %v2201 = vsub.f32 %v2200, %v233
        %v2202 = vmul.f32 %v2199, %v2199
        %v2203 = vmul.f32 %v2201, %v2201
        %v2204 = vadd.f32 %v2202, %v2203
        %s2205 = smul.f32 %s2191, %s2191
        %v2206 = vstv %s2205
        %v2207 = vadd.f32 %v2204, %v2206
        %v2208 = vadd.f32 %v2207, 1e-12
        %v2209 = vrsqrt.pop %v2208
        %v2210 = vmul.f32 %v2209, %v2208
        %v2211 = vmul.f32 %v2210, %v2209
        %v2212 = vmul.f32 0.5, %v2211
        %v2213 = vsub.f32 1.5, %v2212
        %v2214 = vmul.f32 %v2209, %v2213
        %vm2215 = vweird.f32 %v2208
        %vm2216 = vweird.f32 %v2209
        %vm2217 = vmor %vm2215, %vm2216
        %v2218 = vsel %vm2217, %v2209, %v2214
        %v2219 = vmul.f32 %v2199, %v2218
        %v2220 = vmul.f32 %v2201, %v2218
        %v2221 = vstv %s2191
        %v2222 = vmul.f32 %v2221, %v2218
        %v2223 = vmul.f32 %v2218, %v2218
        %v2224 = vstv %s2192
        %v2225 = vsub.f32 %v2224, %v231
        %v2226 = vstv %s2193
        %v2227 = vsub.f32 %v2226, %v233
        %v2228 = vmul.f32 %v2225, %v2225
        %v2229 = vmul.f32 %v2227, %v2227
        %v2230 = vadd.f32 %v2228, %v2229
        %s2231 = smul.f32 %s2194, %s2194
        %v2232 = vstv %s2231
        %v2233 = vadd.f32 %v2230, %v2232
        %v2234 = vadd.f32 %v2233, 1e-12
        %v2235 = vrsqrt.pop %v2234
        %v2236 = vmul.f32 %v2235, %v2234
        %v2237 = vmul.f32 %v2236, %v2235
        %v2238 = vmul.f32 0.5, %v2237
        %v2239 = vsub.f32 1.5, %v2238
        %v2240 = vmul.f32 %v2235, %v2239
        %vm2241 = vweird.f32 %v2234
        %vm2242 = vweird.f32 %v2235
        %vm2243 = vmor %vm2241, %vm2242
        %v2244 = vsel %vm2243, %v2235, %v2240
        %v2245 = vmul.f32 %v2225, %v2244
        %v2246 = vmul.f32 %v2227, %v2244
        %v2247 = vstv %s2194
        %v2248 = vmul.f32 %v2247, %v2244
        %v2249 = vadd.f32 %v2219, %v2245
        %v2250 = vadd.f32 %v2220, %v2246
        %v2251 = vadd.f32 %v2222, %v2248
        %v2252 = vmul.f32 %v2249, %v2249
        %v2253 = vmul.f32 %v2250, %v2250
        %v2254 = vadd.f32 %v2252, %v2253
        %v2255 = vmul.f32 %v2251, %v2251
        %v2256 = vadd.f32 %v2254, %v2255
        %v2257 = vadd.f32 %v2256, 1e-12
        %v2258 = vrsqrt.pop %v2257
        %v2259 = vmul.f32 %v2258, %v2257
        %v2260 = vmul.f32 %v2259, %v2258
        %v2261 = vmul.f32 0.5, %v2260
        %v2262 = vsub.f32 1.5, %v2261
        %v2263 = vmul.f32 %v2258, %v2262
        %vm2264 = vweird.f32 %v2257
        %vm2265 = vweird.f32 %v2258
        %vm2266 = vmor %vm2264, %vm2265
        %v2267 = vsel %vm2266, %v2258, %v2263
        %v2268 = vmul.f32 %v2249, %v2267
        %v2269 = vmul.f32 %v2250, %v2267
        %v2270 = vmul.f32 %v2251, %v2267
        %v2271 = vmul.f32 %v2245, %v2268
        %v2272 = vmul.f32 %v2246, %v2269
        %v2273 = vadd.f32 %v2271, %v2272
        %v2274 = vmul.f32 %v2248, %v2270
        %v2275 = vadd.f32 %v2273, %v2274
        %v2276 = vmax.f32 %v2275, 0.0001
        %v2277 = vmul.f32 %v2276, -5.55473
        %v2278 = vsub.f32 %v2277, 6.98316
        %v2279 = vmul.f32 %v2278, %v2276
        %v2280 = vpow.pop %v2279
        %v2281 = vmul.f32 %v255, %v2219
        %v2282 = vmul.f32 %v256, %v2220
        %v2283 = vadd.f32 %v2281, %v2282
        %v2284 = vmul.f32 %v257, %v2222
        %v2285 = vadd.f32 %v2283, %v2284
        %v2286 = vmax.f32 %v2285, 0.0
        %v2287 = vmul.f32 %v255, %v2245
        %v2288 = vmul.f32 %v256, %v2246
        %v2289 = vadd.f32 %v2287, %v2288
        %v2290 = vmul.f32 %v257, %v2248
        %v2291 = vadd.f32 %v2289, %v2290
        %v2292 = vmax.f32 %v2291, 0.0001
        %v2293 = vmul.f32 %v255, %v2268
        %v2294 = vmul.f32 %v256, %v2269
        %v2295 = vadd.f32 %v2293, %v2294
        %v2296 = vmul.f32 %v257, %v2270
        %v2297 = vadd.f32 %v2295, %v2296
        %v2298 = vmax.f32 %v2297, 0.0
        %v2299 = vmul.f32 %v2298, %v2298
        %v2300 = vmul.f32 %v2299, %v464
        %v2301 = vadd.f32 %v2300, 1.0
        %v2302 = vmul.f32 %v2301, %v2301
        %v2303 = vmul.f32 %v2302, 12.566371
        %v2304 = vmul.f32 %v2286, %v271
        %v2305 = vadd.f32 %v2304, %v270
        %v2306 = vadd.f32 %v2305, 1e-06
        %v2307 = vmul.f32 %v2303, %v2306
        %v2308 = vmul.f32 %v2292, %v271
        %v2309 = vadd.f32 %v2308, %v270
        %v2310 = vadd.f32 %v2309, 1e-06
        %v2311 = vmul.f32 %v2307, %v2310
        %v2312 = vrcp.pop %v2311
        %v2313 = vmul.f32 %v269, %v2312
        %v2314 = vmul.f32 %v2286, %v2223
        %v2315 = vmul.f32 %v278, %v2280
        %v2316 = vadd.f32 %v273, %v2315
        %v2317 = vmul.f32 %v2313, %v2316
        %v2318 = vadd.f32 %v284, %v2317
        %v2319 = vmul.f32 %v2318, %v2314
        %v2320 = vstv %s2195
        %v2321 = vmul.f32 %v2319, %v2320
        %v2322 = vmul.f32 %v279, %v2280
        %v2323 = vadd.f32 %v275, %v2322
        %v2324 = vmul.f32 %v2313, %v2323
        %v2325 = vadd.f32 %v288, %v2324
        %v2326 = vmul.f32 %v2325, %v2314
        %v2327 = vstv %s2196
        %v2328 = vmul.f32 %v2326, %v2327
        %v2329 = vmul.f32 %v280, %v2280
        %v2330 = vadd.f32 %v277, %v2329
        %v2331 = vmul.f32 %v2313, %v2330
        %v2332 = vadd.f32 %v292, %v2331
        %v2333 = vmul.f32 %v2332, %v2314
        %v2334 = vstv %s2197
        %v2335 = vmul.f32 %v2333, %v2334
        %v2336 = vmul.f32 %v315, %v2219
        %v2337 = vmul.f32 %v316, %v2220
        %v2338 = vadd.f32 %v2336, %v2337
        %v2339 = vmul.f32 %v317, %v2222
        %v2340 = vadd.f32 %v2338, %v2339
        %v2341 = vmax.f32 %v2340, 0.0
        %v2342 = vmul.f32 %v315, %v2245
        %v2343 = vmul.f32 %v316, %v2246
        %v2344 = vadd.f32 %v2342, %v2343
        %v2345 = vmul.f32 %v317, %v2248
        %v2346 = vadd.f32 %v2344, %v2345
        %v2347 = vmax.f32 %v2346, 0.0001
        %v2348 = vmul.f32 %v315, %v2268
        %v2349 = vmul.f32 %v316, %v2269
        %v2350 = vadd.f32 %v2348, %v2349
        %v2351 = vmul.f32 %v317, %v2270
        %v2352 = vadd.f32 %v2350, %v2351
        %v2353 = vmax.f32 %v2352, 0.0
        %v2354 = vmul.f32 %v2353, %v2353
        %v2355 = vmul.f32 %v2354, %v520
        %v2356 = vadd.f32 %v2355, 1.0
        %v2357 = vmul.f32 %v2356, %v2356
        %v2358 = vmul.f32 %v2357, 12.566371
        %v2359 = vmul.f32 %v2341, %v331
        %v2360 = vadd.f32 %v2359, %v330
        %v2361 = vadd.f32 %v2360, 1e-06
        %v2362 = vmul.f32 %v2358, %v2361
        %v2363 = vmul.f32 %v2347, %v331
        %v2364 = vadd.f32 %v2363, %v330
        %v2365 = vadd.f32 %v2364, 1e-06
        %v2366 = vmul.f32 %v2362, %v2365
        %v2367 = vrcp.pop %v2366
        %v2368 = vmul.f32 %v329, %v2367
        %v2369 = vmul.f32 %v2341, %v2223
        %v2370 = vmul.f32 %v338, %v2280
        %v2371 = vadd.f32 %v333, %v2370
        %v2372 = vmul.f32 %v2368, %v2371
        %v2373 = vadd.f32 %v344, %v2372
        %v2374 = vmul.f32 %v2373, %v2369
        %v2375 = vmul.f32 %v2374, %v2320
        %v2376 = vmul.f32 %v339, %v2280
        %v2377 = vadd.f32 %v335, %v2376
        %v2378 = vmul.f32 %v2368, %v2377
        %v2379 = vadd.f32 %v348, %v2378
        %v2380 = vmul.f32 %v2379, %v2369
        %v2381 = vmul.f32 %v2380, %v2327
        %v2382 = vmul.f32 %v340, %v2280
        %v2383 = vadd.f32 %v337, %v2382
        %v2384 = vmul.f32 %v2368, %v2383
        %v2385 = vadd.f32 %v352, %v2384
        %v2386 = vmul.f32 %v2385, %v2369
        %v2387 = vmul.f32 %v2386, %v2334
        %v2388 = vadd.f32 %v2321, 1e-05
        %v2389 = vadd.f32 %v2375, 1e-05
        %v2390 = vrcp.pop %v2389
        %v2391 = vmul.f32 %v2389, %v2390
        %v2392 = vsub.f32 1.0, %v2391
        %v2393 = vmul.f32 %v2390, %v2392
        %v2394 = vadd.f32 %v2390, %v2393
        %vm2395 = vweird.f32 %v2389
        %vm2396 = vweird.f32 %v2390
        %vm2397 = vmor %vm2395, %vm2396
        %v2398 = vsel %vm2397, %v2390, %v2394
        %v2399 = vand.u32 2147483647, %v2389
        %vm2400 = vcmp.eq.f32.partialorder %v2399, 8.507059e+37
        %v2401 = vand.u32 %v2389, 2147483648
        %v2402 = vor.u32 1.1754944e-38, %v2401
        %v2403 = vsel %vm2400, %v2402, %v2398
        %v2404 = vmul.f32 %v2388, %v2403
        %v2405 = vlog2.pop %v2404
        %v2406 = vmul.f32 %v2405, 0.6931472
        %v2407 = vand.u32 2147483647, %v2406
        %v2408 = vadd.f32 %v2188, %v2407
        %v2409 = vadd.f32 %v2328, 1e-05
        %v2410 = vadd.f32 %v2381, 1e-05
        %v2411 = vrcp.pop %v2410
        %v2412 = vmul.f32 %v2410, %v2411
        %v2413 = vsub.f32 1.0, %v2412
        %v2414 = vmul.f32 %v2411, %v2413
        %v2415 = vadd.f32 %v2411, %v2414
        %vm2416 = vweird.f32 %v2410
        %vm2417 = vweird.f32 %v2411
        %vm2418 = vmor %vm2416, %vm2417
        %v2419 = vsel %vm2418, %v2411, %v2415
        %v2420 = vand.u32 2147483647, %v2410
        %vm2421 = vcmp.eq.f32.partialorder %v2420, 8.507059e+37
        %v2422 = vand.u32 %v2410, 2147483648
        %v2423 = vor.u32 1.1754944e-38, %v2422
        %v2424 = vsel %vm2421, %v2423, %v2419
        %v2425 = vmul.f32 %v2409, %v2424
        %v2426 = vlog2.pop %v2425
        %v2427 = vmul.f32 %v2426, 0.6931472
        %v2428 = vand.u32 2147483647, %v2427
        %v2429 = vadd.f32 %v2408, %v2428
        %v2430 = vadd.f32 %v2335, 1e-05
        %v2431 = vadd.f32 %v2387, 1e-05
        %v2432 = vrcp.pop %v2431
        %v2433 = vmul.f32 %v2431, %v2432
        %v2434 = vsub.f32 1.0, %v2433
        %v2435 = vmul.f32 %v2432, %v2434
        %v2436 = vadd.f32 %v2432, %v2435
        %vm2437 = vweird.f32 %v2431
        %vm2438 = vweird.f32 %v2432
        %vm2439 = vmor %vm2437, %vm2438
        %v2440 = vsel %vm2439, %v2432, %v2436
        %v2441 = vand.u32 2147483647, %v2431
        %vm2442 = vcmp.eq.f32.partialorder %v2441, 8.507059e+37
        %v2443 = vand.u32 %v2431, 2147483648
        %v2444 = vor.u32 1.1754944e-38, %v2443
        %v2445 = vsel %vm2442, %v2444, %v2440
        %v2446 = vmul.f32 %v2430, %v2445
        %v2447 = vlog2.pop %v2446
        %v2448 = vmul.f32 %v2447, 0.6931472
        %v2449 = vand.u32 2147483647, %v2448
        %v2450 = vadd.f32 %v2429, %v2449
        %s2451 = sld [smem:[#allocation2 + $0x48]]
        %s2452 = sld [smem:[#allocation2 + $0x49]]
        %s2453 = sld [smem:[#allocation2 + $0x4a]]
        %s2454 = sld [smem:[#allocation2 + $0x4b]]
        %s2455 = sld [smem:[#allocation2 + $0x4c]]
        %s2456 = sld [smem:[#allocation2 + $0x4d]]
        %s2457 = sld [smem:[#allocation2 + $0x4e]]
        %s2458 = sld [smem:[#allocation2 + $0x4f]]
        %s2459 = sld [smem:[#allocation2 + $0x50]]
        %v2460 = vstv %s2451
        %v2461 = vsub.f32 %v2460, %v231
        %v2462 = vstv %s2452
        %v2463 = vsub.f32 %v2462, %v233
        %v2464 = vmul.f32 %v2461, %v2461
        %v2465 = vmul.f32 %v2463, %v2463
        %v2466 = vadd.f32 %v2464, %v2465
        %s2467 = smul.f32 %s2453, %s2453
        %v2468 = vstv %s2467
        %v2469 = vadd.f32 %v2466, %v2468
        %v2470 = vadd.f32 %v2469, 1e-12
        %v2471 = vrsqrt.pop %v2470
        %v2472 = vmul.f32 %v2471, %v2470
        %v2473 = vmul.f32 %v2472, %v2471
        %v2474 = vmul.f32 0.5, %v2473
        %v2475 = vsub.f32 1.5, %v2474
        %v2476 = vmul.f32 %v2471, %v2475
        %vm2477 = vweird.f32 %v2470
        %vm2478 = vweird.f32 %v2471
        %vm2479 = vmor %vm2477, %vm2478
        %v2480 = vsel %vm2479, %v2471, %v2476
        %v2481 = vmul.f32 %v2461, %v2480
        %v2482 = vmul.f32 %v2463, %v2480
        %v2483 = vstv %s2453
        %v2484 = vmul.f32 %v2483, %v2480
        %v2485 = vmul.f32 %v2480, %v2480
        %v2486 = vstv %s2454
        %v2487 = vsub.f32 %v2486, %v231
        %v2488 = vstv %s2455
        %v2489 = vsub.f32 %v2488, %v233
        %v2490 = vmul.f32 %v2487, %v2487
        %v2491 = vmul.f32 %v2489, %v2489
        %v2492 = vadd.f32 %v2490, %v2491
        %s2493 = smul.f32 %s2456, %s2456
        %v2494 = vstv %s2493
        %v2495 = vadd.f32 %v2492, %v2494
        %v2496 = vadd.f32 %v2495, 1e-12
        %v2497 = vrsqrt.pop %v2496
        %v2498 = vmul.f32 %v2497, %v2496
        %v2499 = vmul.f32 %v2498, %v2497
        %v2500 = vmul.f32 0.5, %v2499
        %v2501 = vsub.f32 1.5, %v2500
        %v2502 = vmul.f32 %v2497, %v2501
        %vm2503 = vweird.f32 %v2496
        %vm2504 = vweird.f32 %v2497
        %vm2505 = vmor %vm2503, %vm2504
        %v2506 = vsel %vm2505, %v2497, %v2502
        %v2507 = vmul.f32 %v2487, %v2506
        %v2508 = vmul.f32 %v2489, %v2506
        %v2509 = vstv %s2456
        %v2510 = vmul.f32 %v2509, %v2506
        %v2511 = vadd.f32 %v2481, %v2507
        %v2512 = vadd.f32 %v2482, %v2508
        %v2513 = vadd.f32 %v2484, %v2510
        %v2514 = vmul.f32 %v2511, %v2511
        %v2515 = vmul.f32 %v2512, %v2512
        %v2516 = vadd.f32 %v2514, %v2515
        %v2517 = vmul.f32 %v2513, %v2513
        %v2518 = vadd.f32 %v2516, %v2517
        %v2519 = vadd.f32 %v2518, 1e-12
        %v2520 = vrsqrt.pop %v2519
        %v2521 = vmul.f32 %v2520, %v2519
        %v2522 = vmul.f32 %v2521, %v2520
        %v2523 = vmul.f32 0.5, %v2522
        %v2524 = vsub.f32 1.5, %v2523
        %v2525 = vmul.f32 %v2520, %v2524
        %vm2526 = vweird.f32 %v2519
        %vm2527 = vweird.f32 %v2520
        %vm2528 = vmor %vm2526, %vm2527
        %v2529 = vsel %vm2528, %v2520, %v2525
        %v2530 = vmul.f32 %v2511, %v2529
        %v2531 = vmul.f32 %v2512, %v2529
        %v2532 = vmul.f32 %v2513, %v2529
        %v2533 = vmul.f32 %v2507, %v2530
        %v2534 = vmul.f32 %v2508, %v2531
        %v2535 = vadd.f32 %v2533, %v2534
        %v2536 = vmul.f32 %v2510, %v2532
        %v2537 = vadd.f32 %v2535, %v2536
        %v2538 = vmax.f32 %v2537, 0.0001
        %v2539 = vmul.f32 %v2538, -5.55473
        %v2540 = vsub.f32 %v2539, 6.98316
        %v2541 = vmul.f32 %v2540, %v2538
        %v2542 = vpow.pop %v2541
        %v2543 = vmul.f32 %v255, %v2481
        %v2544 = vmul.f32 %v256, %v2482
        %v2545 = vadd.f32 %v2543, %v2544
        %v2546 = vmul.f32 %v257, %v2484
        %v2547 = vadd.f32 %v2545, %v2546
        %v2548 = vmax.f32 %v2547, 0.0
        %v2549 = vmul.f32 %v255, %v2507
        %v2550 = vmul.f32 %v256, %v2508
        %v2551 = vadd.f32 %v2549, %v2550
        %v2552 = vmul.f32 %v257, %v2510
        %v2553 = vadd.f32 %v2551, %v2552
        %v2554 = vmax.f32 %v2553, 0.0001
        %v2555 = vmul.f32 %v255, %v2530
        %v2556 = vmul.f32 %v256, %v2531
        %v2557 = vadd.f32 %v2555, %v2556
        %v2558 = vmul.f32 %v257, %v2532
        %v2559 = vadd.f32 %v2557, %v2558
        %v2560 = vmax.f32 %v2559, 0.0
        %v2561 = vmul.f32 %v2560, %v2560
        %v2562 = vmul.f32 %v2561, %v464
        %v2563 = vadd.f32 %v2562, 1.0
        %v2564 = vmul.f32 %v2563, %v2563
        %v2565 = vmul.f32 %v2564, 12.566371
        %v2566 = vmul.f32 %v2548, %v271
        %v2567 = vadd.f32 %v2566, %v270
        %v2568 = vadd.f32 %v2567, 1e-06
        %v2569 = vmul.f32 %v2565, %v2568
        %v2570 = vmul.f32 %v2554, %v271
        %v2571 = vadd.f32 %v2570, %v270
        %v2572 = vadd.f32 %v2571, 1e-06
        %v2573 = vmul.f32 %v2569, %v2572
        %v2574 = vrcp.pop %v2573
        %v2575 = vmul.f32 %v269, %v2574
        %v2576 = vmul.f32 %v2548, %v2485
        %v2577 = vmul.f32 %v278, %v2542
        %v2578 = vadd.f32 %v273, %v2577
        %v2579 = vmul.f32 %v2575, %v2578
        %v2580 = vadd.f32 %v284, %v2579
        %v2581 = vmul.f32 %v2580, %v2576
        %v2582 = vstv %s2457
        %v2583 = vmul.f32 %v2581, %v2582
        %v2584 = vmul.f32 %v279, %v2542
        %v2585 = vadd.f32 %v275, %v2584
        %v2586 = vmul.f32 %v2575, %v2585
        %v2587 = vadd.f32 %v288, %v2586
        %v2588 = vmul.f32 %v2587, %v2576
        %v2589 = vstv %s2458
        %v2590 = vmul.f32 %v2588, %v2589
        %v2591 = vmul.f32 %v280, %v2542
        %v2592 = vadd.f32 %v277, %v2591
        %v2593 = vmul.f32 %v2575, %v2592
        %v2594 = vadd.f32 %v292, %v2593
        %v2595 = vmul.f32 %v2594, %v2576
        %v2596 = vstv %s2459
        %v2597 = vmul.f32 %v2595, %v2596
        %v2598 = vmul.f32 %v315, %v2481
        %v2599 = vmul.f32 %v316, %v2482
        %v2600 = vadd.f32 %v2598, %v2599
        %v2601 = vmul.f32 %v317, %v2484
        %v2602 = vadd.f32 %v2600, %v2601
        %v2603 = vmax.f32 %v2602, 0.0
        %v2604 = vmul.f32 %v315, %v2507
        %v2605 = vmul.f32 %v316, %v2508
        %v2606 = vadd.f32 %v2604, %v2605
        %v2607 = vmul.f32 %v317, %v2510
        %v2608 = vadd.f32 %v2606, %v2607
        %v2609 = vmax.f32 %v2608, 0.0001
        %v2610 = vmul.f32 %v315, %v2530
        %v2611 = vmul.f32 %v316, %v2531
        %v2612 = vadd.f32 %v2610, %v2611
        %v2613 = vmul.f32 %v317, %v2532
        %v2614 = vadd.f32 %v2612, %v2613
        %v2615 = vmax.f32 %v2614, 0.0
        %v2616 = vmul.f32 %v2615, %v2615
        %v2617 = vmul.f32 %v2616, %v520
        %v2618 = vadd.f32 %v2617, 1.0
        %v2619 = vmul.f32 %v2618, %v2618
        %v2620 = vmul.f32 %v2619, 12.566371
        %v2621 = vmul.f32 %v2603, %v331
        %v2622 = vadd.f32 %v2621, %v330
        %v2623 = vadd.f32 %v2622, 1e-06
        %v2624 = vmul.f32 %v2620, %v2623
        %v2625 = vmul.f32 %v2609, %v331
        %v2626 = vadd.f32 %v2625, %v330
        %v2627 = vadd.f32 %v2626, 1e-06
        %v2628 = vmul.f32 %v2624, %v2627
        %v2629 = vrcp.pop %v2628
        %v2630 = vmul.f32 %v329, %v2629
        %v2631 = vmul.f32 %v2603, %v2485
        %v2632 = vmul.f32 %v338, %v2542
        %v2633 = vadd.f32 %v333, %v2632
        %v2634 = vmul.f32 %v2630, %v2633
        %v2635 = vadd.f32 %v344, %v2634
        %v2636 = vmul.f32 %v2635, %v2631
        %v2637 = vmul.f32 %v2636, %v2582
        %v2638 = vmul.f32 %v339, %v2542
        %v2639 = vadd.f32 %v335, %v2638
        %v2640 = vmul.f32 %v2630, %v2639
        %v2641 = vadd.f32 %v348, %v2640
        %v2642 = vmul.f32 %v2641, %v2631
        %v2643 = vmul.f32 %v2642, %v2589
        %v2644 = vmul.f32 %v340, %v2542
        %v2645 = vadd.f32 %v337, %v2644
        %v2646 = vmul.f32 %v2630, %v2645
        %v2647 = vadd.f32 %v352, %v2646
        %v2648 = vmul.f32 %v2647, %v2631
        %v2649 = vmul.f32 %v2648, %v2596
        %v2650 = vadd.f32 %v2583, 1e-05
        %v2651 = vadd.f32 %v2637, 1e-05
        %v2652 = vrcp.pop %v2651
        %v2653 = vmul.f32 %v2651, %v2652
        %v2654 = vsub.f32 1.0, %v2653
        %v2655 = vmul.f32 %v2652, %v2654
        %v2656 = vadd.f32 %v2652, %v2655
        %vm2657 = vweird.f32 %v2651
        %vm2658 = vweird.f32 %v2652
        %vm2659 = vmor %vm2657, %vm2658
        %v2660 = vsel %vm2659, %v2652, %v2656
        %v2661 = vand.u32 2147483647, %v2651
        %vm2662 = vcmp.eq.f32.partialorder %v2661, 8.507059e+37
        %v2663 = vand.u32 %v2651, 2147483648
        %v2664 = vor.u32 1.1754944e-38, %v2663
        %v2665 = vsel %vm2662, %v2664, %v2660
        %v2666 = vmul.f32 %v2650, %v2665
        %v2667 = vlog2.pop %v2666
        %v2668 = vmul.f32 %v2667, 0.6931472
        %v2669 = vand.u32 2147483647, %v2668
        %v2670 = vadd.f32 %v2450, %v2669
        %v2671 = vadd.f32 %v2590, 1e-05
        %v2672 = vadd.f32 %v2643, 1e-05
        %v2673 = vrcp.pop %v2672
        %v2674 = vmul.f32 %v2672, %v2673
        %v2675 = vsub.f32 1.0, %v2674
        %v2676 = vmul.f32 %v2673, %v2675
        %v2677 = vadd.f32 %v2673, %v2676
        %vm2678 = vweird.f32 %v2672
        %vm2679 = vweird.f32 %v2673
        %vm2680 = vmor %vm2678, %vm2679
        %v2681 = vsel %vm2680, %v2673, %v2677
        %v2682 = vand.u32 2147483647, %v2672
        %vm2683 = vcmp.eq.f32.partialorder %v2682, 8.507059e+37
        %v2684 = vand.u32 %v2672, 2147483648
        %v2685 = vor.u32 1.1754944e-38, %v2684
        %v2686 = vsel %vm2683, %v2685, %v2681
        %v2687 = vmul.f32 %v2671, %v2686
        %v2688 = vlog2.pop %v2687
        %v2689 = vmul.f32 %v2688, 0.6931472
        %v2690 = vand.u32 2147483647, %v2689
        %v2691 = vadd.f32 %v2670, %v2690
        %v2692 = vadd.f32 %v2597, 1e-05
        %v2693 = vadd.f32 %v2649, 1e-05
        %v2694 = vrcp.pop %v2693
        %v2695 = vmul.f32 %v2693, %v2694
        %v2696 = vsub.f32 1.0, %v2695
        %v2697 = vmul.f32 %v2694, %v2696
        %v2698 = vadd.f32 %v2694, %v2697
        %vm2699 = vweird.f32 %v2693
        %vm2700 = vweird.f32 %v2694
        %vm2701 = vmor %vm2699, %vm2700
        %v2702 = vsel %vm2701, %v2694, %v2698
        %v2703 = vand.u32 2147483647, %v2693
        %vm2704 = vcmp.eq.f32.partialorder %v2703, 8.507059e+37
        %v2705 = vand.u32 %v2693, 2147483648
        %v2706 = vor.u32 1.1754944e-38, %v2705
        %v2707 = vsel %vm2704, %v2706, %v2702
        %v2708 = vmul.f32 %v2692, %v2707
        %v2709 = vlog2.pop %v2708
        %v2710 = vmul.f32 %v2709, 0.6931472
        %v2711 = vand.u32 2147483647, %v2710
        %v2712 = vadd.f32 %v2691, %v2711
        %2713 = vst [vmem:[%s230] sm:$0x3] %v2712
        %p2714 = scmp.lt.s32.totalorder %s19, 1
        %s2715 = scalar_select %p2714, %s19, 1
        %p2716 = scmp.lt.s32.totalorder %s20, 0
        %s2717 = scalar_select %p2716, %s20, 0
        %s2718 = sadd.s32 %s2717, %s2715
        %s2719 = smul.addr %s2718, 2
        %s2720 = scalar_lea.vmem %s3, %s2719
        // Predicated region
        $region37: #{rendering_loss.1} parent=31 // pred_check
          %p2721 = pneg %p122
        $region38: #{rendering_loss.1} parent=31 // pred_check_branch
          %2723 = sbr.rel (%p2721) target = $region40
        $region39: #{rendering_loss.1} parent=31 // pred_region
          _
        $region40: #{rendering_loss.1} parent=31 // pred_fallthru
          _
      $region32: #{rendering_loss.1} parent=5 // pred_fallthru
        _
      %p2724 = scmp.le.s32.totalorder 2, %s10
      // Predicated region
      $region41: #{rendering_loss.1} parent=5 // pred_check
        %p2725 = pneg %p2724
      $region42: #{rendering_loss.1} parent=5 // pred_check_branch
        %2727 = sbr.rel (%p2725) target = $region44
      $region43: #{rendering_loss.1} parent=5 // pred_region
        %s2728 = ssub.s32 %s10, 2
        // Predicated region
        $region45: #{rendering_loss.1} parent=43 // pred_check
          %p2729 = pneg %p128
        $region46: #{rendering_loss.1} parent=43 // pred_check_branch
          %2731 = sbr.rel (%p2729) target = $region48
        $region47: #{rendering_loss.1} parent=43 // pred_region
          %p2732 = scmp.lt.s32.totalorder %s21, 1
          %s2733 = scalar_select %p2732, %s21, 1
          %p2734 = scmp.lt.s32.totalorder %s22, 0
          %s2735 = scalar_select %p2734, %s22, 0
          %s2736 = sadd.s32 %s2735, %s2733
          %s2737 = smul.addr %s2736, 2
          %s2738 = scalar_lea.vmem %s3, %s2737
        $region48: #{rendering_loss.1} parent=43 // pred_fallthru
          _
      $region44: #{rendering_loss.1} parent=5 // pred_fallthru
        _
    $region6: #{rendering_loss.1} parent=1 // loop_footer
      %s14 = sadd.s32 1, %s10
    $region7: #{rendering_loss.1} parent=1 // loop_footer_branch
      %9 = sbr.rel target = $region3
    $region8: #{rendering_loss.1} parent=1 // loop_exit
      _
    %2739 = vsyncpa [#allocation3], 1
    %s2740 = scalar_lea.sflag [#allocation3], 1
    %2741 = vsyncpa %s2740, 1

</llo_original>
